<compile_context>
chip_gen: v7x
topology: tpu7x:2x2x1
jax: 0.10.0
libtpu: 0.0.40
codegen_flags: <defaults>
</compile_context>

<pallas_src>
import jax
import jax.numpy as jnp
from jax.experimental import pallas as pl
from jax.experimental.pallas import tpu as pltpu  # noqa: F401  (see VMEM-pinning TODO)

NUM_OBJS = 151     # "151" from the forward() docstring
NUM_PREDS = 51     # number of predicates
EPS = 1e-3
LANES = 128        # vreg lane width
P_PAD = 64         # predicate axis padded to 64 so it divides the 128-lane vreg


def _round_up(x, m):
    return (x + m - 1) // m * m


def freq_bias_kernel(c1_ref, w_ref, c0rep_ref, o_ref):
    # c1_ref   : [B, j_pad]  bf16   obj_cands1 (object axis zero-padded)
    # w_ref    : [j_pad, F]  bf16   fused weight, column n = i*P_PAD + p
    # c0rep_ref: [B, F]      f32    obj_cands0 repeated P_PAD times along lanes
    # o_ref    : [B, P]      f32    output potentials
    B, F = c0rep_ref.shape
    P = o_ref.shape[-1]
    total_vregs = F // LANES                        # 76 lane-vregs of fused columns
    n_chunks = 4 if total_vregs % 4 == 0 else 1     # chunk the matmul to bound live vregs
    chunk_vregs = total_vregs // n_chunks
    chunk_lanes = chunk_vregs * LANES

    c1 = c1_ref[...]                                # [B, j_pad] bf16 (hoisted)

    partials = []
    for c in range(n_chunks):
        lo = c * chunk_lanes
        # Stage 1: one lane-dense MXU matmul per chunk (K = j_pad, N = chunk), f32 accum.
        t = jnp.dot(c1, w_ref[:, lo:lo + chunk_lanes],
                    preferred_element_type=jnp.float32)          # [B, chunk_lanes] f32
        # Stage 2: fold in P(obj0 = i) and reduce over i.  Column n = i*64 + p, so
        # lane r of every 128-lane slice carries p = r % 64 (and i-parity r // 64):
        # summing the chunk's vregs is exactly the (partial) reduction over i.
        acc_c = t[:, 0:LANES] * c0rep_ref[:, lo:lo + LANES]
        for q in range(1, chunk_vregs):
            s = q * LANES
            acc_c = acc_c + t[:, s:s + LANES] * c0rep_ref[:, lo + s:lo + s + LANES]
        partials.append(acc_c)

    acc = partials[0]
    for part in partials[1:]:
        acc = acc + part                            # [B, 128] f32

    # Lane r holds predicate p = r % 64 summed over i of parity r // 64; fold halves.
    o_ref[...] = acc[:, 0:P] + acc[:, P_PAD:P_PAD + P]


def prepare_pred_dist(pred_dist_3d):
    """One-time weight prep: fuse (i, p) on the lane axis, zero-pad, cast to bf16.

    Returns W2[j_pad, F] with column n = i * P_PAD + p.  Zero padding is exact —
    padded i / p / j entries contribute nothing to the contraction.
    """
    n0, n1, p = pred_dist_3d.shape
    ni = _round_up(n0, 2)               # 151 -> 152 so F = ni*64 is a multiple of 128
    jp = _round_up(n1, 8)               # 151 -> 152 (sublane-friendly contraction axis)
    w = jnp.pad(pred_dist_3d, ((0, ni - n0), (0, jp - n1), (0, P_PAD - p)))
    w2 = jnp.transpose(w, (1, 0, 2)).reshape(jp, ni * P_PAD)     # [j_pad, F]
    return w2.astype(jnp.bfloat16)


@jax.jit
def frequency_bias_forward(obj_cands0, obj_cands1, w2):
    """obj_cands0/1: [B, N] prob distributions; w2: output of prepare_pred_dist."""
    B, N = obj_cands0.shape
    jp, F = w2.shape
    ni = F // P_PAD

    # Tiny per-call plumbing (few KB / ~150 KB); the ~3 MB weight is untouched here.
    c1b = jnp.pad(obj_cands1.astype(jnp.float32),
                  ((0, 0), (0, jp - N))).astype(jnp.bfloat16)                 # [B, j_pad]
    c0rep = jnp.repeat(
        jnp.pad(obj_cands0.astype(jnp.float32), ((0, 0), (0, ni - N))),
        P_PAD, axis=1)                                                        # [B, F]

    return pl.pallas_call(
        freq_bias_kernel,
        out_shape=jax.ShapeDtypeStruct((B, NUM_PREDS), jnp.float32),
        in_specs=[
            pl.BlockSpec((B, jp), lambda: (0, 0)),     # c1 (bf16, tiny)
            pl.BlockSpec((jp, F), lambda: (0, 0)),     # fused lane-dense weight (bf16)
            pl.BlockSpec((B, F), lambda: (0, 0)),      # c0 repeated along the fused axis
        ],
        out_specs=pl.BlockSpec((B, NUM_PREDS), lambda: (0, 0)),
    )(c1b, w2, c0rep)


def make_pred_dist(key, num_objs, num_preds, eps=EPS):
    """Deterministic synthetic stand-in for get_counts(train_data, must_overlap=True)."""
    k1, k2 = jax.random.split(key)
    fg = jax.random.randint(k1, (num_objs, num_objs, num_preds), 0, 100).astype(jnp.float32)
    bg = jax.random.randint(k2, (num_objs, num_objs), 0, 50).astype(jnp.float32) + 1.0
    fg = fg.at[:, :, 0].set(bg)                                   # fg_matrix[:, :, 0] = bg_matrix
    pred_dist = jnp.log(fg / fg.sum(2, keepdims=True) + eps)      # [N, N, P]
    return pred_dist


if __name__ == "__main__":
    key = jax.random.PRNGKey(0)
    kw, k0, k1 = jax.random.split(key, 3)

    B = 4
    pred_dist_3d = make_pred_dist(kw, NUM_OBJS, NUM_PREDS)        # embedding weight as [N, N, P], f32
    w2 = prepare_pred_dist(pred_dist_3d)                          # one-time: fuse + pad + bf16 cast

    obj_cands0 = jax.nn.softmax(jax.random.normal(k0, (B, NUM_OBJS)), axis=-1)
    obj_cands1 = jax.nn.softmax(jax.random.normal(k1, (B, NUM_OBJS)), axis=-1)

    out = frequency_bias_forward(obj_cands0, obj_cands1, w2)
    out = jax.block_until_ready(out)

    # Pure-JAX reference of the PyTorch forward (f32 weight).
    joint = obj_cands0[:, :, None] * obj_cands1[:, None, :]
    ref = joint.reshape(B, -1) @ pred_dist_3d.reshape(-1, NUM_PREDS)

    assert out.shape == (B, NUM_PREDS)
    assert jnp.allclose(out, ref, rtol=2e-2, atol=2e-2), "mismatch vs reference"
    print("KERNEL_OK")
</pallas_src>

<mosaic_0001>
module attributes {stable_mosaic.version = 11 : i64} {
  func.func @freq_bias_kernel(%arg0: memref<4x152xbf16, #tpu.memory_space<vmem>>, %arg1: memref<152x9728xbf16, #tpu.memory_space<vmem>>, %arg2: memref<4x9728xf32, #tpu.memory_space<vmem>>, %arg3: memref<4x51xf32, #tpu.memory_space<vmem>>) attributes {dimension_semantics = [], scalar_prefetch = 0 : i64, scratch_operands = 0 : i64, tpu.core_type = #tpu.core_type<tc>} {
    %c0 = arith.constant 0 : index
    %c0_0 = arith.constant 0 : index
    %0 = vector.load %arg0[%c0, %c0_0] : memref<4x152xbf16, #tpu.memory_space<vmem>>, vector<4x152xbf16>
    %c0_1 = arith.constant 0 : index
    %c0_2 = arith.constant 0 : index
    %1 = vector.load %arg1[%c0_1, %c0_2] : memref<152x9728xbf16, #tpu.memory_space<vmem>>, vector<152x2432xbf16>
    %cst = arith.constant dense<0.000000e+00> : vector<4x2432xf32>
    %2 = tpu.matmul %0, %1, %cst {dimension_numbers = #tpu.dot_dimension_numbers<[1], [0], [0], [1], [0, 0, 1, 1], [], []>} : vector<4x152xbf16>, vector<152x2432xbf16>, vector<4x2432xf32> -> vector<4x2432xf32>
    %3 = vector.extract_strided_slice %2 {offsets = [0, 0], sizes = [4, 128], strides = [1, 1]} : vector<4x2432xf32> to vector<4x128xf32>
    %c0_3 = arith.constant 0 : index
    %c0_4 = arith.constant 0 : index
    %4 = vector.load %arg2[%c0_3, %c0_4] : memref<4x9728xf32, #tpu.memory_space<vmem>>, vector<4x128xf32>
    %5 = arith.mulf %3, %4 : vector<4x128xf32>
    %6 = vector.extract_strided_slice %2 {offsets = [0, 128], sizes = [4, 128], strides = [1, 1]} : vector<4x2432xf32> to vector<4x128xf32>
    %c0_5 = arith.constant 0 : index
    %c128 = arith.constant 128 : index
    %7 = vector.load %arg2[%c0_5, %c128] : memref<4x9728xf32, #tpu.memory_space<vmem>>, vector<4x128xf32>
    %8 = arith.mulf %6, %7 : vector<4x128xf32>
    %9 = arith.addf %5, %8 : vector<4x128xf32>
    %10 = vector.extract_strided_slice %2 {offsets = [0, 256], sizes = [4, 128], strides = [1, 1]} : vector<4x2432xf32> to vector<4x128xf32>
    %c0_6 = arith.constant 0 : index
    %c256 = arith.constant 256 : index
    %11 = vector.load %arg2[%c0_6, %c256] : memref<4x9728xf32, #tpu.memory_space<vmem>>, vector<4x128xf32>
    %12 = arith.mulf %10, %11 : vector<4x128xf32>
    %13 = arith.addf %9, %12 : vector<4x128xf32>
    %14 = vector.extract_strided_slice %2 {offsets = [0, 384], sizes = [4, 128], strides = [1, 1]} : vector<4x2432xf32> to vector<4x128xf32>
    %c0_7 = arith.constant 0 : index
    %c384 = arith.constant 384 : index
    %15 = vector.load %arg2[%c0_7, %c384] : memref<4x9728xf32, #tpu.memory_space<vmem>>, vector<4x128xf32>
    %16 = arith.mulf %14, %15 : vector<4x128xf32>
    %17 = arith.addf %13, %16 : vector<4x128xf32>
    %18 = vector.extract_strided_slice %2 {offsets = [0, 512], sizes = [4, 128], strides = [1, 1]} : vector<4x2432xf32> to vector<4x128xf32>
    %c0_8 = arith.constant 0 : index
    %c512 = arith.constant 512 : index
    %19 = vector.load %arg2[%c0_8, %c512] : memref<4x9728xf32, #tpu.memory_space<vmem>>, vector<4x128xf32>
    %20 = arith.mulf %18, %19 : vector<4x128xf32>
    %21 = arith.addf %17, %20 : vector<4x128xf32>
    %22 = vector.extract_strided_slice %2 {offsets = [0, 640], sizes = [4, 128], strides = [1, 1]} : vector<4x2432xf32> to vector<4x128xf32>
    %c0_9 = arith.constant 0 : index
    %c640 = arith.constant 640 : index
    %23 = vector.load %arg2[%c0_9, %c640] : memref<4x9728xf32, #tpu.memory_space<vmem>>, vector<4x128xf32>
    %24 = arith.mulf %22, %23 : vector<4x128xf32>
    %25 = arith.addf %21, %24 : vector<4x128xf32>
    %26 = vector.extract_strided_slice %2 {offsets = [0, 768], sizes = [4, 128], strides = [1, 1]} : vector<4x2432xf32> to vector<4x128xf32>
    %c0_10 = arith.constant 0 : index
    %c768 = arith.constant 768 : index
    %27 = vector.load %arg2[%c0_10, %c768] : memref<4x9728xf32, #tpu.memory_space<vmem>>, vector<4x128xf32>
    %28 = arith.mulf %26, %27 : vector<4x128xf32>
    %29 = arith.addf %25, %28 : vector<4x128xf32>
    %30 = vector.extract_strided_slice %2 {offsets = [0, 896], sizes = [4, 128], strides = [1, 1]} : vector<4x2432xf32> to vector<4x128xf32>
    %c0_11 = arith.constant 0 : index
    %c896 = arith.constant 896 : index
    %31 = vector.load %arg2[%c0_11, %c896] : memref<4x9728xf32, #tpu.memory_space<vmem>>, vector<4x128xf32>
    %32 = arith.mulf %30, %31 : vector<4x128xf32>
    %33 = arith.addf %29, %32 : vector<4x128xf32>
    %34 = vector.extract_strided_slice %2 {offsets = [0, 1024], sizes = [4, 128], strides = [1, 1]} : vector<4x2432xf32> to vector<4x128xf32>
    %c0_12 = arith.constant 0 : index
    %c1024 = arith.constant 1024 : index
    %35 = vector.load %arg2[%c0_12, %c1024] : memref<4x9728xf32, #tpu.memory_space<vmem>>, vector<4x128xf32>
    %36 = arith.mulf %34, %35 : vector<4x128xf32>
    %37 = arith.addf %33, %36 : vector<4x128xf32>
    %38 = vector.extract_strided_slice %2 {offsets = [0, 1152], sizes = [4, 128], strides = [1, 1]} : vector<4x2432xf32> to vector<4x128xf32>
    %c0_13 = arith.constant 0 : index
    %c1152 = arith.constant 1152 : index
    %39 = vector.load %arg2[%c0_13, %c1152] : memref<4x9728xf32, #tpu.memory_space<vmem>>, vector<4x128xf32>
    %40 = arith.mulf %38, %39 : vector<4x128xf32>
    %41 = arith.addf %37, %40 : vector<4x128xf32>
    %42 = vector.extract_strided_slice %2 {offsets = [0, 1280], sizes = [4, 128], strides = [1, 1]} : vector<4x2432xf32> to vector<4x128xf32>
    %c0_14 = arith.constant 0 : index
    %c1280 = arith.constant 1280 : index
    %43 = vector.load %arg2[%c0_14, %c1280] : memref<4x9728xf32, #tpu.memory_space<vmem>>, vector<4x128xf32>
    %44 = arith.mulf %42, %43 : vector<4x128xf32>
    %45 = arith.addf %41, %44 : vector<4x128xf32>
    %46 = vector.extract_strided_slice %2 {offsets = [0, 1408], sizes = [4, 128], strides = [1, 1]} : vector<4x2432xf32> to vector<4x128xf32>
    %c0_15 = arith.constant 0 : index
    %c1408 = arith.constant 1408 : index
    %47 = vector.load %arg2[%c0_15, %c1408] : memref<4x9728xf32, #tpu.memory_space<vmem>>, vector<4x128xf32>
    %48 = arith.mulf %46, %47 : vector<4x128xf32>
    %49 = arith.addf %45, %48 : vector<4x128xf32>
    %50 = vector.extract_strided_slice %2 {offsets = [0, 1536], sizes = [4, 128], strides = [1, 1]} : vector<4x2432xf32> to vector<4x128xf32>
    %c0_16 = arith.constant 0 : index
    %c1536 = arith.constant 1536 : index
    %51 = vector.load %arg2[%c0_16, %c1536] : memref<4x9728xf32, #tpu.memory_space<vmem>>, vector<4x128xf32>
    %52 = arith.mulf %50, %51 : vector<4x128xf32>
    %53 = arith.addf %49, %52 : vector<4x128xf32>
    %54 = vector.extract_strided_slice %2 {offsets = [0, 1664], sizes = [4, 128], strides = [1, 1]} : vector<4x2432xf32> to vector<4x128xf32>
    %c0_17 = arith.constant 0 : index
    %c1664 = arith.constant 1664 : index
    %55 = vector.load %arg2[%c0_17, %c1664] : memref<4x9728xf32, #tpu.memory_space<vmem>>, vector<4x128xf32>
    %56 = arith.mulf %54, %55 : vector<4x128xf32>
    %57 = arith.addf %53, %56 : vector<4x128xf32>
    %58 = vector.extract_strided_slice %2 {offsets = [0, 1792], sizes = [4, 128], strides = [1, 1]} : vector<4x2432xf32> to vector<4x128xf32>
    %c0_18 = arith.constant 0 : index
    %c1792 = arith.constant 1792 : index
    %59 = vector.load %arg2[%c0_18, %c1792] : memref<4x9728xf32, #tpu.memory_space<vmem>>, vector<4x128xf32>
    %60 = arith.mulf %58, %59 : vector<4x128xf32>
    %61 = arith.addf %57, %60 : vector<4x128xf32>
    %62 = vector.extract_strided_slice %2 {offsets = [0, 1920], sizes = [4, 128], strides = [1, 1]} : vector<4x2432xf32> to vector<4x128xf32>
    %c0_19 = arith.constant 0 : index
    %c1920 = arith.constant 1920 : index
    %63 = vector.load %arg2[%c0_19, %c1920] : memref<4x9728xf32, #tpu.memory_space<vmem>>, vector<4x128xf32>
    %64 = arith.mulf %62, %63 : vector<4x128xf32>
    %65 = arith.addf %61, %64 : vector<4x128xf32>
    %66 = vector.extract_strided_slice %2 {offsets = [0, 2048], sizes = [4, 128], strides = [1, 1]} : vector<4x2432xf32> to vector<4x128xf32>
    %c0_20 = arith.constant 0 : index
    %c2048 = arith.constant 2048 : index
    %67 = vector.load %arg2[%c0_20, %c2048] : memref<4x9728xf32, #tpu.memory_space<vmem>>, vector<4x128xf32>
    %68 = arith.mulf %66, %67 : vector<4x128xf32>
    %69 = arith.addf %65, %68 : vector<4x128xf32>
    %70 = vector.extract_strided_slice %2 {offsets = [0, 2176], sizes = [4, 128], strides = [1, 1]} : vector<4x2432xf32> to vector<4x128xf32>
    %c0_21 = arith.constant 0 : index
    %c2176 = arith.constant 2176 : index
    %71 = vector.load %arg2[%c0_21, %c2176] : memref<4x9728xf32, #tpu.memory_space<vmem>>, vector<4x128xf32>
    %72 = arith.mulf %70, %71 : vector<4x128xf32>
    %73 = arith.addf %69, %72 : vector<4x128xf32>
    %74 = vector.extract_strided_slice %2 {offsets = [0, 2304], sizes = [4, 128], strides = [1, 1]} : vector<4x2432xf32> to vector<4x128xf32>
    %c0_22 = arith.constant 0 : index
    %c2304 = arith.constant 2304 : index
    %75 = vector.load %arg2[%c0_22, %c2304] : memref<4x9728xf32, #tpu.memory_space<vmem>>, vector<4x128xf32>
    %76 = arith.mulf %74, %75 : vector<4x128xf32>
    %77 = arith.addf %73, %76 : vector<4x128xf32>
    %c0_23 = arith.constant 0 : index
    %c2432 = arith.constant 2432 : index
    %78 = vector.load %arg1[%c0_23, %c2432] : memref<152x9728xbf16, #tpu.memory_space<vmem>>, vector<152x2432xbf16>
    %cst_24 = arith.constant dense<0.000000e+00> : vector<4x2432xf32>
    %79 = tpu.matmul %0, %78, %cst_24 {dimension_numbers = #tpu.dot_dimension_numbers<[1], [0], [0], [1], [0, 0, 1, 1], [], []>} : vector<4x152xbf16>, vector<152x2432xbf16>, vector<4x2432xf32> -> vector<4x2432xf32>
    %80 = vector.extract_strided_slice %79 {offsets = [0, 0], sizes = [4, 128], strides = [1, 1]} : vector<4x2432xf32> to vector<4x128xf32>
    %c0_25 = arith.constant 0 : index
    %c2432_26 = arith.constant 2432 : index
    %81 = vector.load %arg2[%c0_25, %c2432_26] : memref<4x9728xf32, #tpu.memory_space<vmem>>, vector<4x128xf32>
    %82 = arith.mulf %80, %81 : vector<4x128xf32>
    %83 = vector.extract_strided_slice %79 {offsets = [0, 128], sizes = [4, 128], strides = [1, 1]} : vector<4x2432xf32> to vector<4x128xf32>
    %c0_27 = arith.constant 0 : index
    %c2560 = arith.constant 2560 : index
    %84 = vector.load %arg2[%c0_27, %c2560] : memref<4x9728xf32, #tpu.memory_space<vmem>>, vector<4x128xf32>
    %85 = arith.mulf %83, %84 : vector<4x128xf32>
    %86 = arith.addf %82, %85 : vector<4x128xf32>
    %87 = vector.extract_strided_slice %79 {offsets = [0, 256], sizes = [4, 128], strides = [1, 1]} : vector<4x2432xf32> to vector<4x128xf32>
    %c0_28 = arith.constant 0 : index
    %c2688 = arith.constant 2688 : index
    %88 = vector.load %arg2[%c0_28, %c2688] : memref<4x9728xf32, #tpu.memory_space<vmem>>, vector<4x128xf32>
    %89 = arith.mulf %87, %88 : vector<4x128xf32>
    %90 = arith.addf %86, %89 : vector<4x128xf32>
    %91 = vector.extract_strided_slice %79 {offsets = [0, 384], sizes = [4, 128], strides = [1, 1]} : vector<4x2432xf32> to vector<4x128xf32>
    %c0_29 = arith.constant 0 : index
    %c2816 = arith.constant 2816 : index
    %92 = vector.load %arg2[%c0_29, %c2816] : memref<4x9728xf32, #tpu.memory_space<vmem>>, vector<4x128xf32>
    %93 = arith.mulf %91, %92 : vector<4x128xf32>
    %94 = arith.addf %90, %93 : vector<4x128xf32>
    %95 = vector.extract_strided_slice %79 {offsets = [0, 512], sizes = [4, 128], strides = [1, 1]} : vector<4x2432xf32> to vector<4x128xf32>
    %c0_30 = arith.constant 0 : index
    %c2944 = arith.constant 2944 : index
    %96 = vector.load %arg2[%c0_30, %c2944] : memref<4x9728xf32, #tpu.memory_space<vmem>>, vector<4x128xf32>
    %97 = arith.mulf %95, %96 : vector<4x128xf32>
    %98 = arith.addf %94, %97 : vector<4x128xf32>
    %99 = vector.extract_strided_slice %79 {offsets = [0, 640], sizes = [4, 128], strides = [1, 1]} : vector<4x2432xf32> to vector<4x128xf32>
    %c0_31 = arith.constant 0 : index
    %c3072 = arith.constant 3072 : index
    %100 = vector.load %arg2[%c0_31, %c3072] : memref<4x9728xf32, #tpu.memory_space<vmem>>, vector<4x128xf32>
    %101 = arith.mulf %99, %100 : vector<4x128xf32>
    %102 = arith.addf %98, %101 : vector<4x128xf32>
    %103 = vector.extract_strided_slice %79 {offsets = [0, 768], sizes = [4, 128], strides = [1, 1]} : vector<4x2432xf32> to vector<4x128xf32>
    %c0_32 = arith.constant 0 : index
    %c3200 = arith.constant 3200 : index
    %104 = vector.load %arg2[%c0_32, %c3200] : memref<4x9728xf32, #tpu.memory_space<vmem>>, vector<4x128xf32>
    %105 = arith.mulf %103, %104 : vector<4x128xf32>
    %106 = arith.addf %102, %105 : vector<4x128xf32>
    %107 = vector.extract_strided_slice %79 {offsets = [0, 896], sizes = [4, 128], strides = [1, 1]} : vector<4x2432xf32> to vector<4x128xf32>
    %c0_33 = arith.constant 0 : index
    %c3328 = arith.constant 3328 : index
    %108 = vector.load %arg2[%c0_33, %c3328] : memref<4x9728xf32, #tpu.memory_space<vmem>>, vector<4x128xf32>
    %109 = arith.mulf %107, %108 : vector<4x128xf32>
    %110 = arith.addf %106, %109 : vector<4x128xf32>
    %111 = vector.extract_strided_slice %79 {offsets = [0, 1024], sizes = [4, 128], strides = [1, 1]} : vector<4x2432xf32> to vector<4x128xf32>
    %c0_34 = arith.constant 0 : index
    %c3456 = arith.constant 3456 : index
    %112 = vector.load %arg2[%c0_34, %c3456] : memref<4x9728xf32, #tpu.memory_space<vmem>>, vector<4x128xf32>
    %113 = arith.mulf %111, %112 : vector<4x128xf32>
    %114 = arith.addf %110, %113 : vector<4x128xf32>
    %115 = vector.extract_strided_slice %79 {offsets = [0, 1152], sizes = [4, 128], strides = [1, 1]} : vector<4x2432xf32> to vector<4x128xf32>
    %c0_35 = arith.constant 0 : index
    %c3584 = arith.constant 3584 : index
    %116 = vector.load %arg2[%c0_35, %c3584] : memref<4x9728xf32, #tpu.memory_space<vmem>>, vector<4x128xf32>
    %117 = arith.mulf %115, %116 : vector<4x128xf32>
    %118 = arith.addf %114, %117 : vector<4x128xf32>
    %119 = vector.extract_strided_slice %79 {offsets = [0, 1280], sizes = [4, 128], strides = [1, 1]} : vector<4x2432xf32> to vector<4x128xf32>
    %c0_36 = arith.constant 0 : index
    %c3712 = arith.constant 3712 : index
    %120 = vector.load %arg2[%c0_36, %c3712] : memref<4x9728xf32, #tpu.memory_space<vmem>>, vector<4x128xf32>
    %121 = arith.mulf %119, %120 : vector<4x128xf32>
    %122 = arith.addf %118, %121 : vector<4x128xf32>
    %123 = vector.extract_strided_slice %79 {offsets = [0, 1408], sizes = [4, 128], strides = [1, 1]} : vector<4x2432xf32> to vector<4x128xf32>
    %c0_37 = arith.constant 0 : index
    %c3840 = arith.constant 3840 : index
    %124 = vector.load %arg2[%c0_37, %c3840] : memref<4x9728xf32, #tpu.memory_space<vmem>>, vector<4x128xf32>
    %125 = arith.mulf %123, %124 : vector<4x128xf32>
    %126 = arith.addf %122, %125 : vector<4x128xf32>
    %127 = vector.extract_strided_slice %79 {offsets = [0, 1536], sizes = [4, 128], strides = [1, 1]} : vector<4x2432xf32> to vector<4x128xf32>
    %c0_38 = arith.constant 0 : index
    %c3968 = arith.constant 3968 : index
    %128 = vector.load %arg2[%c0_38, %c3968] : memref<4x9728xf32, #tpu.memory_space<vmem>>, vector<4x128xf32>
    %129 = arith.mulf %127, %128 : vector<4x128xf32>
    %130 = arith.addf %126, %129 : vector<4x128xf32>
    %131 = vector.extract_strided_slice %79 {offsets = [0, 1664], sizes = [4, 128], strides = [1, 1]} : vector<4x2432xf32> to vector<4x128xf32>
    %c0_39 = arith.constant 0 : index
    %c4096 = arith.constant 4096 : index
    %132 = vector.load %arg2[%c0_39, %c4096] : memref<4x9728xf32, #tpu.memory_space<vmem>>, vector<4x128xf32>
    %133 = arith.mulf %131, %132 : vector<4x128xf32>
    %134 = arith.addf %130, %133 : vector<4x128xf32>
    %135 = vector.extract_strided_slice %79 {offsets = [0, 1792], sizes = [4, 128], strides = [1, 1]} : vector<4x2432xf32> to vector<4x128xf32>
    %c0_40 = arith.constant 0 : index
    %c4224 = arith.constant 4224 : index
    %136 = vector.load %arg2[%c0_40, %c4224] : memref<4x9728xf32, #tpu.memory_space<vmem>>, vector<4x128xf32>
    %137 = arith.mulf %135, %136 : vector<4x128xf32>
    %138 = arith.addf %134, %137 : vector<4x128xf32>
    %139 = vector.extract_strided_slice %79 {offsets = [0, 1920], sizes = [4, 128], strides = [1, 1]} : vector<4x2432xf32> to vector<4x128xf32>
    %c0_41 = arith.constant 0 : index
    %c4352 = arith.constant 4352 : index
    %140 = vector.load %arg2[%c0_41, %c4352] : memref<4x9728xf32, #tpu.memory_space<vmem>>, vector<4x128xf32>
    %141 = arith.mulf %139, %140 : vector<4x128xf32>
    %142 = arith.addf %138, %141 : vector<4x128xf32>
    %143 = vector.extract_strided_slice %79 {offsets = [0, 2048], sizes = [4, 128], strides = [1, 1]} : vector<4x2432xf32> to vector<4x128xf32>
    %c0_42 = arith.constant 0 : index
    %c4480 = arith.constant 4480 : index
    %144 = vector.load %arg2[%c0_42, %c4480] : memref<4x9728xf32, #tpu.memory_space<vmem>>, vector<4x128xf32>
    %145 = arith.mulf %143, %144 : vector<4x128xf32>
    %146 = arith.addf %142, %145 : vector<4x128xf32>
    %147 = vector.extract_strided_slice %79 {offsets = [0, 2176], sizes = [4, 128], strides = [1, 1]} : vector<4x2432xf32> to vector<4x128xf32>
    %c0_43 = arith.constant 0 : index
    %c4608 = arith.constant 4608 : index
    %148 = vector.load %arg2[%c0_43, %c4608] : memref<4x9728xf32, #tpu.memory_space<vmem>>, vector<4x128xf32>
    %149 = arith.mulf %147, %148 : vector<4x128xf32>
    %150 = arith.addf %146, %149 : vector<4x128xf32>
    %151 = vector.extract_strided_slice %79 {offsets = [0, 2304], sizes = [4, 128], strides = [1, 1]} : vector<4x2432xf32> to vector<4x128xf32>
    %c0_44 = arith.constant 0 : index
    %c4736 = arith.constant 4736 : index
    %152 = vector.load %arg2[%c0_44, %c4736] : memref<4x9728xf32, #tpu.memory_space<vmem>>, vector<4x128xf32>
    %153 = arith.mulf %151, %152 : vector<4x128xf32>
    %154 = arith.addf %150, %153 : vector<4x128xf32>
    %c0_45 = arith.constant 0 : index
    %c4864 = arith.constant 4864 : index
    %155 = vector.load %arg1[%c0_45, %c4864] : memref<152x9728xbf16, #tpu.memory_space<vmem>>, vector<152x2432xbf16>
    %cst_46 = arith.constant dense<0.000000e+00> : vector<4x2432xf32>
    %156 = tpu.matmul %0, %155, %cst_46 {dimension_numbers = #tpu.dot_dimension_numbers<[1], [0], [0], [1], [0, 0, 1, 1], [], []>} : vector<4x152xbf16>, vector<152x2432xbf16>, vector<4x2432xf32> -> vector<4x2432xf32>
    %157 = vector.extract_strided_slice %156 {offsets = [0, 0], sizes = [4, 128], strides = [1, 1]} : vector<4x2432xf32> to vector<4x128xf32>
    %c0_47 = arith.constant 0 : index
    %c4864_48 = arith.constant 4864 : index
    %158 = vector.load %arg2[%c0_47, %c4864_48] : memref<4x9728xf32, #tpu.memory_space<vmem>>, vector<4x128xf32>
    %159 = arith.mulf %157, %158 : vector<4x128xf32>
    %160 = vector.extract_strided_slice %156 {offsets = [0, 128], sizes = [4, 128], strides = [1, 1]} : vector<4x2432xf32> to vector<4x128xf32>
    %c0_49 = arith.constant 0 : index
    %c4992 = arith.constant 4992 : index
    %161 = vector.load %arg2[%c0_49, %c4992] : memref<4x9728xf32, #tpu.memory_space<vmem>>, vector<4x128xf32>
    %162 = arith.mulf %160, %161 : vector<4x128xf32>
    %163 = arith.addf %159, %162 : vector<4x128xf32>
    %164 = vector.extract_strided_slice %156 {offsets = [0, 256], sizes = [4, 128], strides = [1, 1]} : vector<4x2432xf32> to vector<4x128xf32>
    %c0_50 = arith.constant 0 : index
    %c5120 = arith.constant 5120 : index
    %165 = vector.load %arg2[%c0_50, %c5120] : memref<4x9728xf32, #tpu.memory_space<vmem>>, vector<4x128xf32>
    %166 = arith.mulf %164, %165 : vector<4x128xf32>
    %167 = arith.addf %163, %166 : vector<4x128xf32>
    %168 = vector.extract_strided_slice %156 {offsets = [0, 384], sizes = [4, 128], strides = [1, 1]} : vector<4x2432xf32> to vector<4x128xf32>
    %c0_51 = arith.constant 0 : index
    %c5248 = arith.constant 5248 : index
    %169 = vector.load %arg2[%c0_51, %c5248] : memref<4x9728xf32, #tpu.memory_space<vmem>>, vector<4x128xf32>
    %170 = arith.mulf %168, %169 : vector<4x128xf32>
    %171 = arith.addf %167, %170 : vector<4x128xf32>
    %172 = vector.extract_strided_slice %156 {offsets = [0, 512], sizes = [4, 128], strides = [1, 1]} : vector<4x2432xf32> to vector<4x128xf32>
    %c0_52 = arith.constant 0 : index
    %c5376 = arith.constant 5376 : index
    %173 = vector.load %arg2[%c0_52, %c5376] : memref<4x9728xf32, #tpu.memory_space<vmem>>, vector<4x128xf32>
    %174 = arith.mulf %172, %173 : vector<4x128xf32>
    %175 = arith.addf %171, %174 : vector<4x128xf32>
    %176 = vector.extract_strided_slice %156 {offsets = [0, 640], sizes = [4, 128], strides = [1, 1]} : vector<4x2432xf32> to vector<4x128xf32>
    %c0_53 = arith.constant 0 : index
    %c5504 = arith.constant 5504 : index
    %177 = vector.load %arg2[%c0_53, %c5504] : memref<4x9728xf32, #tpu.memory_space<vmem>>, vector<4x128xf32>
    %178 = arith.mulf %176, %177 : vector<4x128xf32>
    %179 = arith.addf %175, %178 : vector<4x128xf32>
    %180 = vector.extract_strided_slice %156 {offsets = [0, 768], sizes = [4, 128], strides = [1, 1]} : vector<4x2432xf32> to vector<4x128xf32>
    %c0_54 = arith.constant 0 : index
    %c5632 = arith.constant 5632 : index
    %181 = vector.load %arg2[%c0_54, %c5632] : memref<4x9728xf32, #tpu.memory_space<vmem>>, vector<4x128xf32>
    %182 = arith.mulf %180, %181 : vector<4x128xf32>
    %183 = arith.addf %179, %182 : vector<4x128xf32>
    %184 = vector.extract_strided_slice %156 {offsets = [0, 896], sizes = [4, 128], strides = [1, 1]} : vector<4x2432xf32> to vector<4x128xf32>
    %c0_55 = arith.constant 0 : index
    %c5760 = arith.constant 5760 : index
    %185 = vector.load %arg2[%c0_55, %c5760] : memref<4x9728xf32, #tpu.memory_space<vmem>>, vector<4x128xf32>
    %186 = arith.mulf %184, %185 : vector<4x128xf32>
    %187 = arith.addf %183, %186 : vector<4x128xf32>
    %188 = vector.extract_strided_slice %156 {offsets = [0, 1024], sizes = [4, 128], strides = [1, 1]} : vector<4x2432xf32> to vector<4x128xf32>
    %c0_56 = arith.constant 0 : index
    %c5888 = arith.constant 5888 : index
    %189 = vector.load %arg2[%c0_56, %c5888] : memref<4x9728xf32, #tpu.memory_space<vmem>>, vector<4x128xf32>
    %190 = arith.mulf %188, %189 : vector<4x128xf32>
    %191 = arith.addf %187, %190 : vector<4x128xf32>
    %192 = vector.extract_strided_slice %156 {offsets = [0, 1152], sizes = [4, 128], strides = [1, 1]} : vector<4x2432xf32> to vector<4x128xf32>
    %c0_57 = arith.constant 0 : index
    %c6016 = arith.constant 6016 : index
    %193 = vector.load %arg2[%c0_57, %c6016] : memref<4x9728xf32, #tpu.memory_space<vmem>>, vector<4x128xf32>
    %194 = arith.mulf %192, %193 : vector<4x128xf32>
    %195 = arith.addf %191, %194 : vector<4x128xf32>
    %196 = vector.extract_strided_slice %156 {offsets = [0, 1280], sizes = [4, 128], strides = [1, 1]} : vector<4x2432xf32> to vector<4x128xf32>
    %c0_58 = arith.constant 0 : index
    %c6144 = arith.constant 6144 : index
    %197 = vector.load %arg2[%c0_58, %c6144] : memref<4x9728xf32, #tpu.memory_space<vmem>>, vector<4x128xf32>
    %198 = arith.mulf %196, %197 : vector<4x128xf32>
    %199 = arith.addf %195, %198 : vector<4x128xf32>
    %200 = vector.extract_strided_slice %156 {offsets = [0, 1408], sizes = [4, 128], strides = [1, 1]} : vector<4x2432xf32> to vector<4x128xf32>
    %c0_59 = arith.constant 0 : index
    %c6272 = arith.constant 6272 : index
    %201 = vector.load %arg2[%c0_59, %c6272] : memref<4x9728xf32, #tpu.memory_space<vmem>>, vector<4x128xf32>
    %202 = arith.mulf %200, %201 : vector<4x128xf32>
    %203 = arith.addf %199, %202 : vector<4x128xf32>
    %204 = vector.extract_strided_slice %156 {offsets = [0, 1536], sizes = [4, 128], strides = [1, 1]} : vector<4x2432xf32> to vector<4x128xf32>
    %c0_60 = arith.constant 0 : index
    %c6400 = arith.constant 6400 : index
    %205 = vector.load %arg2[%c0_60, %c6400] : memref<4x9728xf32, #tpu.memory_space<vmem>>, vector<4x128xf32>
    %206 = arith.mulf %204, %205 : vector<4x128xf32>
    %207 = arith.addf %203, %206 : vector<4x128xf32>
    %208 = vector.extract_strided_slice %156 {offsets = [0, 1664], sizes = [4, 128], strides = [1, 1]} : vector<4x2432xf32> to vector<4x128xf32>
    %c0_61 = arith.constant 0 : index
    %c6528 = arith.constant 6528 : index
    %209 = vector.load %arg2[%c0_61, %c6528] : memref<4x9728xf32, #tpu.memory_space<vmem>>, vector<4x128xf32>
    %210 = arith.mulf %208, %209 : vector<4x128xf32>
    %211 = arith.addf %207, %210 : vector<4x128xf32>
    %212 = vector.extract_strided_slice %156 {offsets = [0, 1792], sizes = [4, 128], strides = [1, 1]} : vector<4x2432xf32> to vector<4x128xf32>
    %c0_62 = arith.constant 0 : index
    %c6656 = arith.constant 6656 : index
    %213 = vector.load %arg2[%c0_62, %c6656] : memref<4x9728xf32, #tpu.memory_space<vmem>>, vector<4x128xf32>
    %214 = arith.mulf %212, %213 : vector<4x128xf32>
    %215 = arith.addf %211, %214 : vector<4x128xf32>
    %216 = vector.extract_strided_slice %156 {offsets = [0, 1920], sizes = [4, 128], strides = [1, 1]} : vector<4x2432xf32> to vector<4x128xf32>
    %c0_63 = arith.constant 0 : index
    %c6784 = arith.constant 6784 : index
    %217 = vector.load %arg2[%c0_63, %c6784] : memref<4x9728xf32, #tpu.memory_space<vmem>>, vector<4x128xf32>
    %218 = arith.mulf %216, %217 : vector<4x128xf32>
    %219 = arith.addf %215, %218 : vector<4x128xf32>
    %220 = vector.extract_strided_slice %156 {offsets = [0, 2048], sizes = [4, 128], strides = [1, 1]} : vector<4x2432xf32> to vector<4x128xf32>
    %c0_64 = arith.constant 0 : index
    %c6912 = arith.constant 6912 : index
    %221 = vector.load %arg2[%c0_64, %c6912] : memref<4x9728xf32, #tpu.memory_space<vmem>>, vector<4x128xf32>
    %222 = arith.mulf %220, %221 : vector<4x128xf32>
    %223 = arith.addf %219, %222 : vector<4x128xf32>
    %224 = vector.extract_strided_slice %156 {offsets = [0, 2176], sizes = [4, 128], strides = [1, 1]} : vector<4x2432xf32> to vector<4x128xf32>
    %c0_65 = arith.constant 0 : index
    %c7040 = arith.constant 7040 : index
    %225 = vector.load %arg2[%c0_65, %c7040] : memref<4x9728xf32, #tpu.memory_space<vmem>>, vector<4x128xf32>
    %226 = arith.mulf %224, %225 : vector<4x128xf32>
    %227 = arith.addf %223, %226 : vector<4x128xf32>
    %228 = vector.extract_strided_slice %156 {offsets = [0, 2304], sizes = [4, 128], strides = [1, 1]} : vector<4x2432xf32> to vector<4x128xf32>
    %c0_66 = arith.constant 0 : index
    %c7168 = arith.constant 7168 : index
    %229 = vector.load %arg2[%c0_66, %c7168] : memref<4x9728xf32, #tpu.memory_space<vmem>>, vector<4x128xf32>
    %230 = arith.mulf %228, %229 : vector<4x128xf32>
    %231 = arith.addf %227, %230 : vector<4x128xf32>
    %c0_67 = arith.constant 0 : index
    %c7296 = arith.constant 7296 : index
    %232 = vector.load %arg1[%c0_67, %c7296] : memref<152x9728xbf16, #tpu.memory_space<vmem>>, vector<152x2432xbf16>
    %cst_68 = arith.constant dense<0.000000e+00> : vector<4x2432xf32>
    %233 = tpu.matmul %0, %232, %cst_68 {dimension_numbers = #tpu.dot_dimension_numbers<[1], [0], [0], [1], [0, 0, 1, 1], [], []>} : vector<4x152xbf16>, vector<152x2432xbf16>, vector<4x2432xf32> -> vector<4x2432xf32>
    %234 = vector.extract_strided_slice %233 {offsets = [0, 0], sizes = [4, 128], strides = [1, 1]} : vector<4x2432xf32> to vector<4x128xf32>
    %c0_69 = arith.constant 0 : index
    %c7296_70 = arith.constant 7296 : index
    %235 = vector.load %arg2[%c0_69, %c7296_70] : memref<4x9728xf32, #tpu.memory_space<vmem>>, vector<4x128xf32>
    %236 = arith.mulf %234, %235 : vector<4x128xf32>
    %237 = vector.extract_strided_slice %233 {offsets = [0, 128], sizes = [4, 128], strides = [1, 1]} : vector<4x2432xf32> to vector<4x128xf32>
    %c0_71 = arith.constant 0 : index
    %c7424 = arith.constant 7424 : index
    %238 = vector.load %arg2[%c0_71, %c7424] : memref<4x9728xf32, #tpu.memory_space<vmem>>, vector<4x128xf32>
    %239 = arith.mulf %237, %238 : vector<4x128xf32>
    %240 = arith.addf %236, %239 : vector<4x128xf32>
    %241 = vector.extract_strided_slice %233 {offsets = [0, 256], sizes = [4, 128], strides = [1, 1]} : vector<4x2432xf32> to vector<4x128xf32>
    %c0_72 = arith.constant 0 : index
    %c7552 = arith.constant 7552 : index
    %242 = vector.load %arg2[%c0_72, %c7552] : memref<4x9728xf32, #tpu.memory_space<vmem>>, vector<4x128xf32>
    %243 = arith.mulf %241, %242 : vector<4x128xf32>
    %244 = arith.addf %240, %243 : vector<4x128xf32>
    %245 = vector.extract_strided_slice %233 {offsets = [0, 384], sizes = [4, 128], strides = [1, 1]} : vector<4x2432xf32> to vector<4x128xf32>
    %c0_73 = arith.constant 0 : index
    %c7680 = arith.constant 7680 : index
    %246 = vector.load %arg2[%c0_73, %c7680] : memref<4x9728xf32, #tpu.memory_space<vmem>>, vector<4x128xf32>
    %247 = arith.mulf %245, %246 : vector<4x128xf32>
    %248 = arith.addf %244, %247 : vector<4x128xf32>
    %249 = vector.extract_strided_slice %233 {offsets = [0, 512], sizes = [4, 128], strides = [1, 1]} : vector<4x2432xf32> to vector<4x128xf32>
    %c0_74 = arith.constant 0 : index
    %c7808 = arith.constant 7808 : index
    %250 = vector.load %arg2[%c0_74, %c7808] : memref<4x9728xf32, #tpu.memory_space<vmem>>, vector<4x128xf32>
    %251 = arith.mulf %249, %250 : vector<4x128xf32>
    %252 = arith.addf %248, %251 : vector<4x128xf32>
    %253 = vector.extract_strided_slice %233 {offsets = [0, 640], sizes = [4, 128], strides = [1, 1]} : vector<4x2432xf32> to vector<4x128xf32>
    %c0_75 = arith.constant 0 : index
    %c7936 = arith.constant 7936 : index
    %254 = vector.load %arg2[%c0_75, %c7936] : memref<4x9728xf32, #tpu.memory_space<vmem>>, vector<4x128xf32>
    %255 = arith.mulf %253, %254 : vector<4x128xf32>
    %256 = arith.addf %252, %255 : vector<4x128xf32>
    %257 = vector.extract_strided_slice %233 {offsets = [0, 768], sizes = [4, 128], strides = [1, 1]} : vector<4x2432xf32> to vector<4x128xf32>
    %c0_76 = arith.constant 0 : index
    %c8064 = arith.constant 8064 : index
    %258 = vector.load %arg2[%c0_76, %c8064] : memref<4x9728xf32, #tpu.memory_space<vmem>>, vector<4x128xf32>
    %259 = arith.mulf %257, %258 : vector<4x128xf32>
    %260 = arith.addf %256, %259 : vector<4x128xf32>
    %261 = vector.extract_strided_slice %233 {offsets = [0, 896], sizes = [4, 128], strides = [1, 1]} : vector<4x2432xf32> to vector<4x128xf32>
    %c0_77 = arith.constant 0 : index
    %c8192 = arith.constant 8192 : index
    %262 = vector.load %arg2[%c0_77, %c8192] : memref<4x9728xf32, #tpu.memory_space<vmem>>, vector<4x128xf32>
    %263 = arith.mulf %261, %262 : vector<4x128xf32>
    %264 = arith.addf %260, %263 : vector<4x128xf32>
    %265 = vector.extract_strided_slice %233 {offsets = [0, 1024], sizes = [4, 128], strides = [1, 1]} : vector<4x2432xf32> to vector<4x128xf32>
    %c0_78 = arith.constant 0 : index
    %c8320 = arith.constant 8320 : index
    %266 = vector.load %arg2[%c0_78, %c8320] : memref<4x9728xf32, #tpu.memory_space<vmem>>, vector<4x128xf32>
    %267 = arith.mulf %265, %266 : vector<4x128xf32>
    %268 = arith.addf %264, %267 : vector<4x128xf32>
    %269 = vector.extract_strided_slice %233 {offsets = [0, 1152], sizes = [4, 128], strides = [1, 1]} : vector<4x2432xf32> to vector<4x128xf32>
    %c0_79 = arith.constant 0 : index
    %c8448 = arith.constant 8448 : index
    %270 = vector.load %arg2[%c0_79, %c8448] : memref<4x9728xf32, #tpu.memory_space<vmem>>, vector<4x128xf32>
    %271 = arith.mulf %269, %270 : vector<4x128xf32>
    %272 = arith.addf %268, %271 : vector<4x128xf32>
    %273 = vector.extract_strided_slice %233 {offsets = [0, 1280], sizes = [4, 128], strides = [1, 1]} : vector<4x2432xf32> to vector<4x128xf32>
    %c0_80 = arith.constant 0 : index
    %c8576 = arith.constant 8576 : index
    %274 = vector.load %arg2[%c0_80, %c8576] : memref<4x9728xf32, #tpu.memory_space<vmem>>, vector<4x128xf32>
    %275 = arith.mulf %273, %274 : vector<4x128xf32>
    %276 = arith.addf %272, %275 : vector<4x128xf32>
    %277 = vector.extract_strided_slice %233 {offsets = [0, 1408], sizes = [4, 128], strides = [1, 1]} : vector<4x2432xf32> to vector<4x128xf32>
    %c0_81 = arith.constant 0 : index
    %c8704 = arith.constant 8704 : index
    %278 = vector.load %arg2[%c0_81, %c8704] : memref<4x9728xf32, #tpu.memory_space<vmem>>, vector<4x128xf32>
    %279 = arith.mulf %277, %278 : vector<4x128xf32>
    %280 = arith.addf %276, %279 : vector<4x128xf32>
    %281 = vector.extract_strided_slice %233 {offsets = [0, 1536], sizes = [4, 128], strides = [1, 1]} : vector<4x2432xf32> to vector<4x128xf32>
    %c0_82 = arith.constant 0 : index
    %c8832 = arith.constant 8832 : index
    %282 = vector.load %arg2[%c0_82, %c8832] : memref<4x9728xf32, #tpu.memory_space<vmem>>, vector<4x128xf32>
    %283 = arith.mulf %281, %282 : vector<4x128xf32>
    %284 = arith.addf %280, %283 : vector<4x128xf32>
    %285 = vector.extract_strided_slice %233 {offsets = [0, 1664], sizes = [4, 128], strides = [1, 1]} : vector<4x2432xf32> to vector<4x128xf32>
    %c0_83 = arith.constant 0 : index
    %c8960 = arith.constant 8960 : index
    %286 = vector.load %arg2[%c0_83, %c8960] : memref<4x9728xf32, #tpu.memory_space<vmem>>, vector<4x128xf32>
    %287 = arith.mulf %285, %286 : vector<4x128xf32>
    %288 = arith.addf %284, %287 : vector<4x128xf32>
    %289 = vector.extract_strided_slice %233 {offsets = [0, 1792], sizes = [4, 128], strides = [1, 1]} : vector<4x2432xf32> to vector<4x128xf32>
    %c0_84 = arith.constant 0 : index
    %c9088 = arith.constant 9088 : index
    %290 = vector.load %arg2[%c0_84, %c9088] : memref<4x9728xf32, #tpu.memory_space<vmem>>, vector<4x128xf32>
    %291 = arith.mulf %289, %290 : vector<4x128xf32>
    %292 = arith.addf %288, %291 : vector<4x128xf32>
    %293 = vector.extract_strided_slice %233 {offsets = [0, 1920], sizes = [4, 128], strides = [1, 1]} : vector<4x2432xf32> to vector<4x128xf32>
    %c0_85 = arith.constant 0 : index
    %c9216 = arith.constant 9216 : index
    %294 = vector.load %arg2[%c0_85, %c9216] : memref<4x9728xf32, #tpu.memory_space<vmem>>, vector<4x128xf32>
    %295 = arith.mulf %293, %294 : vector<4x128xf32>
    %296 = arith.addf %292, %295 : vector<4x128xf32>
    %297 = vector.extract_strided_slice %233 {offsets = [0, 2048], sizes = [4, 128], strides = [1, 1]} : vector<4x2432xf32> to vector<4x128xf32>
    %c0_86 = arith.constant 0 : index
    %c9344 = arith.constant 9344 : index
    %298 = vector.load %arg2[%c0_86, %c9344] : memref<4x9728xf32, #tpu.memory_space<vmem>>, vector<4x128xf32>
    %299 = arith.mulf %297, %298 : vector<4x128xf32>
    %300 = arith.addf %296, %299 : vector<4x128xf32>
    %301 = vector.extract_strided_slice %233 {offsets = [0, 2176], sizes = [4, 128], strides = [1, 1]} : vector<4x2432xf32> to vector<4x128xf32>
    %c0_87 = arith.constant 0 : index
    %c9472 = arith.constant 9472 : index
    %302 = vector.load %arg2[%c0_87, %c9472] : memref<4x9728xf32, #tpu.memory_space<vmem>>, vector<4x128xf32>
    %303 = arith.mulf %301, %302 : vector<4x128xf32>
    %304 = arith.addf %300, %303 : vector<4x128xf32>
    %305 = vector.extract_strided_slice %233 {offsets = [0, 2304], sizes = [4, 128], strides = [1, 1]} : vector<4x2432xf32> to vector<4x128xf32>
    %c0_88 = arith.constant 0 : index
    %c9600 = arith.constant 9600 : index
    %306 = vector.load %arg2[%c0_88, %c9600] : memref<4x9728xf32, #tpu.memory_space<vmem>>, vector<4x128xf32>
    %307 = arith.mulf %305, %306 : vector<4x128xf32>
    %308 = arith.addf %304, %307 : vector<4x128xf32>
    %309 = arith.addf %77, %154 : vector<4x128xf32>
    %310 = arith.addf %309, %231 : vector<4x128xf32>
    %311 = arith.addf %310, %308 : vector<4x128xf32>
    %312 = vector.extract_strided_slice %311 {offsets = [0, 0], sizes = [4, 51], strides = [1, 1]} : vector<4x128xf32> to vector<4x51xf32>
    %313 = vector.extract_strided_slice %311 {offsets = [0, 64], sizes = [4, 51], strides = [1, 1]} : vector<4x128xf32> to vector<4x51xf32>
    %314 = arith.addf %312, %313 : vector<4x51xf32>
    %c0_89 = arith.constant 0 : index
    %c0_90 = arith.constant 0 : index
    %315 = vector.load %arg3[%c0_89, %c0_90] : memref<4x51xf32, #tpu.memory_space<vmem>>, vector<4x51xf32>
    tpu.vector_store %arg3[%c0_89, %c0_90], %314 {strides = array<i32>} : memref<4x51xf32, #tpu.memory_space<vmem>>, vector<4x51xf32>,
    return
  }
}

</mosaic_0001>

<llo_original>
// kernel: frequency_bias_forward.1
$region0: #{frequency_bias_forward.1}
  #allocation0 [shape = 'u32[]', space=smem, size = 0x4, offset = 0x4, fixed_abs, tag = 'smem constant byte address 0x4 - core index']
  #allocation1 [shape = 'u32[144,128]{1,0:T(1,128)}', space=vmem, size = 0x12000, scoped, tag = 'internal scratch']
  %s0 = inlined_call_operand.vmem [shape: bf16[4,152], index: 0, kind: input, shape index: {}]
  %s1 = inlined_call_operand.hbm [shape: bf16[152,9728], index: 1, kind: input, shape index: {}]
  %s2 = inlined_call_operand.vmem [shape: f32[4,9728], index: 2, kind: input, shape index: {}]
  %s3 = inlined_call_operand.hbm [shape: f32[4,51], index: 3, kind: output, shape index: {}]
  %s4 = sld [smem:[#allocation0]]
  $region26: #{frequency_bias_forward.1} parent=0
    _
  %s6 = ssub.s32 1, %s4
  %s7 = scalar_select 0, %s6, %s4
  $region1: #{frequency_bias_forward.1} parent=0
    #allocation2 [shape = 'u8[2957312]{0}', space=vmem, size = 0x2d2000, scoped, tag = 'input window, operand 1, single buffered']
    #allocation3 [shape = 's32[1]{0}', space=sflag, size = 0x4, scoped, tag = 'scoped memory for frequency_bias_forward.1']
    #allocation4 [shape = 's32[1]{0}', space=sflag, size = 0x4, scoped, tag = 'scoped memory for frequency_bias_forward.1']
    #allocation5 [shape = 'u8[2048]{0}', space=vmem, size = 0x800, scoped, tag = 'output window, operand 0, single buffered']
    %8 = vsyncpa [#allocation3], 0
    %9 = vsyncpa [#allocation4], 0
    // Predicated region
    $region2: #{frequency_bias_forward.1} parent=1 // pred_check
      _
    $region3: #{frequency_bias_forward.1} parent=1 // pred_check_branch
      %11 = sbr.rel (0) target = $region5
    $region4: #{frequency_bias_forward.1} parent=1 // pred_region
      _
    $region5: #{frequency_bias_forward.1} parent=1 // pred_fallthru
      _
    // Predicated region
    $region6: #{frequency_bias_forward.1} parent=1 // pred_check
      _
    $region7: #{frequency_bias_forward.1} parent=1 // pred_check_branch
      %13 = sbr.rel (0) target = $region9
    $region8: #{frequency_bias_forward.1} parent=1 // pred_region
      %s15 = ssub.s32 92416, 92416
      %16 = vsyncadd [#allocation3], %s15
      %s17 = sshll.u32 [#allocation2], 4
      %s18 = int_to_ptr.vmem [resolvable:$true] %s17
      %23 = dma.hbm_to_vmem [thread:$0]  %s1, 92416, %s18, [#allocation3], 4864, 4864, 304
    $region9: #{frequency_bias_forward.1} parent=1 // pred_fallthru
      _
    // Predicated region
    $region10: #{frequency_bias_forward.1} parent=1 // pred_check
      _
    $region11: #{frequency_bias_forward.1} parent=1 // pred_check_branch
      %25 = sbr.rel (0) target = $region13
    $region12: #{frequency_bias_forward.1} parent=1 // pred_region
      _
    $region13: #{frequency_bias_forward.1} parent=1 // pred_fallthru
      _
    // Predicated region
    $region14: #{frequency_bias_forward.1} parent=1 // pred_check
      _
    $region15: #{frequency_bias_forward.1} parent=1 // pred_check_branch
      %27 = sbr.rel (0) target = $region17
    $region16: #{frequency_bias_forward.1} parent=1 // pred_region
      %28 = dma.done [#allocation3], 92416
    $region17: #{frequency_bias_forward.1} parent=1 // pred_fallthru
      _
    %v30 = vld [vmem:[%s0] sm:$0xf]
    %v31 = vld [vmem:[#allocation2] sm:$0xff]
    %v32 = vld [vmem:[#allocation2 + $0x8] sm:$0xff]
    %v33 = vld [vmem:[#allocation2 + $0x10] sm:$0xff]
    %v34 = vld [vmem:[#allocation2 + $0x18] sm:$0xff]
    %v35 = vld [vmem:[#allocation2 + $0x20] sm:$0xff]
    %v36 = vld [vmem:[#allocation2 + $0x28] sm:$0xff]
    %v37 = vld [vmem:[#allocation2 + $0x30] sm:$0xff]
    %v38 = vld [vmem:[#allocation2 + $0x38] sm:$0xff]
    %v39 = vld [vmem:[#allocation2 + $0x40] sm:$0xff]
    %v40 = vld [vmem:[#allocation2 + $0x48] sm:$0xf]
    %v41 = vld [vmem:[#allocation2 + $0x130] sm:$0xff]
    %v42 = vld [vmem:[#allocation2 + $0x138] sm:$0xff]
    %v43 = vld [vmem:[#allocation2 + $0x140] sm:$0xff]
    %v44 = vld [vmem:[#allocation2 + $0x148] sm:$0xff]
    %v45 = vld [vmem:[#allocation2 + $0x150] sm:$0xff]
    %v46 = vld [vmem:[#allocation2 + $0x158] sm:$0xff]
    %v47 = vld [vmem:[#allocation2 + $0x160] sm:$0xff]
    %v48 = vld [vmem:[#allocation2 + $0x168] sm:$0xff]
    %v49 = vld [vmem:[#allocation2 + $0x170] sm:$0xff]
    %v50 = vld [vmem:[#allocation2 + $0x178] sm:$0xf]
    %v51 = vld [vmem:[#allocation2 + $0x260] sm:$0xff]
    %v52 = vld [vmem:[#allocation2 + $0x268] sm:$0xff]
    %v53 = vld [vmem:[#allocation2 + $0x270] sm:$0xff]
    %v54 = vld [vmem:[#allocation2 + $0x278] sm:$0xff]
    %v55 = vld [vmem:[#allocation2 + $0x280] sm:$0xff]
    %v56 = vld [vmem:[#allocation2 + $0x288] sm:$0xff]
    %v57 = vld [vmem:[#allocation2 + $0x290] sm:$0xff]
    %v58 = vld [vmem:[#allocation2 + $0x298] sm:$0xff]
    %v59 = vld [vmem:[#allocation2 + $0x2a0] sm:$0xff]
    %v60 = vld [vmem:[#allocation2 + $0x2a8] sm:$0xf]
    %v61 = vld [vmem:[#allocation2 + $0x390] sm:$0xff]
    %v62 = vld [vmem:[#allocation2 + $0x398] sm:$0xff]
    %v63 = vld [vmem:[#allocation2 + $0x3a0] sm:$0xff]
    %v64 = vld [vmem:[#allocation2 + $0x3a8] sm:$0xff]
    %v65 = vld [vmem:[#allocation2 + $0x3b0] sm:$0xff]
    %v66 = vld [vmem:[#allocation2 + $0x3b8] sm:$0xff]
    %v67 = vld [vmem:[#allocation2 + $0x3c0] sm:$0xff]
    %v68 = vld [vmem:[#allocation2 + $0x3c8] sm:$0xff]
    %v69 = vld [vmem:[#allocation2 + $0x3d0] sm:$0xff]
    %v70 = vld [vmem:[#allocation2 + $0x3d8] sm:$0xf]
    %v71 = vld [vmem:[#allocation2 + $0x4c0] sm:$0xff]
    %v72 = vld [vmem:[#allocation2 + $0x4c8] sm:$0xff]
    %v73 = vld [vmem:[#allocation2 + $0x4d0] sm:$0xff]
    %v74 = vld [vmem:[#allocation2 + $0x4d8] sm:$0xff]
    %v75 = vld [vmem:[#allocation2 + $0x4e0] sm:$0xff]
    %v76 = vld [vmem:[#allocation2 + $0x4e8] sm:$0xff]
    %v77 = vld [vmem:[#allocation2 + $0x4f0] sm:$0xff]
    %v78 = vld [vmem:[#allocation2 + $0x4f8] sm:$0xff]
    %v79 = vld [vmem:[#allocation2 + $0x500] sm:$0xff]
    %v80 = vld [vmem:[#allocation2 + $0x508] sm:$0xf]
    %v81 = vld [vmem:[#allocation2 + $0x5f0] sm:$0xff]
    %v82 = vld [vmem:[#allocation2 + $0x5f8] sm:$0xff]
    %v83 = vld [vmem:[#allocation2 + $0x600] sm:$0xff]
    %v84 = vld [vmem:[#allocation2 + $0x608] sm:$0xff]
    %v85 = vld [vmem:[#allocation2 + $0x610] sm:$0xff]
    %v86 = vld [vmem:[#allocation2 + $0x618] sm:$0xff]
    %v87 = vld [vmem:[#allocation2 + $0x620] sm:$0xff]
    %v88 = vld [vmem:[#allocation2 + $0x628] sm:$0xff]
    %v89 = vld [vmem:[#allocation2 + $0x630] sm:$0xff]
    %v90 = vld [vmem:[#allocation2 + $0x638] sm:$0xf]
    %v91 = vld [vmem:[#allocation2 + $0x720] sm:$0xff]
    %v92 = vld [vmem:[#allocation2 + $0x728] sm:$0xff]
    %v93 = vld [vmem:[#allocation2 + $0x730] sm:$0xff]
    %v94 = vld [vmem:[#allocation2 + $0x738] sm:$0xff]
    %v95 = vld [vmem:[#allocation2 + $0x740] sm:$0xff]
    %v96 = vld [vmem:[#allocation2 + $0x748] sm:$0xff]
    %v97 = vld [vmem:[#allocation2 + $0x750] sm:$0xff]
    %v98 = vld [vmem:[#allocation2 + $0x758] sm:$0xff]
    %v99 = vld [vmem:[#allocation2 + $0x760] sm:$0xff]
    %v100 = vld [vmem:[#allocation2 + $0x768] sm:$0xf]
    %v101 = vld [vmem:[#allocation2 + $0x850] sm:$0xff]
    %v102 = vld [vmem:[#allocation2 + $0x858] sm:$0xff]
    %v103 = vld [vmem:[#allocation2 + $0x860] sm:$0xff]
    %v104 = vld [vmem:[#allocation2 + $0x868] sm:$0xff]
    %v105 = vld [vmem:[#allocation2 + $0x870] sm:$0xff]
    %v106 = vld [vmem:[#allocation2 + $0x878] sm:$0xff]
    %v107 = vld [vmem:[#allocation2 + $0x880] sm:$0xff]
    %v108 = vld [vmem:[#allocation2 + $0x888] sm:$0xff]
    %v109 = vld [vmem:[#allocation2 + $0x890] sm:$0xff]
    %v110 = vld [vmem:[#allocation2 + $0x898] sm:$0xf]
    %v111 = vld [vmem:[#allocation2 + $0x980] sm:$0xff]
    %v112 = vld [vmem:[#allocation2 + $0x988] sm:$0xff]
    %v113 = vld [vmem:[#allocation2 + $0x990] sm:$0xff]
    %v114 = vld [vmem:[#allocation2 + $0x998] sm:$0xff]
    %v115 = vld [vmem:[#allocation2 + $0x9a0] sm:$0xff]
    %v116 = vld [vmem:[#allocation2 + $0x9a8] sm:$0xff]
    %v117 = vld [vmem:[#allocation2 + $0x9b0] sm:$0xff]
    %v118 = vld [vmem:[#allocation2 + $0x9b8] sm:$0xff]
    %v119 = vld [vmem:[#allocation2 + $0x9c0] sm:$0xff]
    %v120 = vld [vmem:[#allocation2 + $0x9c8] sm:$0xf]
    %v121 = vld [vmem:[#allocation2 + $0xab0] sm:$0xff]
    %v122 = vld [vmem:[#allocation2 + $0xab8] sm:$0xff]
    %v123 = vld [vmem:[#allocation2 + $0xac0] sm:$0xff]
    %v124 = vld [vmem:[#allocation2 + $0xac8] sm:$0xff]
    %v125 = vld [vmem:[#allocation2 + $0xad0] sm:$0xff]
    %v126 = vld [vmem:[#allocation2 + $0xad8] sm:$0xff]
    %v127 = vld [vmem:[#allocation2 + $0xae0] sm:$0xff]
    %v128 = vld [vmem:[#allocation2 + $0xae8] sm:$0xff]
    %v129 = vld [vmem:[#allocation2 + $0xaf0] sm:$0xff]
    %v130 = vld [vmem:[#allocation2 + $0xaf8] sm:$0xf]
    %v131 = vld [vmem:[#allocation2 + $0xbe0] sm:$0xff]
    %v132 = vld [vmem:[#allocation2 + $0xbe8] sm:$0xff]
    %v133 = vld [vmem:[#allocation2 + $0xbf0] sm:$0xff]
    %v134 = vld [vmem:[#allocation2 + $0xbf8] sm:$0xff]
    %v135 = vld [vmem:[#allocation2 + $0xc00] sm:$0xff]
    %v136 = vld [vmem:[#allocation2 + $0xc08] sm:$0xff]
    %v137 = vld [vmem:[#allocation2 + $0xc10] sm:$0xff]
    %v138 = vld [vmem:[#allocation2 + $0xc18] sm:$0xff]
    %v139 = vld [vmem:[#allocation2 + $0xc20] sm:$0xff]
    %v140 = vld [vmem:[#allocation2 + $0xc28] sm:$0xf]
    %v141 = vld [vmem:[#allocation2 + $0xd10] sm:$0xff]
    %v142 = vld [vmem:[#allocation2 + $0xd18] sm:$0xff]
    %v143 = vld [vmem:[#allocation2 + $0xd20] sm:$0xff]
    %v144 = vld [vmem:[#allocation2 + $0xd28] sm:$0xff]
    %v145 = vld [vmem:[#allocation2 + $0xd30] sm:$0xff]
    %v146 = vld [vmem:[#allocation2 + $0xd38] sm:$0xff]
    %v147 = vld [vmem:[#allocation2 + $0xd40] sm:$0xff]
    %v148 = vld [vmem:[#allocation2 + $0xd48] sm:$0xff]
    %v149 = vld [vmem:[#allocation2 + $0xd50] sm:$0xff]
    %v150 = vld [vmem:[#allocation2 + $0xd58] sm:$0xf]
    %v151 = vld [vmem:[#allocation2 + $0xe40] sm:$0xff]
    %v152 = vld [vmem:[#allocation2 + $0xe48] sm:$0xff]
    %v153 = vld [vmem:[#allocation2 + $0xe50] sm:$0xff]
    %v154 = vld [vmem:[#allocation2 + $0xe58] sm:$0xff]
    %v155 = vld [vmem:[#allocation2 + $0xe60] sm:$0xff]
    %v156 = vld [vmem:[#allocation2 + $0xe68] sm:$0xff]
    %v157 = vld [vmem:[#allocation2 + $0xe70] sm:$0xff]
    %v158 = vld [vmem:[#allocation2 + $0xe78] sm:$0xff]
    %v159 = vld [vmem:[#allocation2 + $0xe80] sm:$0xff]
    %v160 = vld [vmem:[#allocation2 + $0xe88] sm:$0xf]
    %v161 = vld [vmem:[#allocation2 + $0xf70] sm:$0xff]
    %v162 = vld [vmem:[#allocation2 + $0xf78] sm:$0xff]
    %v163 = vld [vmem:[#allocation2 + $0xf80] sm:$0xff]
    %v164 = vld [vmem:[#allocation2 + $0xf88] sm:$0xff]
    %v165 = vld [vmem:[#allocation2 + $0xf90] sm:$0xff]
    %v166 = vld [vmem:[#allocation2 + $0xf98] sm:$0xff]
    %v167 = vld [vmem:[#allocation2 + $0xfa0] sm:$0xff]
    %v168 = vld [vmem:[#allocation2 + $0xfa8] sm:$0xff]
    %v169 = vld [vmem:[#allocation2 + $0xfb0] sm:$0xff]
    %v170 = vld [vmem:[#allocation2 + $0xfb8] sm:$0xf]
    %v171 = vld [vmem:[#allocation2 + $0x10a0] sm:$0xff]
    %v172 = vld [vmem:[#allocation2 + $0x10a8] sm:$0xff]
    %v173 = vld [vmem:[#allocation2 + $0x10b0] sm:$0xff]
    %v174 = vld [vmem:[#allocation2 + $0x10b8] sm:$0xff]
    %v175 = vld [vmem:[#allocation2 + $0x10c0] sm:$0xff]
    %v176 = vld [vmem:[#allocation2 + $0x10c8] sm:$0xff]
    %v177 = vld [vmem:[#allocation2 + $0x10d0] sm:$0xff]
    %v178 = vld [vmem:[#allocation2 + $0x10d8] sm:$0xff]
    %v179 = vld [vmem:[#allocation2 + $0x10e0] sm:$0xff]
    %v180 = vld [vmem:[#allocation2 + $0x10e8] sm:$0xf]
    %v181 = vld [vmem:[#allocation2 + $0x11d0] sm:$0xff]
    %v182 = vld [vmem:[#allocation2 + $0x11d8] sm:$0xff]
    %v183 = vld [vmem:[#allocation2 + $0x11e0] sm:$0xff]
    %v184 = vld [vmem:[#allocation2 + $0x11e8] sm:$0xff]
    %v185 = vld [vmem:[#allocation2 + $0x11f0] sm:$0xff]
    %v186 = vld [vmem:[#allocation2 + $0x11f8] sm:$0xff]
    %v187 = vld [vmem:[#allocation2 + $0x1200] sm:$0xff]
    %v188 = vld [vmem:[#allocation2 + $0x1208] sm:$0xff]
    %v189 = vld [vmem:[#allocation2 + $0x1210] sm:$0xff]
    %v190 = vld [vmem:[#allocation2 + $0x1218] sm:$0xf]
    %v191 = vld [vmem:[#allocation2 + $0x1300] sm:$0xff]
    %v192 = vld [vmem:[#allocation2 + $0x1308] sm:$0xff]
    %v193 = vld [vmem:[#allocation2 + $0x1310] sm:$0xff]
    %v194 = vld [vmem:[#allocation2 + $0x1318] sm:$0xff]
    %v195 = vld [vmem:[#allocation2 + $0x1320] sm:$0xff]
    %v196 = vld [vmem:[#allocation2 + $0x1328] sm:$0xff]
    %v197 = vld [vmem:[#allocation2 + $0x1330] sm:$0xff]
    %v198 = vld [vmem:[#allocation2 + $0x1338] sm:$0xff]
    %v199 = vld [vmem:[#allocation2 + $0x1340] sm:$0xff]
    %v200 = vld [vmem:[#allocation2 + $0x1348] sm:$0xf]
    %v201 = vld [vmem:[#allocation2 + $0x1430] sm:$0xff]
    %v202 = vld [vmem:[#allocation2 + $0x1438] sm:$0xff]
    %v203 = vld [vmem:[#allocation2 + $0x1440] sm:$0xff]
    %v204 = vld [vmem:[#allocation2 + $0x1448] sm:$0xff]
    %v205 = vld [vmem:[#allocation2 + $0x1450] sm:$0xff]
    %v206 = vld [vmem:[#allocation2 + $0x1458] sm:$0xff]
    %v207 = vld [vmem:[#allocation2 + $0x1460] sm:$0xff]
    %v208 = vld [vmem:[#allocation2 + $0x1468] sm:$0xff]
    %v209 = vld [vmem:[#allocation2 + $0x1470] sm:$0xff]
    %v210 = vld [vmem:[#allocation2 + $0x1478] sm:$0xf]
    %v211 = vld [vmem:[#allocation2 + $0x1560] sm:$0xff]
    %v212 = vld [vmem:[#allocation2 + $0x1568] sm:$0xff]
    %v213 = vld [vmem:[#allocation2 + $0x1570] sm:$0xff]
    %v214 = vld [vmem:[#allocation2 + $0x1578] sm:$0xff]
    %v215 = vld [vmem:[#allocation2 + $0x1580] sm:$0xff]
    %v216 = vld [vmem:[#allocation2 + $0x1588] sm:$0xff]
    %v217 = vld [vmem:[#allocation2 + $0x1590] sm:$0xff]
    %v218 = vld [vmem:[#allocation2 + $0x1598] sm:$0xff]
    %v219 = vld [vmem:[#allocation2 + $0x15a0] sm:$0xff]
    %v220 = vld [vmem:[#allocation2 + $0x15a8] sm:$0xf]
    %v223 = vunpack.c.l.s4 1983009808
    %v224 = vunpack.c.0.s8 %v223
    %v225 = vlaneseq
    %v226 = vshrl.u32 %v225, 7
    %v227 = vsub.s32 %v224, %v226
    %v228 = vrot.slane %v30, %v227
    %v229 = vcombine.high %v228, %v228
    %v421 = vunpack.c.l.b16 %v31
    %v422 = vunpack.c.h.b16 %v31
    %v423 = vunpack.c.l.b16 %v32
    %v424 = vunpack.c.h.b16 %v32
    %v425 = vunpack.c.l.b16 %v33
    %v426 = vunpack.c.h.b16 %v33
    %v427 = vunpack.c.l.b16 %v34
    %v428 = vunpack.c.h.b16 %v34
    %v429 = vunpack.c.l.b16 %v35
    %v430 = vunpack.c.h.b16 %v35
    %v431 = vunpack.c.l.b16 %v36
    %v432 = vunpack.c.h.b16 %v36
    %v433 = vunpack.c.l.b16 %v37
    %v434 = vunpack.c.h.b16 %v37
    %v435 = vunpack.c.l.b16 %v38
    %v436 = vunpack.c.h.b16 %v38
    %v437 = vunpack.c.l.b16 %v39
    %v438 = vunpack.c.h.b16 %v39
    %v439 = vunpack.c.l.b16 %v40
    %v440 = vunpack.c.l.b16 %v41
    %v441 = vunpack.c.h.b16 %v41
    %v442 = vunpack.c.l.b16 %v42
    %v443 = vunpack.c.h.b16 %v42
    %v444 = vunpack.c.l.b16 %v43
    %v445 = vunpack.c.h.b16 %v43
    %v446 = vunpack.c.l.b16 %v44
    %v447 = vunpack.c.h.b16 %v44
    %v448 = vunpack.c.l.b16 %v45
    %v449 = vunpack.c.h.b16 %v45
    %v450 = vunpack.c.l.b16 %v46
    %v451 = vunpack.c.h.b16 %v46
    %v452 = vunpack.c.l.b16 %v47
    %v453 = vunpack.c.h.b16 %v47
    %v454 = vunpack.c.l.b16 %v48
    %v455 = vunpack.c.h.b16 %v48
    %v456 = vunpack.c.l.b16 %v49
    %v457 = vunpack.c.h.b16 %v49
    %v458 = vunpack.c.l.b16 %v50
    %v459 = vunpack.c.l.b16 %v51
    %v460 = vunpack.c.h.b16 %v51
    %v461 = vunpack.c.l.b16 %v52
    %v462 = vunpack.c.h.b16 %v52
    %v463 = vunpack.c.l.b16 %v53
    %v464 = vunpack.c.h.b16 %v53
    %v465 = vunpack.c.l.b16 %v54
    %v466 = vunpack.c.h.b16 %v54
    %v467 = vunpack.c.l.b16 %v55
    %v468 = vunpack.c.h.b16 %v55
    %v469 = vunpack.c.l.b16 %v56
    %v470 = vunpack.c.h.b16 %v56
    %v471 = vunpack.c.l.b16 %v57
    %v472 = vunpack.c.h.b16 %v57
    %v473 = vunpack.c.l.b16 %v58
    %v474 = vunpack.c.h.b16 %v58
    %v475 = vunpack.c.l.b16 %v59
    %v476 = vunpack.c.h.b16 %v59
    %v477 = vunpack.c.l.b16 %v60
    %v478 = vunpack.c.l.b16 %v61
    %v479 = vunpack.c.h.b16 %v61
    %v480 = vunpack.c.l.b16 %v62
    %v481 = vunpack.c.h.b16 %v62
    %v482 = vunpack.c.l.b16 %v63
    %v483 = vunpack.c.h.b16 %v63
    %v484 = vunpack.c.l.b16 %v64
    %v485 = vunpack.c.h.b16 %v64
    %v486 = vunpack.c.l.b16 %v65
    %v487 = vunpack.c.h.b16 %v65
    %v488 = vunpack.c.l.b16 %v66
    %v489 = vunpack.c.h.b16 %v66
    %v490 = vunpack.c.l.b16 %v67
    %v491 = vunpack.c.h.b16 %v67
    %v492 = vunpack.c.l.b16 %v68
    %v493 = vunpack.c.h.b16 %v68
    %v494 = vunpack.c.l.b16 %v69
    %v495 = vunpack.c.h.b16 %v69
    %v496 = vunpack.c.l.b16 %v70
    %v497 = vunpack.c.l.b16 %v71
    %v498 = vunpack.c.h.b16 %v71
    %v499 = vunpack.c.l.b16 %v72
    %v500 = vunpack.c.h.b16 %v72
    %v501 = vunpack.c.l.b16 %v73
    %v502 = vunpack.c.h.b16 %v73
    %v503 = vunpack.c.l.b16 %v74
    %v504 = vunpack.c.h.b16 %v74
    %v505 = vunpack.c.l.b16 %v75
    %v506 = vunpack.c.h.b16 %v75
    %v507 = vunpack.c.l.b16 %v76
    %v508 = vunpack.c.h.b16 %v76
    %v509 = vunpack.c.l.b16 %v77
    %v510 = vunpack.c.h.b16 %v77
    %v511 = vunpack.c.l.b16 %v78
    %v512 = vunpack.c.h.b16 %v78
    %v513 = vunpack.c.l.b16 %v79
    %v514 = vunpack.c.h.b16 %v79
    %v515 = vunpack.c.l.b16 %v80
    %v516 = vunpack.c.l.b16 %v81
    %v517 = vunpack.c.h.b16 %v81
    %v518 = vunpack.c.l.b16 %v82
    %v519 = vunpack.c.h.b16 %v82
    %v520 = vunpack.c.l.b16 %v83
    %v521 = vunpack.c.h.b16 %v83
    %v522 = vunpack.c.l.b16 %v84
    %v523 = vunpack.c.h.b16 %v84
    %v524 = vunpack.c.l.b16 %v85
    %v525 = vunpack.c.h.b16 %v85
    %v526 = vunpack.c.l.b16 %v86
    %v527 = vunpack.c.h.b16 %v86
    %v528 = vunpack.c.l.b16 %v87
    %v529 = vunpack.c.h.b16 %v87
    %v530 = vunpack.c.l.b16 %v88
    %v531 = vunpack.c.h.b16 %v88
    %v532 = vunpack.c.l.b16 %v89
    %v533 = vunpack.c.h.b16 %v89
    %v534 = vunpack.c.l.b16 %v90
    %v535 = vunpack.c.l.b16 %v91
    %v536 = vunpack.c.h.b16 %v91
    %v537 = vunpack.c.l.b16 %v92
    %v538 = vunpack.c.h.b16 %v92
    %v539 = vunpack.c.l.b16 %v93
    %v540 = vunpack.c.h.b16 %v93
    %v541 = vunpack.c.l.b16 %v94
    %v542 = vunpack.c.h.b16 %v94
    %v543 = vunpack.c.l.b16 %v95
    %v544 = vunpack.c.h.b16 %v95
    %v545 = vunpack.c.l.b16 %v96
    %v546 = vunpack.c.h.b16 %v96
    %v547 = vunpack.c.l.b16 %v97
    %v548 = vunpack.c.h.b16 %v97
    %v549 = vunpack.c.l.b16 %v98
    %v550 = vunpack.c.h.b16 %v98
    %v551 = vunpack.c.l.b16 %v99
    %v552 = vunpack.c.h.b16 %v99
    %v553 = vunpack.c.l.b16 %v100
    %v554 = vunpack.c.l.b16 %v101
    %v555 = vunpack.c.h.b16 %v101
    %v556 = vunpack.c.l.b16 %v102
    %v557 = vunpack.c.h.b16 %v102
    %v558 = vunpack.c.l.b16 %v103
    %v559 = vunpack.c.h.b16 %v103
    %v560 = vunpack.c.l.b16 %v104
    %v561 = vunpack.c.h.b16 %v104
    %v562 = vunpack.c.l.b16 %v105
    %v563 = vunpack.c.h.b16 %v105
    %v564 = vunpack.c.l.b16 %v106
    %v565 = vunpack.c.h.b16 %v106
    %v566 = vunpack.c.l.b16 %v107
    %v567 = vunpack.c.h.b16 %v107
    %v568 = vunpack.c.l.b16 %v108
    %v569 = vunpack.c.h.b16 %v108
    %v570 = vunpack.c.l.b16 %v109
    %v571 = vunpack.c.h.b16 %v109
    %v572 = vunpack.c.l.b16 %v110
    %v573 = vunpack.c.l.b16 %v111
    %v574 = vunpack.c.h.b16 %v111
    %v575 = vunpack.c.l.b16 %v112
    %v576 = vunpack.c.h.b16 %v112
    %v577 = vunpack.c.l.b16 %v113
    %v578 = vunpack.c.h.b16 %v113
    %v579 = vunpack.c.l.b16 %v114
    %v580 = vunpack.c.h.b16 %v114
    %v581 = vunpack.c.l.b16 %v115
    %v582 = vunpack.c.h.b16 %v115
    %v583 = vunpack.c.l.b16 %v116
    %v584 = vunpack.c.h.b16 %v116
    %v585 = vunpack.c.l.b16 %v117
    %v586 = vunpack.c.h.b16 %v117
    %v587 = vunpack.c.l.b16 %v118
    %v588 = vunpack.c.h.b16 %v118
    %v589 = vunpack.c.l.b16 %v119
    %v590 = vunpack.c.h.b16 %v119
    %v591 = vunpack.c.l.b16 %v120
    %v592 = vunpack.c.l.b16 %v121
    %v593 = vunpack.c.h.b16 %v121
    %v594 = vunpack.c.l.b16 %v122
    %v595 = vunpack.c.h.b16 %v122
    %v596 = vunpack.c.l.b16 %v123
    %v597 = vunpack.c.h.b16 %v123
    %v598 = vunpack.c.l.b16 %v124
    %v599 = vunpack.c.h.b16 %v124
    %v600 = vunpack.c.l.b16 %v125
    %v601 = vunpack.c.h.b16 %v125
    %v602 = vunpack.c.l.b16 %v126
    %v603 = vunpack.c.h.b16 %v126
    %v604 = vunpack.c.l.b16 %v127
    %v605 = vunpack.c.h.b16 %v127
    %v606 = vunpack.c.l.b16 %v128
    %v607 = vunpack.c.h.b16 %v128
    %v608 = vunpack.c.l.b16 %v129
    %v609 = vunpack.c.h.b16 %v129
    %v610 = vunpack.c.l.b16 %v130
    %v611 = vunpack.c.l.b16 %v131
    %v612 = vunpack.c.h.b16 %v131
    %v613 = vunpack.c.l.b16 %v132
    %v614 = vunpack.c.h.b16 %v132
    %v615 = vunpack.c.l.b16 %v133
    %v616 = vunpack.c.h.b16 %v133
    %v617 = vunpack.c.l.b16 %v134
    %v618 = vunpack.c.h.b16 %v134
    %v619 = vunpack.c.l.b16 %v135
    %v620 = vunpack.c.h.b16 %v135
    %v621 = vunpack.c.l.b16 %v136
    %v622 = vunpack.c.h.b16 %v136
    %v623 = vunpack.c.l.b16 %v137
    %v624 = vunpack.c.h.b16 %v137
    %v625 = vunpack.c.l.b16 %v138
    %v626 = vunpack.c.h.b16 %v138
    %v627 = vunpack.c.l.b16 %v139
    %v628 = vunpack.c.h.b16 %v139
    %v629 = vunpack.c.l.b16 %v140
    %v630 = vunpack.c.l.b16 %v141
    %v631 = vunpack.c.h.b16 %v141
    %v632 = vunpack.c.l.b16 %v142
    %v633 = vunpack.c.h.b16 %v142
    %v634 = vunpack.c.l.b16 %v143
    %v635 = vunpack.c.h.b16 %v143
    %v636 = vunpack.c.l.b16 %v144
    %v637 = vunpack.c.h.b16 %v144
    %v638 = vunpack.c.l.b16 %v145
    %v639 = vunpack.c.h.b16 %v145
    %v640 = vunpack.c.l.b16 %v146
    %v641 = vunpack.c.h.b16 %v146
    %v642 = vunpack.c.l.b16 %v147
    %v643 = vunpack.c.h.b16 %v147
    %v644 = vunpack.c.l.b16 %v148
    %v645 = vunpack.c.h.b16 %v148
    %v646 = vunpack.c.l.b16 %v149
    %v647 = vunpack.c.h.b16 %v149
    %v648 = vunpack.c.l.b16 %v150
    %v649 = vunpack.c.l.b16 %v151
    %v650 = vunpack.c.h.b16 %v151
    %v651 = vunpack.c.l.b16 %v152
    %v652 = vunpack.c.h.b16 %v152
    %v653 = vunpack.c.l.b16 %v153
    %v654 = vunpack.c.h.b16 %v153
    %v655 = vunpack.c.l.b16 %v154
    %v656 = vunpack.c.h.b16 %v154
    %v657 = vunpack.c.l.b16 %v155
    %v658 = vunpack.c.h.b16 %v155
    %v659 = vunpack.c.l.b16 %v156
    %v660 = vunpack.c.h.b16 %v156
    %v661 = vunpack.c.l.b16 %v157
    %v662 = vunpack.c.h.b16 %v157
    %v663 = vunpack.c.l.b16 %v158
    %v664 = vunpack.c.h.b16 %v158
    %v665 = vunpack.c.l.b16 %v159
    %v666 = vunpack.c.h.b16 %v159
    %v667 = vunpack.c.l.b16 %v160
    %v668 = vunpack.c.l.b16 %v161
    %v669 = vunpack.c.h.b16 %v161
    %v670 = vunpack.c.l.b16 %v162
    %v671 = vunpack.c.h.b16 %v162
    %v672 = vunpack.c.l.b16 %v163
    %v673 = vunpack.c.h.b16 %v163
    %v674 = vunpack.c.l.b16 %v164
    %v675 = vunpack.c.h.b16 %v164
    %v676 = vunpack.c.l.b16 %v165
    %v677 = vunpack.c.h.b16 %v165
    %v678 = vunpack.c.l.b16 %v166
    %v679 = vunpack.c.h.b16 %v166
    %v680 = vunpack.c.l.b16 %v167
    %v681 = vunpack.c.h.b16 %v167
    %v682 = vunpack.c.l.b16 %v168
    %v683 = vunpack.c.h.b16 %v168
    %v684 = vunpack.c.l.b16 %v169
    %v685 = vunpack.c.h.b16 %v169
    %v686 = vunpack.c.l.b16 %v170
    %v687 = vunpack.c.l.b16 %v171
    %v688 = vunpack.c.h.b16 %v171
    %v689 = vunpack.c.l.b16 %v172
    %v690 = vunpack.c.h.b16 %v172
    %v691 = vunpack.c.l.b16 %v173
    %v692 = vunpack.c.h.b16 %v173
    %v693 = vunpack.c.l.b16 %v174
    %v694 = vunpack.c.h.b16 %v174
    %v695 = vunpack.c.l.b16 %v175
    %v696 = vunpack.c.h.b16 %v175
    %v697 = vunpack.c.l.b16 %v176
    %v698 = vunpack.c.h.b16 %v176
    %v699 = vunpack.c.l.b16 %v177
    %v700 = vunpack.c.h.b16 %v177
    %v701 = vunpack.c.l.b16 %v178
    %v702 = vunpack.c.h.b16 %v178
    %v703 = vunpack.c.l.b16 %v179
    %v704 = vunpack.c.h.b16 %v179
    %v705 = vunpack.c.l.b16 %v180
    %v706 = vunpack.c.l.b16 %v181
    %v707 = vunpack.c.h.b16 %v181
    %v708 = vunpack.c.l.b16 %v182
    %v709 = vunpack.c.h.b16 %v182
    %v710 = vunpack.c.l.b16 %v183
    %v711 = vunpack.c.h.b16 %v183
    %v712 = vunpack.c.l.b16 %v184
    %v713 = vunpack.c.h.b16 %v184
    %v714 = vunpack.c.l.b16 %v185
    %v715 = vunpack.c.h.b16 %v185
    %v716 = vunpack.c.l.b16 %v186
    %v717 = vunpack.c.h.b16 %v186
    %v718 = vunpack.c.l.b16 %v187
    %v719 = vunpack.c.h.b16 %v187
    %v720 = vunpack.c.l.b16 %v188
    %v721 = vunpack.c.h.b16 %v188
    %v722 = vunpack.c.l.b16 %v189
    %v723 = vunpack.c.h.b16 %v189
    %v724 = vunpack.c.l.b16 %v190
    %v725 = vunpack.c.l.b16 %v191
    %v726 = vunpack.c.h.b16 %v191
    %v727 = vunpack.c.l.b16 %v192
    %v728 = vunpack.c.h.b16 %v192
    %v729 = vunpack.c.l.b16 %v193
    %v730 = vunpack.c.h.b16 %v193
    %v731 = vunpack.c.l.b16 %v194
    %v732 = vunpack.c.h.b16 %v194
    %v733 = vunpack.c.l.b16 %v195
    %v734 = vunpack.c.h.b16 %v195
    %v735 = vunpack.c.l.b16 %v196
    %v736 = vunpack.c.h.b16 %v196
    %v737 = vunpack.c.l.b16 %v197
    %v738 = vunpack.c.h.b16 %v197
    %v739 = vunpack.c.l.b16 %v198
    %v740 = vunpack.c.h.b16 %v198
    %v741 = vunpack.c.l.b16 %v199
    %v742 = vunpack.c.h.b16 %v199
    %v743 = vunpack.c.l.b16 %v200
    %v744 = vunpack.c.l.b16 %v201
    %v745 = vunpack.c.h.b16 %v201
    %v746 = vunpack.c.l.b16 %v202
    %v747 = vunpack.c.h.b16 %v202
    %v748 = vunpack.c.l.b16 %v203
    %v749 = vunpack.c.h.b16 %v203
    %v750 = vunpack.c.l.b16 %v204
    %v751 = vunpack.c.h.b16 %v204
    %v752 = vunpack.c.l.b16 %v205
    %v753 = vunpack.c.h.b16 %v205
    %v754 = vunpack.c.l.b16 %v206
    %v755 = vunpack.c.h.b16 %v206
    %v756 = vunpack.c.l.b16 %v207
    %v757 = vunpack.c.h.b16 %v207
    %v758 = vunpack.c.l.b16 %v208
    %v759 = vunpack.c.h.b16 %v208
    %v760 = vunpack.c.l.b16 %v209
    %v761 = vunpack.c.h.b16 %v209
    %v762 = vunpack.c.l.b16 %v210
    %v763 = vunpack.c.l.b16 %v211
    %v764 = vunpack.c.h.b16 %v211
    %v765 = vunpack.c.l.b16 %v212
    %v766 = vunpack.c.h.b16 %v212
    %v767 = vunpack.c.l.b16 %v213
    %v768 = vunpack.c.h.b16 %v213
    %v769 = vunpack.c.l.b16 %v214
    %v770 = vunpack.c.h.b16 %v214
    %v771 = vunpack.c.l.b16 %v215
    %v772 = vunpack.c.h.b16 %v215
    %v773 = vunpack.c.l.b16 %v216
    %v774 = vunpack.c.h.b16 %v216
    %v775 = vunpack.c.l.b16 %v217
    %v776 = vunpack.c.h.b16 %v217
    %v777 = vunpack.c.l.b16 %v218
    %v778 = vunpack.c.h.b16 %v218
    %v779 = vunpack.c.l.b16 %v219
    %v780 = vunpack.c.h.b16 %v219
    %v781 = vunpack.c.l.b16 %v220
    %v782 = vpack.c.b16 %v440, %v421
    %v783 = vpack.c.b16 %v441, %v422
    %v784 = vpack.c.b16 %v442, %v423
    %v785 = vpack.c.b16 %v443, %v424
    %v786 = vpack.c.b16 %v444, %v425
    %v787 = vpack.c.b16 %v445, %v426
    %v788 = vpack.c.b16 %v446, %v427
    %v789 = vpack.c.b16 %v447, %v428
    %v790 = vpack.c.b16 %v448, %v429
    %v791 = vpack.c.b16 %v449, %v430
    %v792 = vpack.c.b16 %v450, %v431
    %v793 = vpack.c.b16 %v451, %v432
    %v794 = vpack.c.b16 %v452, %v433
    %v795 = vpack.c.b16 %v453, %v434
    %v796 = vpack.c.b16 %v454, %v435
    %v797 = vpack.c.b16 %v455, %v436
    %v798 = vpack.c.b16 %v456, %v437
    %v799 = vpack.c.b16 %v457, %v438
    %v800 = vpack.c.b16 %v458, %v439
    %v801 = vpack.c.b16 %v478, %v459
    %v802 = vpack.c.b16 %v479, %v460
    %v803 = vpack.c.b16 %v480, %v461
    %v804 = vpack.c.b16 %v481, %v462
    %v805 = vpack.c.b16 %v482, %v463
    %v806 = vpack.c.b16 %v483, %v464
    %v807 = vpack.c.b16 %v484, %v465
    %v808 = vpack.c.b16 %v485, %v466
    %v809 = vpack.c.b16 %v486, %v467
    %v810 = vpack.c.b16 %v487, %v468
    %v811 = vpack.c.b16 %v488, %v469
    %v812 = vpack.c.b16 %v489, %v470
    %v813 = vpack.c.b16 %v490, %v471
    %v814 = vpack.c.b16 %v491, %v472
    %v815 = vpack.c.b16 %v492, %v473
    %v816 = vpack.c.b16 %v493, %v474
    %v817 = vpack.c.b16 %v494, %v475
    %v818 = vpack.c.b16 %v495, %v476
    %v819 = vpack.c.b16 %v496, %v477
    %v820 = vpack.c.b16 %v516, %v497
    %v821 = vpack.c.b16 %v517, %v498
    %v822 = vpack.c.b16 %v518, %v499
    %v823 = vpack.c.b16 %v519, %v500
    %v824 = vpack.c.b16 %v520, %v501
    %v825 = vpack.c.b16 %v521, %v502
    %v826 = vpack.c.b16 %v522, %v503
    %v827 = vpack.c.b16 %v523, %v504
    %v828 = vpack.c.b16 %v524, %v505
    %v829 = vpack.c.b16 %v525, %v506
    %v830 = vpack.c.b16 %v526, %v507
    %v831 = vpack.c.b16 %v527, %v508
    %v832 = vpack.c.b16 %v528, %v509
    %v833 = vpack.c.b16 %v529, %v510
    %v834 = vpack.c.b16 %v530, %v511
    %v835 = vpack.c.b16 %v531, %v512
    %v836 = vpack.c.b16 %v532, %v513
    %v837 = vpack.c.b16 %v533, %v514
    %v838 = vpack.c.b16 %v534, %v515
    %v839 = vpack.c.b16 %v554, %v535
    %v840 = vpack.c.b16 %v555, %v536
    %v841 = vpack.c.b16 %v556, %v537
    %v842 = vpack.c.b16 %v557, %v538
    %v843 = vpack.c.b16 %v558, %v539
    %v844 = vpack.c.b16 %v559, %v540
    %v845 = vpack.c.b16 %v560, %v541
    %v846 = vpack.c.b16 %v561, %v542
    %v847 = vpack.c.b16 %v562, %v543
    %v848 = vpack.c.b16 %v563, %v544
    %v849 = vpack.c.b16 %v564, %v545
    %v850 = vpack.c.b16 %v565, %v546
    %v851 = vpack.c.b16 %v566, %v547
    %v852 = vpack.c.b16 %v567, %v548
    %v853 = vpack.c.b16 %v568, %v549
    %v854 = vpack.c.b16 %v569, %v550
    %v855 = vpack.c.b16 %v570, %v551
    %v856 = vpack.c.b16 %v571, %v552
    %v857 = vpack.c.b16 %v572, %v553
    %v858 = vpack.c.b16 %v592, %v573
    %v859 = vpack.c.b16 %v593, %v574
    %v860 = vpack.c.b16 %v594, %v575
    %v861 = vpack.c.b16 %v595, %v576
    %v862 = vpack.c.b16 %v596, %v577
    %v863 = vpack.c.b16 %v597, %v578
    %v864 = vpack.c.b16 %v598, %v579
    %v865 = vpack.c.b16 %v599, %v580
    %v866 = vpack.c.b16 %v600, %v581
    %v867 = vpack.c.b16 %v601, %v582
    %v868 = vpack.c.b16 %v602, %v583
    %v869 = vpack.c.b16 %v603, %v584
    %v870 = vpack.c.b16 %v604, %v585
    %v871 = vpack.c.b16 %v605, %v586
    %v872 = vpack.c.b16 %v606, %v587
    %v873 = vpack.c.b16 %v607, %v588
    %v874 = vpack.c.b16 %v608, %v589
    %v875 = vpack.c.b16 %v609, %v590
    %v876 = vpack.c.b16 %v610, %v591
    %v877 = vpack.c.b16 %v630, %v611
    %v878 = vpack.c.b16 %v631, %v612
    %v879 = vpack.c.b16 %v632, %v613
    %v880 = vpack.c.b16 %v633, %v614
    %v881 = vpack.c.b16 %v634, %v615
    %v882 = vpack.c.b16 %v635, %v616
    %v883 = vpack.c.b16 %v636, %v617
    %v884 = vpack.c.b16 %v637, %v618
    %v885 = vpack.c.b16 %v638, %v619
    %v886 = vpack.c.b16 %v639, %v620
    %v887 = vpack.c.b16 %v640, %v621
    %v888 = vpack.c.b16 %v641, %v622
    %v889 = vpack.c.b16 %v642, %v623
    %v890 = vpack.c.b16 %v643, %v624
    %v891 = vpack.c.b16 %v644, %v625
    %v892 = vpack.c.b16 %v645, %v626
    %v893 = vpack.c.b16 %v646, %v627
    %v894 = vpack.c.b16 %v647, %v628
    %v895 = vpack.c.b16 %v648, %v629
    %v896 = vpack.c.b16 %v668, %v649
    %v897 = vpack.c.b16 %v669, %v650
    %v898 = vpack.c.b16 %v670, %v651
    %v899 = vpack.c.b16 %v671, %v652
    %v900 = vpack.c.b16 %v672, %v653
    %v901 = vpack.c.b16 %v673, %v654
    %v902 = vpack.c.b16 %v674, %v655
    %v903 = vpack.c.b16 %v675, %v656
    %v904 = vpack.c.b16 %v676, %v657
    %v905 = vpack.c.b16 %v677, %v658
    %v906 = vpack.c.b16 %v678, %v659
    %v907 = vpack.c.b16 %v679, %v660
    %v908 = vpack.c.b16 %v680, %v661
    %v909 = vpack.c.b16 %v681, %v662
    %v910 = vpack.c.b16 %v682, %v663
    %v911 = vpack.c.b16 %v683, %v664
    %v912 = vpack.c.b16 %v684, %v665
    %v913 = vpack.c.b16 %v685, %v666
    %v914 = vpack.c.b16 %v686, %v667
    %v915 = vpack.c.b16 %v706, %v687
    %v916 = vpack.c.b16 %v707, %v688
    %v917 = vpack.c.b16 %v708, %v689
    %v918 = vpack.c.b16 %v709, %v690
    %v919 = vpack.c.b16 %v710, %v691
    %v920 = vpack.c.b16 %v711, %v692
    %v921 = vpack.c.b16 %v712, %v693
    %v922 = vpack.c.b16 %v713, %v694
    %v923 = vpack.c.b16 %v714, %v695
    %v924 = vpack.c.b16 %v715, %v696
    %v925 = vpack.c.b16 %v716, %v697
    %v926 = vpack.c.b16 %v717, %v698
    %v927 = vpack.c.b16 %v718, %v699
    %v928 = vpack.c.b16 %v719, %v700
    %v929 = vpack.c.b16 %v720, %v701
    %v930 = vpack.c.b16 %v721, %v702
    %v931 = vpack.c.b16 %v722, %v703
    %v932 = vpack.c.b16 %v723, %v704
    %v933 = vpack.c.b16 %v724, %v705
    %v934 = vpack.c.b16 %v744, %v725
    %v935 = vpack.c.b16 %v745, %v726
    %v936 = vpack.c.b16 %v746, %v727
    %v937 = vpack.c.b16 %v747, %v728
    %v938 = vpack.c.b16 %v748, %v729
    %v939 = vpack.c.b16 %v749, %v730
    %v940 = vpack.c.b16 %v750, %v731
    %v941 = vpack.c.b16 %v751, %v732
    %v942 = vpack.c.b16 %v752, %v733
    %v943 = vpack.c.b16 %v753, %v734
    %v944 = vpack.c.b16 %v754, %v735
    %v945 = vpack.c.b16 %v755, %v736
    %v946 = vpack.c.b16 %v756, %v737
    %v947 = vpack.c.b16 %v757, %v738
    %v948 = vpack.c.b16 %v758, %v739
    %v949 = vpack.c.b16 %v759, %v740
    %v950 = vpack.c.b16 %v760, %v741
    %v951 = vpack.c.b16 %v761, %v742
    %v952 = vpack.c.b16 %v762, %v743
    %v953 = vpack.c.b16 %v763, %v763
    %v954 = vpack.c.b16 %v764, %v764
    %v955 = vpack.c.b16 %v765, %v765
    %v956 = vpack.c.b16 %v766, %v766
    %v957 = vpack.c.b16 %v767, %v767
    %v958 = vpack.c.b16 %v768, %v768
    %v959 = vpack.c.b16 %v769, %v769
    %v960 = vpack.c.b16 %v770, %v770
    %v961 = vpack.c.b16 %v771, %v771
    %v962 = vpack.c.b16 %v772, %v772
    %v963 = vpack.c.b16 %v773, %v773
    %v964 = vpack.c.b16 %v774, %v774
    %v965 = vpack.c.b16 %v775, %v775
    %v966 = vpack.c.b16 %v776, %v776
    %v967 = vpack.c.b16 %v777, %v777
    %v968 = vpack.c.b16 %v778, %v778
    %v969 = vpack.c.b16 %v779, %v779
    %v970 = vpack.c.b16 %v780, %v780
    %v971 = vpack.c.b16 %v781, %v781
    %vm1143 = vcmask 195584
    %v1145 = vsel %vm1143, %v229, 0
    %vm1147 = vcmask 1043456
    %v1149 = vsel %vm1147, %v953, 0
    %v1152 = vsel %vm1147, %v954, 0
    %v1155 = vsel %vm1147, %v955, 0
    %v1158 = vsel %vm1147, %v956, 0
    %v1161 = vsel %vm1147, %v957, 0
    %v1164 = vsel %vm1147, %v958, 0
    %v1167 = vsel %vm1147, %v959, 0
    %v1170 = vsel %vm1147, %v960, 0
    %v1173 = vsel %vm1147, %v961, 0
    %v1176 = vsel %vm1147, %v962, 0
    %v1179 = vsel %vm1147, %v963, 0
    %v1182 = vsel %vm1147, %v964, 0
    %v1185 = vsel %vm1147, %v965, 0
    %v1188 = vsel %vm1147, %v966, 0
    %v1191 = vsel %vm1147, %v967, 0
    %v1194 = vsel %vm1147, %v968, 0
    %v1197 = vsel %vm1147, %v969, 0
    %v1200 = vsel %vm1147, %v970, 0
    %v1203 = vsel %vm1147, %v971, 0
    %1205 = vmatprep.subr.bf16.mxu0 %v783
    %1206 = vmatpush1.bf16.msra.mxu0 %v782
    %1207 = vmatprep.subr.bf16.mxu0 %v802
    %1208 = vmatpush1.bf16.msra.mxu0 %v801
    %1209 = vmatprep.subr.bf16.mxu0 %v821
    %1210 = vmatpush1.bf16.msra.mxu0 %v820
    %1211 = vmatprep.subr.bf16.mxu0 %v840
    %1212 = vmatpush1.bf16.msra.mxu0 %v839
    %1213 = vmatprep.subr.bf16.mxu0 %v859
    %1214 = vmatpush1.bf16.msra.mxu0 %v858
    %1215 = vmatprep.subr.bf16.mxu0 %v878
    %1216 = vmatpush1.bf16.msra.mxu0 %v877
    %1217 = vmatprep.subr.bf16.mxu0 %v897
    %1218 = vmatpush1.bf16.msra.mxu0 %v896
    %1219 = vmatprep.subr.bf16.mxu0 %v916
    %1220 = vmatpush1.bf16.msra.mxu0 %v915
    %1221 = vmatprep.subr.bf16.mxu0 %v935
    %1222 = vmatpush1.bf16.msra.mxu0 %v934
    %1223 = vmatprep.subr.bf16.mxu0 %v1152
    %1224 = vmatpush1.bf16.msra.mxu0 %v1149
    %1225 = vmatprep.subr.bf16.mxu0 0
    %1226 = vmatpush1.bf16.msra.mxu0 0
    %1227 = vmatprep.subr.bf16.mxu0 0
    %1228 = vmatpush1.bf16.msra.mxu0 0
    %1229 = vmatprep.subr.bf16.mxu0 0
    %1230 = vmatpush1.bf16.msra.mxu0 0
    %1231 = vmatprep.subr.bf16.mxu0 0
    %1232 = vmatpush1.bf16.msra.mxu0 0
    %1233 = vmatprep.subr.bf16.mxu0 0
    %1234 = vmatpush1.bf16.msra.mxu0 0
    %1235 = vmatprep.subr.bf16.mxu0 0
    %1236 = vmatpush1.bf16.msra.mxu0 0
    %1237 = vmatprep.mubr.bf16.mxu0 %v1145
    %1238 = vmatmul.mubr.bf16.gmra.mrb[0].mxu0 %v228
    %v1239 = vpop.f32.mrb[0].mxu0
    %v1240 = vadd.f32 0.0, %v1239
    %v1241 = vpop.f32.mrb[0].mxu0
    %v1242 = vadd.f32 0.0, %v1241
    %v1243 = vpop.f32.mrb[0].mxu0
    %v1244 = vpop.f32.mrb[0].mxu0
    %1245 = vdwg.mxu0
    %1246 = vmatprep.subr.bf16.mxu0 %v785
    %1247 = vmatpush1.bf16.msra.mxu0 %v784
    %1248 = vmatprep.subr.bf16.mxu0 %v804
    %1249 = vmatpush1.bf16.msra.mxu0 %v803
    %1250 = vmatprep.subr.bf16.mxu0 %v823
    %1251 = vmatpush1.bf16.msra.mxu0 %v822
    %1252 = vmatprep.subr.bf16.mxu0 %v842
    %1253 = vmatpush1.bf16.msra.mxu0 %v841
    %1254 = vmatprep.subr.bf16.mxu0 %v861
    %1255 = vmatpush1.bf16.msra.mxu0 %v860
    %1256 = vmatprep.subr.bf16.mxu0 %v880
    %1257 = vmatpush1.bf16.msra.mxu0 %v879
    %1258 = vmatprep.subr.bf16.mxu0 %v899
    %1259 = vmatpush1.bf16.msra.mxu0 %v898
    %1260 = vmatprep.subr.bf16.mxu0 %v918
    %1261 = vmatpush1.bf16.msra.mxu0 %v917
    %1262 = vmatprep.subr.bf16.mxu0 %v937
    %1263 = vmatpush1.bf16.msra.mxu0 %v936
    %1264 = vmatprep.subr.bf16.mxu0 %v1158
    %1265 = vmatpush1.bf16.msra.mxu0 %v1155
    %1266 = vmatprep.subr.bf16.mxu0 0
    %1267 = vmatpush1.bf16.msra.mxu0 0
    %1268 = vmatprep.subr.bf16.mxu0 0
    %1269 = vmatpush1.bf16.msra.mxu0 0
    %1270 = vmatprep.subr.bf16.mxu0 0
    %1271 = vmatpush1.bf16.msra.mxu0 0
    %1272 = vmatprep.subr.bf16.mxu0 0
    %1273 = vmatpush1.bf16.msra.mxu0 0
    %1274 = vmatprep.subr.bf16.mxu0 0
    %1275 = vmatpush1.bf16.msra.mxu0 0
    %1276 = vmatprep.subr.bf16.mxu0 0
    %1277 = vmatpush1.bf16.msra.mxu0 0
    %1278 = vmatprep.mubr.bf16.mxu0 %v1145
    %1279 = vmatmul.mubr.bf16.gmra.mrb[0].mxu0 %v228
    %v1280 = vpop.f32.mrb[0].mxu0
    %v1281 = vadd.f32 0.0, %v1280
    %v1282 = vpop.f32.mrb[0].mxu0
    %v1283 = vadd.f32 0.0, %v1282
    %v1284 = vpop.f32.mrb[0].mxu0
    %v1285 = vpop.f32.mrb[0].mxu0
    %1286 = vdwg.mxu0
    %1287 = vmatprep.subr.bf16.mxu0 %v787
    %1288 = vmatpush1.bf16.msra.mxu0 %v786
    %1289 = vmatprep.subr.bf16.mxu0 %v806
    %1290 = vmatpush1.bf16.msra.mxu0 %v805
    %1291 = vmatprep.subr.bf16.mxu0 %v825
    %1292 = vmatpush1.bf16.msra.mxu0 %v824
    %1293 = vmatprep.subr.bf16.mxu0 %v844
    %1294 = vmatpush1.bf16.msra.mxu0 %v843
    %1295 = vmatprep.subr.bf16.mxu0 %v863
    %1296 = vmatpush1.bf16.msra.mxu0 %v862
    %1297 = vmatprep.subr.bf16.mxu0 %v882
    %1298 = vmatpush1.bf16.msra.mxu0 %v881
    %1299 = vmatprep.subr.bf16.mxu0 %v901
    %1300 = vmatpush1.bf16.msra.mxu0 %v900
    %1301 = vmatprep.subr.bf16.mxu0 %v920
    %1302 = vmatpush1.bf16.msra.mxu0 %v919
    %1303 = vmatprep.subr.bf16.mxu0 %v939
    %1304 = vmatpush1.bf16.msra.mxu0 %v938
    %1305 = vmatprep.subr.bf16.mxu0 %v1164
    %1306 = vmatpush1.bf16.msra.mxu0 %v1161
    %1307 = vmatprep.subr.bf16.mxu0 0
    %1308 = vmatpush1.bf16.msra.mxu0 0
    %1309 = vmatprep.subr.bf16.mxu0 0
    %1310 = vmatpush1.bf16.msra.mxu0 0
    %1311 = vmatprep.subr.bf16.mxu0 0
    %1312 = vmatpush1.bf16.msra.mxu0 0
    %1313 = vmatprep.subr.bf16.mxu0 0
    %1314 = vmatpush1.bf16.msra.mxu0 0
    %1315 = vmatprep.subr.bf16.mxu0 0
    %1316 = vmatpush1.bf16.msra.mxu0 0
    %1317 = vmatprep.subr.bf16.mxu0 0
    %1318 = vmatpush1.bf16.msra.mxu0 0
    %1319 = vmatprep.mubr.bf16.mxu0 %v1145
    %1320 = vmatmul.mubr.bf16.gmra.mrb[0].mxu0 %v228
    %v1321 = vpop.f32.mrb[0].mxu0
    %v1322 = vadd.f32 0.0, %v1321
    %v1323 = vpop.f32.mrb[0].mxu0
    %v1324 = vadd.f32 0.0, %v1323
    %v1325 = vpop.f32.mrb[0].mxu0
    %v1326 = vpop.f32.mrb[0].mxu0
    %1327 = vdwg.mxu0
    %1328 = vmatprep.subr.bf16.mxu0 %v789
    %1329 = vmatpush1.bf16.msra.mxu0 %v788
    %1330 = vmatprep.subr.bf16.mxu0 %v808
    %1331 = vmatpush1.bf16.msra.mxu0 %v807
    %1332 = vmatprep.subr.bf16.mxu0 %v827
    %1333 = vmatpush1.bf16.msra.mxu0 %v826
    %1334 = vmatprep.subr.bf16.mxu0 %v846
    %1335 = vmatpush1.bf16.msra.mxu0 %v845
    %1336 = vmatprep.subr.bf16.mxu0 %v865
    %1337 = vmatpush1.bf16.msra.mxu0 %v864
    %1338 = vmatprep.subr.bf16.mxu0 %v884
    %1339 = vmatpush1.bf16.msra.mxu0 %v883
    %1340 = vmatprep.subr.bf16.mxu0 %v903
    %1341 = vmatpush1.bf16.msra.mxu0 %v902
    %1342 = vmatprep.subr.bf16.mxu0 %v922
    %1343 = vmatpush1.bf16.msra.mxu0 %v921
    %1344 = vmatprep.subr.bf16.mxu0 %v941
    %1345 = vmatpush1.bf16.msra.mxu0 %v940
    %1346 = vmatprep.subr.bf16.mxu0 %v1170
    %1347 = vmatpush1.bf16.msra.mxu0 %v1167
    %1348 = vmatprep.subr.bf16.mxu0 0
    %1349 = vmatpush1.bf16.msra.mxu0 0
    %1350 = vmatprep.subr.bf16.mxu0 0
    %1351 = vmatpush1.bf16.msra.mxu0 0
    %1352 = vmatprep.subr.bf16.mxu0 0
    %1353 = vmatpush1.bf16.msra.mxu0 0
    %1354 = vmatprep.subr.bf16.mxu0 0
    %1355 = vmatpush1.bf16.msra.mxu0 0
    %1356 = vmatprep.subr.bf16.mxu0 0
    %1357 = vmatpush1.bf16.msra.mxu0 0
    %1358 = vmatprep.subr.bf16.mxu0 0
    %1359 = vmatpush1.bf16.msra.mxu0 0
    %1360 = vmatprep.mubr.bf16.mxu0 %v1145
    %1361 = vmatmul.mubr.bf16.gmra.mrb[0].mxu0 %v228
    %v1362 = vpop.f32.mrb[0].mxu0
    %v1363 = vadd.f32 0.0, %v1362
    %v1364 = vpop.f32.mrb[0].mxu0
    %v1365 = vadd.f32 0.0, %v1364
    %v1366 = vpop.f32.mrb[0].mxu0
    %v1367 = vpop.f32.mrb[0].mxu0
    %1368 = vdwg.mxu0
    %1369 = vmatprep.subr.bf16.mxu0 %v791
    %1370 = vmatpush1.bf16.msra.mxu0 %v790
    %1371 = vmatprep.subr.bf16.mxu0 %v810
    %1372 = vmatpush1.bf16.msra.mxu0 %v809
    %1373 = vmatprep.subr.bf16.mxu0 %v829
    %1374 = vmatpush1.bf16.msra.mxu0 %v828
    %1375 = vmatprep.subr.bf16.mxu0 %v848
    %1376 = vmatpush1.bf16.msra.mxu0 %v847
    %1377 = vmatprep.subr.bf16.mxu0 %v867
    %1378 = vmatpush1.bf16.msra.mxu0 %v866
    %1379 = vmatprep.subr.bf16.mxu0 %v886
    %1380 = vmatpush1.bf16.msra.mxu0 %v885
    %1381 = vmatprep.subr.bf16.mxu0 %v905
    %1382 = vmatpush1.bf16.msra.mxu0 %v904
    %1383 = vmatprep.subr.bf16.mxu0 %v924
    %1384 = vmatpush1.bf16.msra.mxu0 %v923
    %1385 = vmatprep.subr.bf16.mxu0 %v943
    %1386 = vmatpush1.bf16.msra.mxu0 %v942
    %1387 = vmatprep.subr.bf16.mxu0 %v1176
    %1388 = vmatpush1.bf16.msra.mxu0 %v1173
    %1389 = vmatprep.subr.bf16.mxu0 0
    %1390 = vmatpush1.bf16.msra.mxu0 0
    %1391 = vmatprep.subr.bf16.mxu0 0
    %1392 = vmatpush1.bf16.msra.mxu0 0
    %1393 = vmatprep.subr.bf16.mxu0 0
    %1394 = vmatpush1.bf16.msra.mxu0 0
    %1395 = vmatprep.subr.bf16.mxu0 0
    %1396 = vmatpush1.bf16.msra.mxu0 0
    %1397 = vmatprep.subr.bf16.mxu0 0
    %1398 = vmatpush1.bf16.msra.mxu0 0
    %1399 = vmatprep.subr.bf16.mxu0 0
    %1400 = vmatpush1.bf16.msra.mxu0 0
    %1401 = vmatprep.mubr.bf16.mxu0 %v1145
    %1402 = vmatmul.mubr.bf16.gmra.mrb[0].mxu0 %v228
    %v1403 = vpop.f32.mrb[0].mxu0
    %v1404 = vadd.f32 0.0, %v1403
    %v1405 = vpop.f32.mrb[0].mxu0
    %v1406 = vadd.f32 0.0, %v1405
    %v1407 = vpop.f32.mrb[0].mxu0
    %v1408 = vpop.f32.mrb[0].mxu0
    %1409 = vdwg.mxu0
    %1410 = vmatprep.subr.bf16.mxu0 %v793
    %1411 = vmatpush1.bf16.msra.mxu0 %v792
    %1412 = vmatprep.subr.bf16.mxu0 %v812
    %1413 = vmatpush1.bf16.msra.mxu0 %v811
    %1414 = vmatprep.subr.bf16.mxu0 %v831
    %1415 = vmatpush1.bf16.msra.mxu0 %v830
    %1416 = vmatprep.subr.bf16.mxu0 %v850
    %1417 = vmatpush1.bf16.msra.mxu0 %v849
    %1418 = vmatprep.subr.bf16.mxu0 %v869
    %1419 = vmatpush1.bf16.msra.mxu0 %v868
    %1420 = vmatprep.subr.bf16.mxu0 %v888
    %1421 = vmatpush1.bf16.msra.mxu0 %v887
    %1422 = vmatprep.subr.bf16.mxu0 %v907
    %1423 = vmatpush1.bf16.msra.mxu0 %v906
    %1424 = vmatprep.subr.bf16.mxu0 %v926
    %1425 = vmatpush1.bf16.msra.mxu0 %v925
    %1426 = vmatprep.subr.bf16.mxu0 %v945
    %1427 = vmatpush1.bf16.msra.mxu0 %v944
    %1428 = vmatprep.subr.bf16.mxu0 %v1182
    %1429 = vmatpush1.bf16.msra.mxu0 %v1179
    %1430 = vmatprep.subr.bf16.mxu0 0
    %1431 = vmatpush1.bf16.msra.mxu0 0
    %1432 = vmatprep.subr.bf16.mxu0 0
    %1433 = vmatpush1.bf16.msra.mxu0 0
    %1434 = vmatprep.subr.bf16.mxu0 0
    %1435 = vmatpush1.bf16.msra.mxu0 0
    %1436 = vmatprep.subr.bf16.mxu0 0
    %1437 = vmatpush1.bf16.msra.mxu0 0
    %1438 = vmatprep.subr.bf16.mxu0 0
    %1439 = vmatpush1.bf16.msra.mxu0 0
    %1440 = vmatprep.subr.bf16.mxu0 0
    %1441 = vmatpush1.bf16.msra.mxu0 0
    %1442 = vmatprep.mubr.bf16.mxu0 %v1145
    %1443 = vmatmul.mubr.bf16.gmra.mrb[0].mxu0 %v228
    %v1444 = vpop.f32.mrb[0].mxu0
    %v1445 = vadd.f32 0.0, %v1444
    %v1446 = vpop.f32.mrb[0].mxu0
    %v1447 = vadd.f32 0.0, %v1446
    %v1448 = vpop.f32.mrb[0].mxu0
    %v1449 = vpop.f32.mrb[0].mxu0
    %1450 = vdwg.mxu0
    %1451 = vmatprep.subr.bf16.mxu0 %v795
    %1452 = vmatpush1.bf16.msra.mxu0 %v794
    %1453 = vmatprep.subr.bf16.mxu0 %v814
    %1454 = vmatpush1.bf16.msra.mxu0 %v813
    %1455 = vmatprep.subr.bf16.mxu0 %v833
    %1456 = vmatpush1.bf16.msra.mxu0 %v832
    %1457 = vmatprep.subr.bf16.mxu0 %v852
    %1458 = vmatpush1.bf16.msra.mxu0 %v851
    %1459 = vmatprep.subr.bf16.mxu0 %v871
    %1460 = vmatpush1.bf16.msra.mxu0 %v870
    %1461 = vmatprep.subr.bf16.mxu0 %v890
    %1462 = vmatpush1.bf16.msra.mxu0 %v889
    %1463 = vmatprep.subr.bf16.mxu0 %v909
    %1464 = vmatpush1.bf16.msra.mxu0 %v908
    %1465 = vmatprep.subr.bf16.mxu0 %v928
    %1466 = vmatpush1.bf16.msra.mxu0 %v927
    %1467 = vmatprep.subr.bf16.mxu0 %v947
    %1468 = vmatpush1.bf16.msra.mxu0 %v946
    %1469 = vmatprep.subr.bf16.mxu0 %v1188
    %1470 = vmatpush1.bf16.msra.mxu0 %v1185
    %1471 = vmatprep.subr.bf16.mxu0 0
    %1472 = vmatpush1.bf16.msra.mxu0 0
    %1473 = vmatprep.subr.bf16.mxu0 0
    %1474 = vmatpush1.bf16.msra.mxu0 0
    %1475 = vmatprep.subr.bf16.mxu0 0
    %1476 = vmatpush1.bf16.msra.mxu0 0
    %1477 = vmatprep.subr.bf16.mxu0 0
    %1478 = vmatpush1.bf16.msra.mxu0 0
    %1479 = vmatprep.subr.bf16.mxu0 0
    %1480 = vmatpush1.bf16.msra.mxu0 0
    %1481 = vmatprep.subr.bf16.mxu0 0
    %1482 = vmatpush1.bf16.msra.mxu0 0
    %1483 = vmatprep.mubr.bf16.mxu0 %v1145
    %1484 = vmatmul.mubr.bf16.gmra.mrb[0].mxu0 %v228
    %v1485 = vpop.f32.mrb[0].mxu0
    %v1486 = vadd.f32 0.0, %v1485
    %v1487 = vpop.f32.mrb[0].mxu0
    %v1488 = vadd.f32 0.0, %v1487
    %v1489 = vpop.f32.mrb[0].mxu0
    %v1490 = vpop.f32.mrb[0].mxu0
    %1491 = vdwg.mxu0
    %1492 = vmatprep.subr.bf16.mxu0 %v797
    %1493 = vmatpush1.bf16.msra.mxu0 %v796
    %1494 = vmatprep.subr.bf16.mxu0 %v816
    %1495 = vmatpush1.bf16.msra.mxu0 %v815
    %1496 = vmatprep.subr.bf16.mxu0 %v835
    %1497 = vmatpush1.bf16.msra.mxu0 %v834
    %1498 = vmatprep.subr.bf16.mxu0 %v854
    %1499 = vmatpush1.bf16.msra.mxu0 %v853
    %1500 = vmatprep.subr.bf16.mxu0 %v873
    %1501 = vmatpush1.bf16.msra.mxu0 %v872
    %1502 = vmatprep.subr.bf16.mxu0 %v892
    %1503 = vmatpush1.bf16.msra.mxu0 %v891
    %1504 = vmatprep.subr.bf16.mxu0 %v911
    %1505 = vmatpush1.bf16.msra.mxu0 %v910
    %1506 = vmatprep.subr.bf16.mxu0 %v930
    %1507 = vmatpush1.bf16.msra.mxu0 %v929
    %1508 = vmatprep.subr.bf16.mxu0 %v949
    %1509 = vmatpush1.bf16.msra.mxu0 %v948
    %1510 = vmatprep.subr.bf16.mxu0 %v1194
    %1511 = vmatpush1.bf16.msra.mxu0 %v1191
    %1512 = vmatprep.subr.bf16.mxu0 0
    %1513 = vmatpush1.bf16.msra.mxu0 0
    %1514 = vmatprep.subr.bf16.mxu0 0
    %1515 = vmatpush1.bf16.msra.mxu0 0
    %1516 = vmatprep.subr.bf16.mxu0 0
    %1517 = vmatpush1.bf16.msra.mxu0 0
    %1518 = vmatprep.subr.bf16.mxu0 0
    %1519 = vmatpush1.bf16.msra.mxu0 0
    %1520 = vmatprep.subr.bf16.mxu0 0
    %1521 = vmatpush1.bf16.msra.mxu0 0
    %1522 = vmatprep.subr.bf16.mxu0 0
    %1523 = vmatpush1.bf16.msra.mxu0 0
    %1524 = vmatprep.mubr.bf16.mxu0 %v1145
    %1525 = vmatmul.mubr.bf16.gmra.mrb[0].mxu0 %v228
    %v1526 = vpop.f32.mrb[0].mxu0
    %v1527 = vadd.f32 0.0, %v1526
    %v1528 = vpop.f32.mrb[0].mxu0
    %v1529 = vadd.f32 0.0, %v1528
    %v1530 = vpop.f32.mrb[0].mxu0
    %v1531 = vpop.f32.mrb[0].mxu0
    %1532 = vdwg.mxu0
    %1533 = vmatprep.subr.bf16.mxu0 %v799
    %1534 = vmatpush1.bf16.msra.mxu0 %v798
    %1535 = vmatprep.subr.bf16.mxu0 %v818
    %1536 = vmatpush1.bf16.msra.mxu0 %v817
    %1537 = vmatprep.subr.bf16.mxu0 %v837
    %1538 = vmatpush1.bf16.msra.mxu0 %v836
    %1539 = vmatprep.subr.bf16.mxu0 %v856
    %1540 = vmatpush1.bf16.msra.mxu0 %v855
    %1541 = vmatprep.subr.bf16.mxu0 %v875
    %1542 = vmatpush1.bf16.msra.mxu0 %v874
    %1543 = vmatprep.subr.bf16.mxu0 %v894
    %1544 = vmatpush1.bf16.msra.mxu0 %v893
    %1545 = vmatprep.subr.bf16.mxu0 %v913
    %1546 = vmatpush1.bf16.msra.mxu0 %v912
    %1547 = vmatprep.subr.bf16.mxu0 %v932
    %1548 = vmatpush1.bf16.msra.mxu0 %v931
    %1549 = vmatprep.subr.bf16.mxu0 %v951
    %1550 = vmatpush1.bf16.msra.mxu0 %v950
    %1551 = vmatprep.subr.bf16.mxu0 %v1200
    %1552 = vmatpush1.bf16.msra.mxu0 %v1197
    %1553 = vmatprep.subr.bf16.mxu0 0
    %1554 = vmatpush1.bf16.msra.mxu0 0
    %1555 = vmatprep.subr.bf16.mxu0 0
    %1556 = vmatpush1.bf16.msra.mxu0 0
    %1557 = vmatprep.subr.bf16.mxu0 0
    %1558 = vmatpush1.bf16.msra.mxu0 0
    %1559 = vmatprep.subr.bf16.mxu0 0
    %1560 = vmatpush1.bf16.msra.mxu0 0
    %1561 = vmatprep.subr.bf16.mxu0 0
    %1562 = vmatpush1.bf16.msra.mxu0 0
    %1563 = vmatprep.subr.bf16.mxu0 0
    %1564 = vmatpush1.bf16.msra.mxu0 0
    %1565 = vmatprep.mubr.bf16.mxu0 %v1145
    %1566 = vmatmul.mubr.bf16.gmra.mrb[0].mxu0 %v228
    %v1567 = vpop.f32.mrb[0].mxu0
    %v1568 = vadd.f32 0.0, %v1567
    %v1569 = vpop.f32.mrb[0].mxu0
    %v1570 = vadd.f32 0.0, %v1569
    %v1571 = vpop.f32.mrb[0].mxu0
    %v1572 = vpop.f32.mrb[0].mxu0
    %1573 = vdwg.mxu0
    %1574 = vmatprep.subr.bf16.mxu0 0
    %1575 = vmatpush1.bf16.msra.mxu0 %v800
    %1576 = vmatprep.subr.bf16.mxu0 0
    %1577 = vmatpush1.bf16.msra.mxu0 %v819
    %1578 = vmatprep.subr.bf16.mxu0 0
    %1579 = vmatpush1.bf16.msra.mxu0 %v838
    %1580 = vmatprep.subr.bf16.mxu0 0
    %1581 = vmatpush1.bf16.msra.mxu0 %v857
    %1582 = vmatprep.subr.bf16.mxu0 0
    %1583 = vmatpush1.bf16.msra.mxu0 %v876
    %1584 = vmatprep.subr.bf16.mxu0 0
    %1585 = vmatpush1.bf16.msra.mxu0 %v895
    %1586 = vmatprep.subr.bf16.mxu0 0
    %1587 = vmatpush1.bf16.msra.mxu0 %v914
    %1588 = vmatprep.subr.bf16.mxu0 0
    %1589 = vmatpush1.bf16.msra.mxu0 %v933
    %1590 = vmatprep.subr.bf16.mxu0 0
    %1591 = vmatpush1.bf16.msra.mxu0 %v952
    %1592 = vmatprep.subr.bf16.mxu0 0
    %1593 = vmatpush1.bf16.msra.mxu0 %v1203
    %1594 = vmatprep.subr.bf16.mxu0 0
    %1595 = vmatpush1.bf16.msra.mxu0 0
    %1596 = vmatprep.subr.bf16.mxu0 0
    %1597 = vmatpush1.bf16.msra.mxu0 0
    %1598 = vmatprep.subr.bf16.mxu0 0
    %1599 = vmatpush1.bf16.msra.mxu0 0
    %1600 = vmatprep.subr.bf16.mxu0 0
    %1601 = vmatpush1.bf16.msra.mxu0 0
    %1602 = vmatprep.subr.bf16.mxu0 0
    %1603 = vmatpush1.bf16.msra.mxu0 0
    %1604 = vmatprep.subr.bf16.mxu0 0
    %1605 = vmatpush1.bf16.msra.mxu0 0
    %1606 = vmatprep.mubr.bf16.mxu0 %v1145
    %1607 = vmatmul.mubr.bf16.gmra.mrb[0].mxu0 %v228
    %v1608 = vpop.f32.mrb[0].mxu0
    %v1609 = vadd.f32 0.0, %v1608
    %v1610 = vpop.f32.mrb[0].mxu0
    %v1611 = vpop.f32.mrb[0].mxu0
    %v1612 = vpop.f32.mrb[0].mxu0
    %1613 = vdwg.mxu0
    %v1614 = vld [vmem:[%s2] sm:$0xf]
    %v1615 = vmul.f32 %v1240, %v1614
    %v1616 = vld [vmem:[%s2 + $0x4] sm:$0xf]
    %v1617 = vmul.f32 %v1242, %v1616
    %v1618 = vadd.f32 %v1615, %v1617
    %v1619 = vld [vmem:[%s2 + $0x8] sm:$0xf]
    %v1620 = vmul.f32 %v1281, %v1619
    %v1621 = vadd.f32 %v1618, %v1620
    %v1622 = vld [vmem:[%s2 + $0xc] sm:$0xf]
    %v1623 = vmul.f32 %v1283, %v1622
    %v1624 = vadd.f32 %v1621, %v1623
    %v1625 = vld [vmem:[%s2 + $0x10] sm:$0xf]
    %v1626 = vmul.f32 %v1322, %v1625
    %v1627 = vadd.f32 %v1624, %v1626
    %v1628 = vld [vmem:[%s2 + $0x14] sm:$0xf]
    %v1629 = vmul.f32 %v1324, %v1628
    %v1630 = vadd.f32 %v1627, %v1629
    %v1631 = vld [vmem:[%s2 + $0x18] sm:$0xf]
    %v1632 = vmul.f32 %v1363, %v1631
    %v1633 = vadd.f32 %v1630, %v1632
    %v1634 = vld [vmem:[%s2 + $0x1c] sm:$0xf]
    %v1635 = vmul.f32 %v1365, %v1634
    %v1636 = vadd.f32 %v1633, %v1635
    %v1637 = vld [vmem:[%s2 + $0x20] sm:$0xf]
    %v1638 = vmul.f32 %v1404, %v1637
    %v1639 = vadd.f32 %v1636, %v1638
    %v1640 = vld [vmem:[%s2 + $0x24] sm:$0xf]
    %v1641 = vmul.f32 %v1406, %v1640
    %v1642 = vadd.f32 %v1639, %v1641
    %v1643 = vld [vmem:[%s2 + $0x28] sm:$0xf]
    %v1644 = vmul.f32 %v1445, %v1643
    %v1645 = vadd.f32 %v1642, %v1644
    %v1646 = vld [vmem:[%s2 + $0x2c] sm:$0xf]
    %v1647 = vmul.f32 %v1447, %v1646
    %v1648 = vadd.f32 %v1645, %v1647
    %v1649 = vld [vmem:[%s2 + $0x30] sm:$0xf]
    %v1650 = vmul.f32 %v1486, %v1649
    %v1651 = vadd.f32 %v1648, %v1650
    %v1652 = vld [vmem:[%s2 + $0x34] sm:$0xf]
    %v1653 = vmul.f32 %v1488, %v1652
    %v1654 = vadd.f32 %v1651, %v1653
    %v1655 = vld [vmem:[%s2 + $0x38] sm:$0xf]
    %v1656 = vmul.f32 %v1527, %v1655
    %v1657 = vadd.f32 %v1654, %v1656
    %v1658 = vld [vmem:[%s2 + $0x3c] sm:$0xf]
    %v1659 = vmul.f32 %v1529, %v1658
    %v1660 = vadd.f32 %v1657, %v1659
    %v1661 = vld [vmem:[%s2 + $0x40] sm:$0xf]
    %v1662 = vmul.f32 %v1568, %v1661
    %v1663 = vadd.f32 %v1660, %v1662
    %v1664 = vld [vmem:[%s2 + $0x44] sm:$0xf]
    %v1665 = vmul.f32 %v1570, %v1664
    %v1666 = vadd.f32 %v1663, %v1665
    %v1667 = vld [vmem:[%s2 + $0x48] sm:$0xf]
    %v1668 = vmul.f32 %v1609, %v1667
    %v1669 = vadd.f32 %v1666, %v1668
    %v1670 = vld [vmem:[#allocation2 + $0x4c] sm:$0xff]
    %v1671 = vld [vmem:[#allocation2 + $0x54] sm:$0xff]
    %v1672 = vld [vmem:[#allocation2 + $0x5c] sm:$0xff]
    %v1673 = vld [vmem:[#allocation2 + $0x64] sm:$0xff]
    %v1674 = vld [vmem:[#allocation2 + $0x6c] sm:$0xff]
    %v1675 = vld [vmem:[#allocation2 + $0x74] sm:$0xff]
    %v1676 = vld [vmem:[#allocation2 + $0x7c] sm:$0xff]
    %v1677 = vld [vmem:[#allocation2 + $0x84] sm:$0xff]
    %v1678 = vld [vmem:[#allocation2 + $0x8c] sm:$0xff]
    %v1679 = vld [vmem:[#allocation2 + $0x94] sm:$0xf]
    %v1680 = vld [vmem:[#allocation2 + $0x17c] sm:$0xff]
    %v1681 = vld [vmem:[#allocation2 + $0x184] sm:$0xff]
    %v1682 = vld [vmem:[#allocation2 + $0x18c] sm:$0xff]
    %v1683 = vld [vmem:[#allocation2 + $0x194] sm:$0xff]
    %v1684 = vld [vmem:[#allocation2 + $0x19c] sm:$0xff]
    %v1685 = vld [vmem:[#allocation2 + $0x1a4] sm:$0xff]
    %v1686 = vld [vmem:[#allocation2 + $0x1ac] sm:$0xff]
    %v1687 = vld [vmem:[#allocation2 + $0x1b4] sm:$0xff]
    %v1688 = vld [vmem:[#allocation2 + $0x1bc] sm:$0xff]
    %v1689 = vld [vmem:[#allocation2 + $0x1c4] sm:$0xf]
    %v1690 = vld [vmem:[#allocation2 + $0x2ac] sm:$0xff]
    %v1691 = vld [vmem:[#allocation2 + $0x2b4] sm:$0xff]
    %v1692 = vld [vmem:[#allocation2 + $0x2bc] sm:$0xff]
    %v1693 = vld [vmem:[#allocation2 + $0x2c4] sm:$0xff]
    %v1694 = vld [vmem:[#allocation2 + $0x2cc] sm:$0xff]
    %v1695 = vld [vmem:[#allocation2 + $0x2d4] sm:$0xff]
    %v1696 = vld [vmem:[#allocation2 + $0x2dc] sm:$0xff]
    %v1697 = vld [vmem:[#allocation2 + $0x2e4] sm:$0xff]
    %v1698 = vld [vmem:[#allocation2 + $0x2ec] sm:$0xff]
    %v1699 = vld [vmem:[#allocation2 + $0x2f4] sm:$0xf]
    %v1700 = vld [vmem:[#allocation2 + $0x3dc] sm:$0xff]
    %v1701 = vld [vmem:[#allocation2 + $0x3e4] sm:$0xff]
    %v1702 = vld [vmem:[#allocation2 + $0x3ec] sm:$0xff]
    %v1703 = vld [vmem:[#allocation2 + $0x3f4] sm:$0xff]
    %v1704 = vld [vmem:[#allocation2 + $0x3fc] sm:$0xff]
    %v1705 = vld [vmem:[#allocation2 + $0x404] sm:$0xff]
    %v1706 = vld [vmem:[#allocation2 + $0x40c] sm:$0xff]
    %v1707 = vld [vmem:[#allocation2 + $0x414] sm:$0xff]
    %v1708 = vld [vmem:[#allocation2 + $0x41c] sm:$0xff]
    %v1709 = vld [vmem:[#allocation2 + $0x424] sm:$0xf]
    %v1710 = vld [vmem:[#allocation2 + $0x50c] sm:$0xff]
    %v1711 = vld [vmem:[#allocation2 + $0x514] sm:$0xff]
    %v1712 = vld [vmem:[#allocation2 + $0x51c] sm:$0xff]
    %v1713 = vld [vmem:[#allocation2 + $0x524] sm:$0xff]
    %v1714 = vld [vmem:[#allocation2 + $0x52c] sm:$0xff]
    %v1715 = vld [vmem:[#allocation2 + $0x534] sm:$0xff]
    %v1716 = vld [vmem:[#allocation2 + $0x53c] sm:$0xff]
    %v1717 = vld [vmem:[#allocation2 + $0x544] sm:$0xff]
    %v1718 = vld [vmem:[#allocation2 + $0x54c] sm:$0xff]
    %v1719 = vld [vmem:[#allocation2 + $0x554] sm:$0xf]
    %v1720 = vld [vmem:[#allocation2 + $0x63c] sm:$0xff]
    %v1721 = vld [vmem:[#allocation2 + $0x644] sm:$0xff]
    %v1722 = vld [vmem:[#allocation2 + $0x64c] sm:$0xff]
    %v1723 = vld [vmem:[#allocation2 + $0x654] sm:$0xff]
    %v1724 = vld [vmem:[#allocation2 + $0x65c] sm:$0xff]
    %v1725 = vld [vmem:[#allocation2 + $0x664] sm:$0xff]
    %v1726 = vld [vmem:[#allocation2 + $0x66c] sm:$0xff]
    %v1727 = vld [vmem:[#allocation2 + $0x674] sm:$0xff]
    %v1728 = vld [vmem:[#allocation2 + $0x67c] sm:$0xff]
    %v1729 = vld [vmem:[#allocation2 + $0x684] sm:$0xf]
    %v1730 = vld [vmem:[#allocation2 + $0x76c] sm:$0xff]
    %v1731 = vld [vmem:[#allocation2 + $0x774] sm:$0xff]
    %v1732 = vld [vmem:[#allocation2 + $0x77c] sm:$0xff]
    %v1733 = vld [vmem:[#allocation2 + $0x784] sm:$0xff]
    %v1734 = vld [vmem:[#allocation2 + $0x78c] sm:$0xff]
    %v1735 = vld [vmem:[#allocation2 + $0x794] sm:$0xff]
    %v1736 = vld [vmem:[#allocation2 + $0x79c] sm:$0xff]
    %v1737 = vld [vmem:[#allocation2 + $0x7a4] sm:$0xff]
    %v1738 = vld [vmem:[#allocation2 + $0x7ac] sm:$0xff]
    %v1739 = vld [vmem:[#allocation2 + $0x7b4] sm:$0xf]
    %v1740 = vld [vmem:[#allocation2 + $0x89c] sm:$0xff]
    %v1741 = vld [vmem:[#allocation2 + $0x8a4] sm:$0xff]
    %v1742 = vld [vmem:[#allocation2 + $0x8ac] sm:$0xff]
    %v1743 = vld [vmem:[#allocation2 + $0x8b4] sm:$0xff]
    %v1744 = vld [vmem:[#allocation2 + $0x8bc] sm:$0xff]
    %v1745 = vld [vmem:[#allocation2 + $0x8c4] sm:$0xff]
    %v1746 = vld [vmem:[#allocation2 + $0x8cc] sm:$0xff]
    %v1747 = vld [vmem:[#allocation2 + $0x8d4] sm:$0xff]
    %v1748 = vld [vmem:[#allocation2 + $0x8dc] sm:$0xff]
    %v1749 = vld [vmem:[#allocation2 + $0x8e4] sm:$0xf]
    %v1750 = vld [vmem:[#allocation2 + $0x9cc] sm:$0xff]
    %v1751 = vld [vmem:[#allocation2 + $0x9d4] sm:$0xff]
    %v1752 = vld [vmem:[#allocation2 + $0x9dc] sm:$0xff]
    %v1753 = vld [vmem:[#allocation2 + $0x9e4] sm:$0xff]
    %v1754 = vld [vmem:[#allocation2 + $0x9ec] sm:$0xff]
    %v1755 = vld [vmem:[#allocation2 + $0x9f4] sm:$0xff]
    %v1756 = vld [vmem:[#allocation2 + $0x9fc] sm:$0xff]
    %v1757 = vld [vmem:[#allocation2 + $0xa04] sm:$0xff]
    %v1758 = vld [vmem:[#allocation2 + $0xa0c] sm:$0xff]
    %v1759 = vld [vmem:[#allocation2 + $0xa14] sm:$0xf]
    %v1760 = vld [vmem:[#allocation2 + $0xafc] sm:$0xff]
    %v1761 = vld [vmem:[#allocation2 + $0xb04] sm:$0xff]
    %v1762 = vld [vmem:[#allocation2 + $0xb0c] sm:$0xff]
    %v1763 = vld [vmem:[#allocation2 + $0xb14] sm:$0xff]
    %v1764 = vld [vmem:[#allocation2 + $0xb1c] sm:$0xff]
    %v1765 = vld [vmem:[#allocation2 + $0xb24] sm:$0xff]
    %v1766 = vld [vmem:[#allocation2 + $0xb2c] sm:$0xff]
    %v1767 = vld [vmem:[#allocation2 + $0xb34] sm:$0xff]
    %v1768 = vld [vmem:[#allocation2 + $0xb3c] sm:$0xff]
    %v1769 = vld [vmem:[#allocation2 + $0xb44] sm:$0xf]
    %v1770 = vld [vmem:[#allocation2 + $0xc2c] sm:$0xff]
    %v1771 = vld [vmem:[#allocation2 + $0xc34] sm:$0xff]
    %v1772 = vld [vmem:[#allocation2 + $0xc3c] sm:$0xff]
    %v1773 = vld [vmem:[#allocation2 + $0xc44] sm:$0xff]
    %v1774 = vld [vmem:[#allocation2 + $0xc4c] sm:$0xff]
    %v1775 = vld [vmem:[#allocation2 + $0xc54] sm:$0xff]
    %v1776 = vld [vmem:[#allocation2 + $0xc5c] sm:$0xff]
    %v1777 = vld [vmem:[#allocation2 + $0xc64] sm:$0xff]
    %v1778 = vld [vmem:[#allocation2 + $0xc6c] sm:$0xff]
    %v1779 = vld [vmem:[#allocation2 + $0xc74] sm:$0xf]
    %v1780 = vld [vmem:[#allocation2 + $0xd5c] sm:$0xff]
    %v1781 = vld [vmem:[#allocation2 + $0xd64] sm:$0xff]
    %v1782 = vld [vmem:[#allocation2 + $0xd6c] sm:$0xff]
    %v1783 = vld [vmem:[#allocation2 + $0xd74] sm:$0xff]
    %v1784 = vld [vmem:[#allocation2 + $0xd7c] sm:$0xff]
    %v1785 = vld [vmem:[#allocation2 + $0xd84] sm:$0xff]
    %v1786 = vld [vmem:[#allocation2 + $0xd8c] sm:$0xff]
    %v1787 = vld [vmem:[#allocation2 + $0xd94] sm:$0xff]
    %v1788 = vld [vmem:[#allocation2 + $0xd9c] sm:$0xff]
    %v1789 = vld [vmem:[#allocation2 + $0xda4] sm:$0xf]
    %v1790 = vld [vmem:[#allocation2 + $0xe8c] sm:$0xff]
    %v1791 = vld [vmem:[#allocation2 + $0xe94] sm:$0xff]
    %v1792 = vld [vmem:[#allocation2 + $0xe9c] sm:$0xff]
    %v1793 = vld [vmem:[#allocation2 + $0xea4] sm:$0xff]
    %v1794 = vld [vmem:[#allocation2 + $0xeac] sm:$0xff]
    %v1795 = vld [vmem:[#allocation2 + $0xeb4] sm:$0xff]
    %v1796 = vld [vmem:[#allocation2 + $0xebc] sm:$0xff]
    %v1797 = vld [vmem:[#allocation2 + $0xec4] sm:$0xff]
    %v1798 = vld [vmem:[#allocation2 + $0xecc] sm:$0xff]
    %v1799 = vld [vmem:[#allocation2 + $0xed4] sm:$0xf]
    %v1800 = vld [vmem:[#allocation2 + $0xfbc] sm:$0xff]
    %v1801 = vld [vmem:[#allocation2 + $0xfc4] sm:$0xff]
    %v1802 = vld [vmem:[#allocation2 + $0xfcc] sm:$0xff]
    %v1803 = vld [vmem:[#allocation2 + $0xfd4] sm:$0xff]
    %v1804 = vld [vmem:[#allocation2 + $0xfdc] sm:$0xff]
    %v1805 = vld [vmem:[#allocation2 + $0xfe4] sm:$0xff]
    %v1806 = vld [vmem:[#allocation2 + $0xfec] sm:$0xff]
    %v1807 = vld [vmem:[#allocation2 + $0xff4] sm:$0xff]
    %v1808 = vld [vmem:[#allocation2 + $0xffc] sm:$0xff]
    %v1809 = vld [vmem:[#allocation2 + $0x1004] sm:$0xf]
    %v1810 = vld [vmem:[#allocation2 + $0x10ec] sm:$0xff]
    %v1811 = vld [vmem:[#allocation2 + $0x10f4] sm:$0xff]
    %v1812 = vld [vmem:[#allocation2 + $0x10fc] sm:$0xff]
    %v1813 = vld [vmem:[#allocation2 + $0x1104] sm:$0xff]
    %v1814 = vld [vmem:[#allocation2 + $0x110c] sm:$0xff]
    %v1815 = vld [vmem:[#allocation2 + $0x1114] sm:$0xff]
    %v1816 = vld [vmem:[#allocation2 + $0x111c] sm:$0xff]
    %v1817 = vld [vmem:[#allocation2 + $0x1124] sm:$0xff]
    %v1818 = vld [vmem:[#allocation2 + $0x112c] sm:$0xff]
    %v1819 = vld [vmem:[#allocation2 + $0x1134] sm:$0xf]
    %v1820 = vld [vmem:[#allocation2 + $0x121c] sm:$0xff]
    %v1821 = vld [vmem:[#allocation2 + $0x1224] sm:$0xff]
    %v1822 = vld [vmem:[#allocation2 + $0x122c] sm:$0xff]
    %v1823 = vld [vmem:[#allocation2 + $0x1234] sm:$0xff]
    %v1824 = vld [vmem:[#allocation2 + $0x123c] sm:$0xff]
    %v1825 = vld [vmem:[#allocation2 + $0x1244] sm:$0xff]
    %v1826 = vld [vmem:[#allocation2 + $0x124c] sm:$0xff]
    %v1827 = vld [vmem:[#allocation2 + $0x1254] sm:$0xff]
    %v1828 = vld [vmem:[#allocation2 + $0x125c] sm:$0xff]
    %v1829 = vld [vmem:[#allocation2 + $0x1264] sm:$0xf]
    %v1830 = vld [vmem:[#allocation2 + $0x134c] sm:$0xff]
    %v1831 = vld [vmem:[#allocation2 + $0x1354] sm:$0xff]
    %v1832 = vld [vmem:[#allocation2 + $0x135c] sm:$0xff]
    %v1833 = vld [vmem:[#allocation2 + $0x1364] sm:$0xff]
    %v1834 = vld [vmem:[#allocation2 + $0x136c] sm:$0xff]
    %v1835 = vld [vmem:[#allocation2 + $0x1374] sm:$0xff]
    %v1836 = vld [vmem:[#allocation2 + $0x137c] sm:$0xff]
    %v1837 = vld [vmem:[#allocation2 + $0x1384] sm:$0xff]
    %v1838 = vld [vmem:[#allocation2 + $0x138c] sm:$0xff]
    %v1839 = vld [vmem:[#allocation2 + $0x1394] sm:$0xf]
    %v1840 = vld [vmem:[#allocation2 + $0x147c] sm:$0xff]
    %v1841 = vld [vmem:[#allocation2 + $0x1484] sm:$0xff]
    %v1842 = vld [vmem:[#allocation2 + $0x148c] sm:$0xff]
    %v1843 = vld [vmem:[#allocation2 + $0x1494] sm:$0xff]
    %v1844 = vld [vmem:[#allocation2 + $0x149c] sm:$0xff]
    %v1845 = vld [vmem:[#allocation2 + $0x14a4] sm:$0xff]
    %v1846 = vld [vmem:[#allocation2 + $0x14ac] sm:$0xff]
    %v1847 = vld [vmem:[#allocation2 + $0x14b4] sm:$0xff]
    %v1848 = vld [vmem:[#allocation2 + $0x14bc] sm:$0xff]
    %v1849 = vld [vmem:[#allocation2 + $0x14c4] sm:$0xf]
    %v1850 = vld [vmem:[#allocation2 + $0x15ac] sm:$0xff]
    %v1851 = vld [vmem:[#allocation2 + $0x15b4] sm:$0xff]
    %v1852 = vld [vmem:[#allocation2 + $0x15bc] sm:$0xff]
    %v1853 = vld [vmem:[#allocation2 + $0x15c4] sm:$0xff]
    %v1854 = vld [vmem:[#allocation2 + $0x15cc] sm:$0xff]
    %v1855 = vld [vmem:[#allocation2 + $0x15d4] sm:$0xff]
    %v1856 = vld [vmem:[#allocation2 + $0x15dc] sm:$0xff]
    %v1857 = vld [vmem:[#allocation2 + $0x15e4] sm:$0xff]
    %v1858 = vld [vmem:[#allocation2 + $0x15ec] sm:$0xff]
    %v1859 = vld [vmem:[#allocation2 + $0x15f4] sm:$0xf]
    %v2050 = vunpack.c.l.b16 %v1670
    %v2051 = vunpack.c.h.b16 %v1670
    %v2052 = vunpack.c.l.b16 %v1671
    %v2053 = vunpack.c.h.b16 %v1671
    %v2054 = vunpack.c.l.b16 %v1672
    %v2055 = vunpack.c.h.b16 %v1672
    %v2056 = vunpack.c.l.b16 %v1673
    %v2057 = vunpack.c.h.b16 %v1673
    %v2058 = vunpack.c.l.b16 %v1674
    %v2059 = vunpack.c.h.b16 %v1674
    %v2060 = vunpack.c.l.b16 %v1675
    %v2061 = vunpack.c.h.b16 %v1675
    %v2062 = vunpack.c.l.b16 %v1676
    %v2063 = vunpack.c.h.b16 %v1676
    %v2064 = vunpack.c.l.b16 %v1677
    %v2065 = vunpack.c.h.b16 %v1677
    %v2066 = vunpack.c.l.b16 %v1678
    %v2067 = vunpack.c.h.b16 %v1678
    %v2068 = vunpack.c.l.b16 %v1679
    %v2069 = vunpack.c.l.b16 %v1680
    %v2070 = vunpack.c.h.b16 %v1680
    %v2071 = vunpack.c.l.b16 %v1681
    %v2072 = vunpack.c.h.b16 %v1681
    %v2073 = vunpack.c.l.b16 %v1682
    %v2074 = vunpack.c.h.b16 %v1682
    %v2075 = vunpack.c.l.b16 %v1683
    %v2076 = vunpack.c.h.b16 %v1683
    %v2077 = vunpack.c.l.b16 %v1684
    %v2078 = vunpack.c.h.b16 %v1684
    %v2079 = vunpack.c.l.b16 %v1685
    %v2080 = vunpack.c.h.b16 %v1685
    %v2081 = vunpack.c.l.b16 %v1686
    %v2082 = vunpack.c.h.b16 %v1686
    %v2083 = vunpack.c.l.b16 %v1687
    %v2084 = vunpack.c.h.b16 %v1687
    %v2085 = vunpack.c.l.b16 %v1688
    %v2086 = vunpack.c.h.b16 %v1688
    %v2087 = vunpack.c.l.b16 %v1689
    %v2088 = vunpack.c.l.b16 %v1690
    %v2089 = vunpack.c.h.b16 %v1690
    %v2090 = vunpack.c.l.b16 %v1691
    %v2091 = vunpack.c.h.b16 %v1691
    %v2092 = vunpack.c.l.b16 %v1692
    %v2093 = vunpack.c.h.b16 %v1692
    %v2094 = vunpack.c.l.b16 %v1693
    %v2095 = vunpack.c.h.b16 %v1693
    %v2096 = vunpack.c.l.b16 %v1694
    %v2097 = vunpack.c.h.b16 %v1694
    %v2098 = vunpack.c.l.b16 %v1695
    %v2099 = vunpack.c.h.b16 %v1695
    %v2100 = vunpack.c.l.b16 %v1696
    %v2101 = vunpack.c.h.b16 %v1696
    %v2102 = vunpack.c.l.b16 %v1697
    %v2103 = vunpack.c.h.b16 %v1697
    %v2104 = vunpack.c.l.b16 %v1698
    %v2105 = vunpack.c.h.b16 %v1698
    %v2106 = vunpack.c.l.b16 %v1699
    %v2107 = vunpack.c.l.b16 %v1700
    %v2108 = vunpack.c.h.b16 %v1700
    %v2109 = vunpack.c.l.b16 %v1701
    %v2110 = vunpack.c.h.b16 %v1701
    %v2111 = vunpack.c.l.b16 %v1702
    %v2112 = vunpack.c.h.b16 %v1702
    %v2113 = vunpack.c.l.b16 %v1703
    %v2114 = vunpack.c.h.b16 %v1703
    %v2115 = vunpack.c.l.b16 %v1704
    %v2116 = vunpack.c.h.b16 %v1704
    %v2117 = vunpack.c.l.b16 %v1705
    %v2118 = vunpack.c.h.b16 %v1705
    %v2119 = vunpack.c.l.b16 %v1706
    %v2120 = vunpack.c.h.b16 %v1706
    %v2121 = vunpack.c.l.b16 %v1707
    %v2122 = vunpack.c.h.b16 %v1707
    %v2123 = vunpack.c.l.b16 %v1708
    %v2124 = vunpack.c.h.b16 %v1708
    %v2125 = vunpack.c.l.b16 %v1709
    %v2126 = vunpack.c.l.b16 %v1710
    %v2127 = vunpack.c.h.b16 %v1710
    %v2128 = vunpack.c.l.b16 %v1711
    %v2129 = vunpack.c.h.b16 %v1711
    %v2130 = vunpack.c.l.b16 %v1712
    %v2131 = vunpack.c.h.b16 %v1712
    %v2132 = vunpack.c.l.b16 %v1713
    %v2133 = vunpack.c.h.b16 %v1713
    %v2134 = vunpack.c.l.b16 %v1714
    %v2135 = vunpack.c.h.b16 %v1714
    %v2136 = vunpack.c.l.b16 %v1715
    %v2137 = vunpack.c.h.b16 %v1715
    %v2138 = vunpack.c.l.b16 %v1716
    %v2139 = vunpack.c.h.b16 %v1716
    %v2140 = vunpack.c.l.b16 %v1717
    %v2141 = vunpack.c.h.b16 %v1717
    %v2142 = vunpack.c.l.b16 %v1718
    %v2143 = vunpack.c.h.b16 %v1718
    %v2144 = vunpack.c.l.b16 %v1719
    %v2145 = vunpack.c.l.b16 %v1720
    %v2146 = vunpack.c.h.b16 %v1720
    %v2147 = vunpack.c.l.b16 %v1721
    %v2148 = vunpack.c.h.b16 %v1721
    %v2149 = vunpack.c.l.b16 %v1722
    %v2150 = vunpack.c.h.b16 %v1722
    %v2151 = vunpack.c.l.b16 %v1723
    %v2152 = vunpack.c.h.b16 %v1723
    %v2153 = vunpack.c.l.b16 %v1724
    %v2154 = vunpack.c.h.b16 %v1724
    %v2155 = vunpack.c.l.b16 %v1725
    %v2156 = vunpack.c.h.b16 %v1725
    %v2157 = vunpack.c.l.b16 %v1726
    %v2158 = vunpack.c.h.b16 %v1726
    %v2159 = vunpack.c.l.b16 %v1727
    %v2160 = vunpack.c.h.b16 %v1727
    %v2161 = vunpack.c.l.b16 %v1728
    %v2162 = vunpack.c.h.b16 %v1728
    %v2163 = vunpack.c.l.b16 %v1729
    %v2164 = vunpack.c.l.b16 %v1730
    %v2165 = vunpack.c.h.b16 %v1730
    %v2166 = vunpack.c.l.b16 %v1731
    %v2167 = vunpack.c.h.b16 %v1731
    %v2168 = vunpack.c.l.b16 %v1732
    %v2169 = vunpack.c.h.b16 %v1732
    %v2170 = vunpack.c.l.b16 %v1733
    %v2171 = vunpack.c.h.b16 %v1733
    %v2172 = vunpack.c.l.b16 %v1734
    %v2173 = vunpack.c.h.b16 %v1734
    %v2174 = vunpack.c.l.b16 %v1735
    %v2175 = vunpack.c.h.b16 %v1735
    %v2176 = vunpack.c.l.b16 %v1736
    %v2177 = vunpack.c.h.b16 %v1736
    %v2178 = vunpack.c.l.b16 %v1737
    %v2179 = vunpack.c.h.b16 %v1737
    %v2180 = vunpack.c.l.b16 %v1738
    %v2181 = vunpack.c.h.b16 %v1738
    %v2182 = vunpack.c.l.b16 %v1739
    %v2183 = vunpack.c.l.b16 %v1740
    %v2184 = vunpack.c.h.b16 %v1740
    %v2185 = vunpack.c.l.b16 %v1741
    %v2186 = vunpack.c.h.b16 %v1741
    %v2187 = vunpack.c.l.b16 %v1742
    %v2188 = vunpack.c.h.b16 %v1742
    %v2189 = vunpack.c.l.b16 %v1743
    %v2190 = vunpack.c.h.b16 %v1743
    %v2191 = vunpack.c.l.b16 %v1744
    %v2192 = vunpack.c.h.b16 %v1744
    %v2193 = vunpack.c.l.b16 %v1745
    %v2194 = vunpack.c.h.b16 %v1745
    %v2195 = vunpack.c.l.b16 %v1746
    %v2196 = vunpack.c.h.b16 %v1746
    %v2197 = vunpack.c.l.b16 %v1747
    %v2198 = vunpack.c.h.b16 %v1747
    %v2199 = vunpack.c.l.b16 %v1748
    %v2200 = vunpack.c.h.b16 %v1748
    %v2201 = vunpack.c.l.b16 %v1749
    %v2202 = vunpack.c.l.b16 %v1750
    %v2203 = vunpack.c.h.b16 %v1750
    %v2204 = vunpack.c.l.b16 %v1751
    %v2205 = vunpack.c.h.b16 %v1751
    %v2206 = vunpack.c.l.b16 %v1752
    %v2207 = vunpack.c.h.b16 %v1752
    %v2208 = vunpack.c.l.b16 %v1753
    %v2209 = vunpack.c.h.b16 %v1753
    %v2210 = vunpack.c.l.b16 %v1754
    %v2211 = vunpack.c.h.b16 %v1754
    %v2212 = vunpack.c.l.b16 %v1755
    %v2213 = vunpack.c.h.b16 %v1755
    %v2214 = vunpack.c.l.b16 %v1756
    %v2215 = vunpack.c.h.b16 %v1756
    %v2216 = vunpack.c.l.b16 %v1757
    %v2217 = vunpack.c.h.b16 %v1757
    %v2218 = vunpack.c.l.b16 %v1758
    %v2219 = vunpack.c.h.b16 %v1758
    %v2220 = vunpack.c.l.b16 %v1759
    %v2221 = vunpack.c.l.b16 %v1760
    %v2222 = vunpack.c.h.b16 %v1760
    %v2223 = vunpack.c.l.b16 %v1761
    %v2224 = vunpack.c.h.b16 %v1761
    %v2225 = vunpack.c.l.b16 %v1762
    %v2226 = vunpack.c.h.b16 %v1762
    %v2227 = vunpack.c.l.b16 %v1763
    %v2228 = vunpack.c.h.b16 %v1763
    %v2229 = vunpack.c.l.b16 %v1764
    %v2230 = vunpack.c.h.b16 %v1764
    %v2231 = vunpack.c.l.b16 %v1765
    %v2232 = vunpack.c.h.b16 %v1765
    %v2233 = vunpack.c.l.b16 %v1766
    %v2234 = vunpack.c.h.b16 %v1766
    %v2235 = vunpack.c.l.b16 %v1767
    %v2236 = vunpack.c.h.b16 %v1767
    %v2237 = vunpack.c.l.b16 %v1768
    %v2238 = vunpack.c.h.b16 %v1768
    %v2239 = vunpack.c.l.b16 %v1769
    %v2240 = vunpack.c.l.b16 %v1770
    %v2241 = vunpack.c.h.b16 %v1770
    %v2242 = vunpack.c.l.b16 %v1771
    %v2243 = vunpack.c.h.b16 %v1771
    %v2244 = vunpack.c.l.b16 %v1772
    %v2245 = vunpack.c.h.b16 %v1772
    %v2246 = vunpack.c.l.b16 %v1773
    %v2247 = vunpack.c.h.b16 %v1773
    %v2248 = vunpack.c.l.b16 %v1774
    %v2249 = vunpack.c.h.b16 %v1774
    %v2250 = vunpack.c.l.b16 %v1775
    %v2251 = vunpack.c.h.b16 %v1775
    %v2252 = vunpack.c.l.b16 %v1776
    %v2253 = vunpack.c.h.b16 %v1776
    %v2254 = vunpack.c.l.b16 %v1777
    %v2255 = vunpack.c.h.b16 %v1777
    %v2256 = vunpack.c.l.b16 %v1778
    %v2257 = vunpack.c.h.b16 %v1778
    %v2258 = vunpack.c.l.b16 %v1779
    %v2259 = vunpack.c.l.b16 %v1780
    %v2260 = vunpack.c.h.b16 %v1780
    %v2261 = vunpack.c.l.b16 %v1781
    %v2262 = vunpack.c.h.b16 %v1781
    %v2263 = vunpack.c.l.b16 %v1782
    %v2264 = vunpack.c.h.b16 %v1782
    %v2265 = vunpack.c.l.b16 %v1783
    %v2266 = vunpack.c.h.b16 %v1783
    %v2267 = vunpack.c.l.b16 %v1784
    %v2268 = vunpack.c.h.b16 %v1784
    %v2269 = vunpack.c.l.b16 %v1785
    %v2270 = vunpack.c.h.b16 %v1785
    %v2271 = vunpack.c.l.b16 %v1786
    %v2272 = vunpack.c.h.b16 %v1786
    %v2273 = vunpack.c.l.b16 %v1787
    %v2274 = vunpack.c.h.b16 %v1787
    %v2275 = vunpack.c.l.b16 %v1788
    %v2276 = vunpack.c.h.b16 %v1788
    %v2277 = vunpack.c.l.b16 %v1789
    %v2278 = vunpack.c.l.b16 %v1790
    %v2279 = vunpack.c.h.b16 %v1790
    %v2280 = vunpack.c.l.b16 %v1791
    %v2281 = vunpack.c.h.b16 %v1791
    %v2282 = vunpack.c.l.b16 %v1792
    %v2283 = vunpack.c.h.b16 %v1792
    %v2284 = vunpack.c.l.b16 %v1793
    %v2285 = vunpack.c.h.b16 %v1793
    %v2286 = vunpack.c.l.b16 %v1794
    %v2287 = vunpack.c.h.b16 %v1794
    %v2288 = vunpack.c.l.b16 %v1795
    %v2289 = vunpack.c.h.b16 %v1795
    %v2290 = vunpack.c.l.b16 %v1796
    %v2291 = vunpack.c.h.b16 %v1796
    %v2292 = vunpack.c.l.b16 %v1797
    %v2293 = vunpack.c.h.b16 %v1797
    %v2294 = vunpack.c.l.b16 %v1798
    %v2295 = vunpack.c.h.b16 %v1798
    %v2296 = vunpack.c.l.b16 %v1799
    %v2297 = vunpack.c.l.b16 %v1800
    %v2298 = vunpack.c.h.b16 %v1800
    %v2299 = vunpack.c.l.b16 %v1801
    %v2300 = vunpack.c.h.b16 %v1801
    %v2301 = vunpack.c.l.b16 %v1802
    %v2302 = vunpack.c.h.b16 %v1802
    %v2303 = vunpack.c.l.b16 %v1803
    %v2304 = vunpack.c.h.b16 %v1803
    %v2305 = vunpack.c.l.b16 %v1804
    %v2306 = vunpack.c.h.b16 %v1804
    %v2307 = vunpack.c.l.b16 %v1805
    %v2308 = vunpack.c.h.b16 %v1805
    %v2309 = vunpack.c.l.b16 %v1806
    %v2310 = vunpack.c.h.b16 %v1806
    %v2311 = vunpack.c.l.b16 %v1807
    %v2312 = vunpack.c.h.b16 %v1807
    %v2313 = vunpack.c.l.b16 %v1808
    %v2314 = vunpack.c.h.b16 %v1808
    %v2315 = vunpack.c.l.b16 %v1809
    %v2316 = vunpack.c.l.b16 %v1810
    %v2317 = vunpack.c.h.b16 %v1810
    %v2318 = vunpack.c.l.b16 %v1811
    %v2319 = vunpack.c.h.b16 %v1811
    %v2320 = vunpack.c.l.b16 %v1812
    %v2321 = vunpack.c.h.b16 %v1812
    %v2322 = vunpack.c.l.b16 %v1813
    %v2323 = vunpack.c.h.b16 %v1813
    %v2324 = vunpack.c.l.b16 %v1814
    %v2325 = vunpack.c.h.b16 %v1814
    %v2326 = vunpack.c.l.b16 %v1815
    %v2327 = vunpack.c.h.b16 %v1815
    %v2328 = vunpack.c.l.b16 %v1816
    %v2329 = vunpack.c.h.b16 %v1816
    %v2330 = vunpack.c.l.b16 %v1817
    %v2331 = vunpack.c.h.b16 %v1817
    %v2332 = vunpack.c.l.b16 %v1818
    %v2333 = vunpack.c.h.b16 %v1818
    %v2334 = vunpack.c.l.b16 %v1819
    %v2335 = vunpack.c.l.b16 %v1820
    %v2336 = vunpack.c.h.b16 %v1820
    %v2337 = vunpack.c.l.b16 %v1821
    %v2338 = vunpack.c.h.b16 %v1821
    %v2339 = vunpack.c.l.b16 %v1822
    %v2340 = vunpack.c.h.b16 %v1822
    %v2341 = vunpack.c.l.b16 %v1823
    %v2342 = vunpack.c.h.b16 %v1823
    %v2343 = vunpack.c.l.b16 %v1824
    %v2344 = vunpack.c.h.b16 %v1824
    %v2345 = vunpack.c.l.b16 %v1825
    %v2346 = vunpack.c.h.b16 %v1825
    %v2347 = vunpack.c.l.b16 %v1826
    %v2348 = vunpack.c.h.b16 %v1826
    %v2349 = vunpack.c.l.b16 %v1827
    %v2350 = vunpack.c.h.b16 %v1827
    %v2351 = vunpack.c.l.b16 %v1828
    %v2352 = vunpack.c.h.b16 %v1828
    %v2353 = vunpack.c.l.b16 %v1829
    %v2354 = vunpack.c.l.b16 %v1830
    %v2355 = vunpack.c.h.b16 %v1830
    %v2356 = vunpack.c.l.b16 %v1831
    %v2357 = vunpack.c.h.b16 %v1831
    %v2358 = vunpack.c.l.b16 %v1832
    %v2359 = vunpack.c.h.b16 %v1832
    %v2360 = vunpack.c.l.b16 %v1833
    %v2361 = vunpack.c.h.b16 %v1833
    %v2362 = vunpack.c.l.b16 %v1834
    %v2363 = vunpack.c.h.b16 %v1834
    %v2364 = vunpack.c.l.b16 %v1835
    %v2365 = vunpack.c.h.b16 %v1835
    %v2366 = vunpack.c.l.b16 %v1836
    %v2367 = vunpack.c.h.b16 %v1836
    %v2368 = vunpack.c.l.b16 %v1837
    %v2369 = vunpack.c.h.b16 %v1837
    %v2370 = vunpack.c.l.b16 %v1838
    %v2371 = vunpack.c.h.b16 %v1838
    %v2372 = vunpack.c.l.b16 %v1839
    %v2373 = vunpack.c.l.b16 %v1840
    %v2374 = vunpack.c.h.b16 %v1840
    %v2375 = vunpack.c.l.b16 %v1841
    %v2376 = vunpack.c.h.b16 %v1841
    %v2377 = vunpack.c.l.b16 %v1842
    %v2378 = vunpack.c.h.b16 %v1842
    %v2379 = vunpack.c.l.b16 %v1843
    %v2380 = vunpack.c.h.b16 %v1843
    %v2381 = vunpack.c.l.b16 %v1844
    %v2382 = vunpack.c.h.b16 %v1844
    %v2383 = vunpack.c.l.b16 %v1845
    %v2384 = vunpack.c.h.b16 %v1845
    %v2385 = vunpack.c.l.b16 %v1846
    %v2386 = vunpack.c.h.b16 %v1846
    %v2387 = vunpack.c.l.b16 %v1847
    %v2388 = vunpack.c.h.b16 %v1847
    %v2389 = vunpack.c.l.b16 %v1848
    %v2390 = vunpack.c.h.b16 %v1848
    %v2391 = vunpack.c.l.b16 %v1849
    %v2392 = vunpack.c.l.b16 %v1850
    %v2393 = vunpack.c.h.b16 %v1850
    %v2394 = vunpack.c.l.b16 %v1851
    %v2395 = vunpack.c.h.b16 %v1851
    %v2396 = vunpack.c.l.b16 %v1852
    %v2397 = vunpack.c.h.b16 %v1852
    %v2398 = vunpack.c.l.b16 %v1853
    %v2399 = vunpack.c.h.b16 %v1853
    %v2400 = vunpack.c.l.b16 %v1854
    %v2401 = vunpack.c.h.b16 %v1854
    %v2402 = vunpack.c.l.b16 %v1855
    %v2403 = vunpack.c.h.b16 %v1855
    %v2404 = vunpack.c.l.b16 %v1856
    %v2405 = vunpack.c.h.b16 %v1856
    %v2406 = vunpack.c.l.b16 %v1857
    %v2407 = vunpack.c.h.b16 %v1857
    %v2408 = vunpack.c.l.b16 %v1858
    %v2409 = vunpack.c.h.b16 %v1858
    %v2410 = vunpack.c.l.b16 %v1859
    %v2411 = vpack.c.b16 %v2069, %v2050
    %v2412 = vpack.c.b16 %v2070, %v2051
    %v2413 = vpack.c.b16 %v2071, %v2052
    %v2414 = vpack.c.b16 %v2072, %v2053
    %v2415 = vpack.c.b16 %v2073, %v2054
    %v2416 = vpack.c.b16 %v2074, %v2055
    %v2417 = vpack.c.b16 %v2075, %v2056
    %v2418 = vpack.c.b16 %v2076, %v2057
    %v2419 = vpack.c.b16 %v2077, %v2058
    %v2420 = vpack.c.b16 %v2078, %v2059
    %v2421 = vpack.c.b16 %v2079, %v2060
    %v2422 = vpack.c.b16 %v2080, %v2061
    %v2423 = vpack.c.b16 %v2081, %v2062
    %v2424 = vpack.c.b16 %v2082, %v2063
    %v2425 = vpack.c.b16 %v2083, %v2064
    %v2426 = vpack.c.b16 %v2084, %v2065
    %v2427 = vpack.c.b16 %v2085, %v2066
    %v2428 = vpack.c.b16 %v2086, %v2067
    %v2429 = vpack.c.b16 %v2087, %v2068
    %v2430 = vpack.c.b16 %v2107, %v2088
    %v2431 = vpack.c.b16 %v2108, %v2089
    %v2432 = vpack.c.b16 %v2109, %v2090
    %v2433 = vpack.c.b16 %v2110, %v2091
    %v2434 = vpack.c.b16 %v2111, %v2092
    %v2435 = vpack.c.b16 %v2112, %v2093
    %v2436 = vpack.c.b16 %v2113, %v2094
    %v2437 = vpack.c.b16 %v2114, %v2095
    %v2438 = vpack.c.b16 %v2115, %v2096
    %v2439 = vpack.c.b16 %v2116, %v2097
    %v2440 = vpack.c.b16 %v2117, %v2098
    %v2441 = vpack.c.b16 %v2118, %v2099
    %v2442 = vpack.c.b16 %v2119, %v2100
    %v2443 = vpack.c.b16 %v2120, %v2101
    %v2444 = vpack.c.b16 %v2121, %v2102
    %v2445 = vpack.c.b16 %v2122, %v2103
    %v2446 = vpack.c.b16 %v2123, %v2104
    %v2447 = vpack.c.b16 %v2124, %v2105
    %v2448 = vpack.c.b16 %v2125, %v2106
    %v2449 = vpack.c.b16 %v2145, %v2126
    %v2450 = vpack.c.b16 %v2146, %v2127
    %v2451 = vpack.c.b16 %v2147, %v2128
    %v2452 = vpack.c.b16 %v2148, %v2129
    %v2453 = vpack.c.b16 %v2149, %v2130
    %v2454 = vpack.c.b16 %v2150, %v2131
    %v2455 = vpack.c.b16 %v2151, %v2132
    %v2456 = vpack.c.b16 %v2152, %v2133
    %v2457 = vpack.c.b16 %v2153, %v2134
    %v2458 = vpack.c.b16 %v2154, %v2135
    %v2459 = vpack.c.b16 %v2155, %v2136
    %v2460 = vpack.c.b16 %v2156, %v2137
    %v2461 = vpack.c.b16 %v2157, %v2138
    %v2462 = vpack.c.b16 %v2158, %v2139
    %v2463 = vpack.c.b16 %v2159, %v2140
    %v2464 = vpack.c.b16 %v2160, %v2141
    %v2465 = vpack.c.b16 %v2161, %v2142
    %v2466 = vpack.c.b16 %v2162, %v2143
    %v2467 = vpack.c.b16 %v2163, %v2144
    %v2468 = vpack.c.b16 %v2183, %v2164
    %v2469 = vpack.c.b16 %v2184, %v2165
    %v2470 = vpack.c.b16 %v2185, %v2166
    %v2471 = vpack.c.b16 %v2186, %v2167
    %v2472 = vpack.c.b16 %v2187, %v2168
    %v2473 = vpack.c.b16 %v2188, %v2169
    %v2474 = vpack.c.b16 %v2189, %v2170
    %v2475 = vpack.c.b16 %v2190, %v2171
    %v2476 = vpack.c.b16 %v2191, %v2172
    %v2477 = vpack.c.b16 %v2192, %v2173
    %v2478 = vpack.c.b16 %v2193, %v2174
    %v2479 = vpack.c.b16 %v2194, %v2175
    %v2480 = vpack.c.b16 %v2195, %v2176
    %v2481 = vpack.c.b16 %v2196, %v2177
    %v2482 = vpack.c.b16 %v2197, %v2178
    %v2483 = vpack.c.b16 %v2198, %v2179
    %v2484 = vpack.c.b16 %v2199, %v2180
    %v2485 = vpack.c.b16 %v2200, %v2181
    %v2486 = vpack.c.b16 %v2201, %v2182
    %v2487 = vpack.c.b16 %v2221, %v2202
    %v2488 = vpack.c.b16 %v2222, %v2203
    %v2489 = vpack.c.b16 %v2223, %v2204
    %v2490 = vpack.c.b16 %v2224, %v2205
    %v2491 = vpack.c.b16 %v2225, %v2206
    %v2492 = vpack.c.b16 %v2226, %v2207
    %v2493 = vpack.c.b16 %v2227, %v2208
    %v2494 = vpack.c.b16 %v2228, %v2209
    %v2495 = vpack.c.b16 %v2229, %v2210
    %v2496 = vpack.c.b16 %v2230, %v2211
    %v2497 = vpack.c.b16 %v2231, %v2212
    %v2498 = vpack.c.b16 %v2232, %v2213
    %v2499 = vpack.c.b16 %v2233, %v2214
    %v2500 = vpack.c.b16 %v2234, %v2215
    %v2501 = vpack.c.b16 %v2235, %v2216
    %v2502 = vpack.c.b16 %v2236, %v2217
    %v2503 = vpack.c.b16 %v2237, %v2218
    %v2504 = vpack.c.b16 %v2238, %v2219
    %v2505 = vpack.c.b16 %v2239, %v2220
    %v2506 = vpack.c.b16 %v2259, %v2240
    %v2507 = vpack.c.b16 %v2260, %v2241
    %v2508 = vpack.c.b16 %v2261, %v2242
    %v2509 = vpack.c.b16 %v2262, %v2243
    %v2510 = vpack.c.b16 %v2263, %v2244
    %v2511 = vpack.c.b16 %v2264, %v2245
    %v2512 = vpack.c.b16 %v2265, %v2246
    %v2513 = vpack.c.b16 %v2266, %v2247
    %v2514 = vpack.c.b16 %v2267, %v2248
    %v2515 = vpack.c.b16 %v2268, %v2249
    %v2516 = vpack.c.b16 %v2269, %v2250
    %v2517 = vpack.c.b16 %v2270, %v2251
    %v2518 = vpack.c.b16 %v2271, %v2252
    %v2519 = vpack.c.b16 %v2272, %v2253
    %v2520 = vpack.c.b16 %v2273, %v2254
    %v2521 = vpack.c.b16 %v2274, %v2255
    %v2522 = vpack.c.b16 %v2275, %v2256
    %v2523 = vpack.c.b16 %v2276, %v2257
    %v2524 = vpack.c.b16 %v2277, %v2258
    %v2525 = vpack.c.b16 %v2297, %v2278
    %v2526 = vpack.c.b16 %v2298, %v2279
    %v2527 = vpack.c.b16 %v2299, %v2280
    %v2528 = vpack.c.b16 %v2300, %v2281
    %v2529 = vpack.c.b16 %v2301, %v2282
    %v2530 = vpack.c.b16 %v2302, %v2283
    %v2531 = vpack.c.b16 %v2303, %v2284
    %v2532 = vpack.c.b16 %v2304, %v2285
    %v2533 = vpack.c.b16 %v2305, %v2286
    %v2534 = vpack.c.b16 %v2306, %v2287
    %v2535 = vpack.c.b16 %v2307, %v2288
    %v2536 = vpack.c.b16 %v2308, %v2289
    %v2537 = vpack.c.b16 %v2309, %v2290
    %v2538 = vpack.c.b16 %v2310, %v2291
    %v2539 = vpack.c.b16 %v2311, %v2292
    %v2540 = vpack.c.b16 %v2312, %v2293
    %v2541 = vpack.c.b16 %v2313, %v2294
    %v2542 = vpack.c.b16 %v2314, %v2295
    %v2543 = vpack.c.b16 %v2315, %v2296
    %v2544 = vpack.c.b16 %v2335, %v2316
    %v2545 = vpack.c.b16 %v2336, %v2317
    %v2546 = vpack.c.b16 %v2337, %v2318
    %v2547 = vpack.c.b16 %v2338, %v2319
    %v2548 = vpack.c.b16 %v2339, %v2320
    %v2549 = vpack.c.b16 %v2340, %v2321
    %v2550 = vpack.c.b16 %v2341, %v2322
    %v2551 = vpack.c.b16 %v2342, %v2323
    %v2552 = vpack.c.b16 %v2343, %v2324
    %v2553 = vpack.c.b16 %v2344, %v2325
    %v2554 = vpack.c.b16 %v2345, %v2326
    %v2555 = vpack.c.b16 %v2346, %v2327
    %v2556 = vpack.c.b16 %v2347, %v2328
    %v2557 = vpack.c.b16 %v2348, %v2329
    %v2558 = vpack.c.b16 %v2349, %v2330
    %v2559 = vpack.c.b16 %v2350, %v2331
    %v2560 = vpack.c.b16 %v2351, %v2332
    %v2561 = vpack.c.b16 %v2352, %v2333
    %v2562 = vpack.c.b16 %v2353, %v2334
    %v2563 = vpack.c.b16 %v2373, %v2354
    %v2564 = vpack.c.b16 %v2374, %v2355
    %v2565 = vpack.c.b16 %v2375, %v2356
    %v2566 = vpack.c.b16 %v2376, %v2357
    %v2567 = vpack.c.b16 %v2377, %v2358
    %v2568 = vpack.c.b16 %v2378, %v2359
    %v2569 = vpack.c.b16 %v2379, %v2360
    %v2570 = vpack.c.b16 %v2380, %v2361
    %v2571 = vpack.c.b16 %v2381, %v2362
    %v2572 = vpack.c.b16 %v2382, %v2363
    %v2573 = vpack.c.b16 %v2383, %v2364
    %v2574 = vpack.c.b16 %v2384, %v2365
    %v2575 = vpack.c.b16 %v2385, %v2366
    %v2576 = vpack.c.b16 %v2386, %v2367
    %v2577 = vpack.c.b16 %v2387, %v2368
    %v2578 = vpack.c.b16 %v2388, %v2369
    %v2579 = vpack.c.b16 %v2389, %v2370
    %v2580 = vpack.c.b16 %v2390, %v2371
    %v2581 = vpack.c.b16 %v2391, %v2372
    %v2582 = vpack.c.b16 %v2392, %v2392
    %v2583 = vpack.c.b16 %v2393, %v2393
    %v2584 = vpack.c.b16 %v2394, %v2394
    %v2585 = vpack.c.b16 %v2395, %v2395
    %v2586 = vpack.c.b16 %v2396, %v2396
    %v2587 = vpack.c.b16 %v2397, %v2397
    %v2588 = vpack.c.b16 %v2398, %v2398
    %v2589 = vpack.c.b16 %v2399, %v2399
    %v2590 = vpack.c.b16 %v2400, %v2400
    %v2591 = vpack.c.b16 %v2401, %v2401
    %v2592 = vpack.c.b16 %v2402, %v2402
    %v2593 = vpack.c.b16 %v2403, %v2403
    %v2594 = vpack.c.b16 %v2404, %v2404
    %v2595 = vpack.c.b16 %v2405, %v2405
    %v2596 = vpack.c.b16 %v2406, %v2406
    %v2597 = vpack.c.b16 %v2407, %v2407
    %v2598 = vpack.c.b16 %v2408, %v2408
    %v2599 = vpack.c.b16 %v2409, %v2409
    %v2600 = vpack.c.b16 %v2410, %v2410
    %v2773 = vsel %vm1147, %v2582, 0
    %v2776 = vsel %vm1147, %v2583, 0
    %v2779 = vsel %vm1147, %v2584, 0
    %v2782 = vsel %vm1147, %v2585, 0
    %v2785 = vsel %vm1147, %v2586, 0
    %v2788 = vsel %vm1147, %v2587, 0
    %v2791 = vsel %vm1147, %v2588, 0
    %v2794 = vsel %vm1147, %v2589, 0
    %v2797 = vsel %vm1147, %v2590, 0
    %v2800 = vsel %vm1147, %v2591, 0
    %v2803 = vsel %vm1147, %v2592, 0
    %v2806 = vsel %vm1147, %v2593, 0
    %v2809 = vsel %vm1147, %v2594, 0
    %v2812 = vsel %vm1147, %v2595, 0
    %v2815 = vsel %vm1147, %v2596, 0
    %v2818 = vsel %vm1147, %v2597, 0
    %v2821 = vsel %vm1147, %v2598, 0
    %v2824 = vsel %vm1147, %v2599, 0
    %v2827 = vsel %vm1147, %v2600, 0
    %2829 = vmatprep.subr.bf16.mxu0 %v2412
    %2830 = vmatpush1.bf16.msra.mxu0 %v2411
    %2831 = vmatprep.subr.bf16.mxu0 %v2431
    %2832 = vmatpush1.bf16.msra.mxu0 %v2430
    %2833 = vmatprep.subr.bf16.mxu0 %v2450
    %2834 = vmatpush1.bf16.msra.mxu0 %v2449
    %2835 = vmatprep.subr.bf16.mxu0 %v2469
    %2836 = vmatpush1.bf16.msra.mxu0 %v2468
    %2837 = vmatprep.subr.bf16.mxu0 %v2488
    %2838 = vmatpush1.bf16.msra.mxu0 %v2487
    %2839 = vmatprep.subr.bf16.mxu0 %v2507
    %2840 = vmatpush1.bf16.msra.mxu0 %v2506
    %2841 = vmatprep.subr.bf16.mxu0 %v2526
    %2842 = vmatpush1.bf16.msra.mxu0 %v2525
    %2843 = vmatprep.subr.bf16.mxu0 %v2545
    %2844 = vmatpush1.bf16.msra.mxu0 %v2544
    %2845 = vmatprep.subr.bf16.mxu0 %v2564
    %2846 = vmatpush1.bf16.msra.mxu0 %v2563
    %2847 = vmatprep.subr.bf16.mxu0 %v2776
    %2848 = vmatpush1.bf16.msra.mxu0 %v2773
    %2849 = vmatprep.subr.bf16.mxu0 0
    %2850 = vmatpush1.bf16.msra.mxu0 0
    %2851 = vmatprep.subr.bf16.mxu0 0
    %2852 = vmatpush1.bf16.msra.mxu0 0
    %2853 = vmatprep.subr.bf16.mxu0 0
    %2854 = vmatpush1.bf16.msra.mxu0 0
    %2855 = vmatprep.subr.bf16.mxu0 0
    %2856 = vmatpush1.bf16.msra.mxu0 0
    %2857 = vmatprep.subr.bf16.mxu0 0
    %2858 = vmatpush1.bf16.msra.mxu0 0
    %2859 = vmatprep.subr.bf16.mxu0 0
    %2860 = vmatpush1.bf16.msra.mxu0 0
    %2861 = vmatprep.mubr.bf16.mxu0 %v1145
    %2862 = vmatmul.mubr.bf16.gmra.mrb[0].mxu0 %v228
    %v2863 = vpop.f32.mrb[0].mxu0
    %v2864 = vadd.f32 0.0, %v2863
    %v2865 = vpop.f32.mrb[0].mxu0
    %v2866 = vadd.f32 0.0, %v2865
    %v2867 = vpop.f32.mrb[0].mxu0
    %v2868 = vpop.f32.mrb[0].mxu0
    %2869 = vdwg.mxu0
    %2870 = vmatprep.subr.bf16.mxu0 %v2414
    %2871 = vmatpush1.bf16.msra.mxu0 %v2413
    %2872 = vmatprep.subr.bf16.mxu0 %v2433
    %2873 = vmatpush1.bf16.msra.mxu0 %v2432
    %2874 = vmatprep.subr.bf16.mxu0 %v2452
    %2875 = vmatpush1.bf16.msra.mxu0 %v2451
    %2876 = vmatprep.subr.bf16.mxu0 %v2471
    %2877 = vmatpush1.bf16.msra.mxu0 %v2470
    %2878 = vmatprep.subr.bf16.mxu0 %v2490
    %2879 = vmatpush1.bf16.msra.mxu0 %v2489
    %2880 = vmatprep.subr.bf16.mxu0 %v2509
    %2881 = vmatpush1.bf16.msra.mxu0 %v2508
    %2882 = vmatprep.subr.bf16.mxu0 %v2528
    %2883 = vmatpush1.bf16.msra.mxu0 %v2527
    %2884 = vmatprep.subr.bf16.mxu0 %v2547
    %2885 = vmatpush1.bf16.msra.mxu0 %v2546
    %2886 = vmatprep.subr.bf16.mxu0 %v2566
    %2887 = vmatpush1.bf16.msra.mxu0 %v2565
    %2888 = vmatprep.subr.bf16.mxu0 %v2782
    %2889 = vmatpush1.bf16.msra.mxu0 %v2779
    %2890 = vmatprep.subr.bf16.mxu0 0
    %2891 = vmatpush1.bf16.msra.mxu0 0
    %2892 = vmatprep.subr.bf16.mxu0 0
    %2893 = vmatpush1.bf16.msra.mxu0 0
    %2894 = vmatprep.subr.bf16.mxu0 0
    %2895 = vmatpush1.bf16.msra.mxu0 0
    %2896 = vmatprep.subr.bf16.mxu0 0
    %2897 = vmatpush1.bf16.msra.mxu0 0
    %2898 = vmatprep.subr.bf16.mxu0 0
    %2899 = vmatpush1.bf16.msra.mxu0 0
    %2900 = vmatprep.subr.bf16.mxu0 0
    %2901 = vmatpush1.bf16.msra.mxu0 0
    %2902 = vmatprep.mubr.bf16.mxu0 %v1145
    %2903 = vmatmul.mubr.bf16.gmra.mrb[0].mxu0 %v228
    %v2904 = vpop.f32.mrb[0].mxu0
    %v2905 = vadd.f32 0.0, %v2904
    %v2906 = vpop.f32.mrb[0].mxu0
    %v2907 = vadd.f32 0.0, %v2906
    %v2908 = vpop.f32.mrb[0].mxu0
    %v2909 = vpop.f32.mrb[0].mxu0
    %2910 = vdwg.mxu0
    %2911 = vmatprep.subr.bf16.mxu0 %v2416
    %2912 = vmatpush1.bf16.msra.mxu0 %v2415
    %2913 = vmatprep.subr.bf16.mxu0 %v2435
    %2914 = vmatpush1.bf16.msra.mxu0 %v2434
    %2915 = vmatprep.subr.bf16.mxu0 %v2454
    %2916 = vmatpush1.bf16.msra.mxu0 %v2453
    %2917 = vmatprep.subr.bf16.mxu0 %v2473
    %2918 = vmatpush1.bf16.msra.mxu0 %v2472
    %2919 = vmatprep.subr.bf16.mxu0 %v2492
    %2920 = vmatpush1.bf16.msra.mxu0 %v2491
    %2921 = vmatprep.subr.bf16.mxu0 %v2511
    %2922 = vmatpush1.bf16.msra.mxu0 %v2510
    %2923 = vmatprep.subr.bf16.mxu0 %v2530
    %2924 = vmatpush1.bf16.msra.mxu0 %v2529
    %2925 = vmatprep.subr.bf16.mxu0 %v2549
    %2926 = vmatpush1.bf16.msra.mxu0 %v2548
    %2927 = vmatprep.subr.bf16.mxu0 %v2568
    %2928 = vmatpush1.bf16.msra.mxu0 %v2567
    %2929 = vmatprep.subr.bf16.mxu0 %v2788
    %2930 = vmatpush1.bf16.msra.mxu0 %v2785
    %2931 = vmatprep.subr.bf16.mxu0 0
    %2932 = vmatpush1.bf16.msra.mxu0 0
    %2933 = vmatprep.subr.bf16.mxu0 0
    %2934 = vmatpush1.bf16.msra.mxu0 0
    %2935 = vmatprep.subr.bf16.mxu0 0
    %2936 = vmatpush1.bf16.msra.mxu0 0
    %2937 = vmatprep.subr.bf16.mxu0 0
    %2938 = vmatpush1.bf16.msra.mxu0 0
    %2939 = vmatprep.subr.bf16.mxu0 0
    %2940 = vmatpush1.bf16.msra.mxu0 0
    %2941 = vmatprep.subr.bf16.mxu0 0
    %2942 = vmatpush1.bf16.msra.mxu0 0
    %2943 = vmatprep.mubr.bf16.mxu0 %v1145
    %2944 = vmatmul.mubr.bf16.gmra.mrb[0].mxu0 %v228
    %v2945 = vpop.f32.mrb[0].mxu0
    %v2946 = vadd.f32 0.0, %v2945
    %v2947 = vpop.f32.mrb[0].mxu0
    %v2948 = vadd.f32 0.0, %v2947
    %v2949 = vpop.f32.mrb[0].mxu0
    %v2950 = vpop.f32.mrb[0].mxu0
    %2951 = vdwg.mxu0
    %2952 = vmatprep.subr.bf16.mxu0 %v2418
    %2953 = vmatpush1.bf16.msra.mxu0 %v2417
    %2954 = vmatprep.subr.bf16.mxu0 %v2437
    %2955 = vmatpush1.bf16.msra.mxu0 %v2436
    %2956 = vmatprep.subr.bf16.mxu0 %v2456
    %2957 = vmatpush1.bf16.msra.mxu0 %v2455
    %2958 = vmatprep.subr.bf16.mxu0 %v2475
    %2959 = vmatpush1.bf16.msra.mxu0 %v2474
    %2960 = vmatprep.subr.bf16.mxu0 %v2494
    %2961 = vmatpush1.bf16.msra.mxu0 %v2493
    %2962 = vmatprep.subr.bf16.mxu0 %v2513
    %2963 = vmatpush1.bf16.msra.mxu0 %v2512
    %2964 = vmatprep.subr.bf16.mxu0 %v2532
    %2965 = vmatpush1.bf16.msra.mxu0 %v2531
    %2966 = vmatprep.subr.bf16.mxu0 %v2551
    %2967 = vmatpush1.bf16.msra.mxu0 %v2550
    %2968 = vmatprep.subr.bf16.mxu0 %v2570
    %2969 = vmatpush1.bf16.msra.mxu0 %v2569
    %2970 = vmatprep.subr.bf16.mxu0 %v2794
    %2971 = vmatpush1.bf16.msra.mxu0 %v2791
    %2972 = vmatprep.subr.bf16.mxu0 0
    %2973 = vmatpush1.bf16.msra.mxu0 0
    %2974 = vmatprep.subr.bf16.mxu0 0
    %2975 = vmatpush1.bf16.msra.mxu0 0
    %2976 = vmatprep.subr.bf16.mxu0 0
    %2977 = vmatpush1.bf16.msra.mxu0 0
    %2978 = vmatprep.subr.bf16.mxu0 0
    %2979 = vmatpush1.bf16.msra.mxu0 0
    %2980 = vmatprep.subr.bf16.mxu0 0
    %2981 = vmatpush1.bf16.msra.mxu0 0
    %2982 = vmatprep.subr.bf16.mxu0 0
    %2983 = vmatpush1.bf16.msra.mxu0 0
    %2984 = vmatprep.mubr.bf16.mxu0 %v1145
    %2985 = vmatmul.mubr.bf16.gmra.mrb[0].mxu0 %v228
    %v2986 = vpop.f32.mrb[0].mxu0
    %v2987 = vadd.f32 0.0, %v2986
    %v2988 = vpop.f32.mrb[0].mxu0
    %v2989 = vadd.f32 0.0, %v2988
    %v2990 = vpop.f32.mrb[0].mxu0
    %v2991 = vpop.f32.mrb[0].mxu0
    %2992 = vdwg.mxu0
    %2993 = vmatprep.subr.bf16.mxu0 %v2420
    %2994 = vmatpush1.bf16.msra.mxu0 %v2419
    %2995 = vmatprep.subr.bf16.mxu0 %v2439
    %2996 = vmatpush1.bf16.msra.mxu0 %v2438
    %2997 = vmatprep.subr.bf16.mxu0 %v2458
    %2998 = vmatpush1.bf16.msra.mxu0 %v2457
    %2999 = vmatprep.subr.bf16.mxu0 %v2477
    %3000 = vmatpush1.bf16.msra.mxu0 %v2476
    %3001 = vmatprep.subr.bf16.mxu0 %v2496
    %3002 = vmatpush1.bf16.msra.mxu0 %v2495
    %3003 = vmatprep.subr.bf16.mxu0 %v2515
    %3004 = vmatpush1.bf16.msra.mxu0 %v2514
    %3005 = vmatprep.subr.bf16.mxu0 %v2534
    %3006 = vmatpush1.bf16.msra.mxu0 %v2533
    %3007 = vmatprep.subr.bf16.mxu0 %v2553
    %3008 = vmatpush1.bf16.msra.mxu0 %v2552
    %3009 = vmatprep.subr.bf16.mxu0 %v2572
    %3010 = vmatpush1.bf16.msra.mxu0 %v2571
    %3011 = vmatprep.subr.bf16.mxu0 %v2800
    %3012 = vmatpush1.bf16.msra.mxu0 %v2797
    %3013 = vmatprep.subr.bf16.mxu0 0
    %3014 = vmatpush1.bf16.msra.mxu0 0
    %3015 = vmatprep.subr.bf16.mxu0 0
    %3016 = vmatpush1.bf16.msra.mxu0 0
    %3017 = vmatprep.subr.bf16.mxu0 0
    %3018 = vmatpush1.bf16.msra.mxu0 0
    %3019 = vmatprep.subr.bf16.mxu0 0
    %3020 = vmatpush1.bf16.msra.mxu0 0
    %3021 = vmatprep.subr.bf16.mxu0 0
    %3022 = vmatpush1.bf16.msra.mxu0 0
    %3023 = vmatprep.subr.bf16.mxu0 0
    %3024 = vmatpush1.bf16.msra.mxu0 0
    %3025 = vmatprep.mubr.bf16.mxu0 %v1145
    %3026 = vmatmul.mubr.bf16.gmra.mrb[0].mxu0 %v228
    %v3027 = vpop.f32.mrb[0].mxu0
    %v3028 = vadd.f32 0.0, %v3027
    %v3029 = vpop.f32.mrb[0].mxu0
    %v3030 = vadd.f32 0.0, %v3029
    %v3031 = vpop.f32.mrb[0].mxu0
    %v3032 = vpop.f32.mrb[0].mxu0
    %3033 = vdwg.mxu0
    %3034 = vmatprep.subr.bf16.mxu0 %v2422
    %3035 = vmatpush1.bf16.msra.mxu0 %v2421
    %3036 = vmatprep.subr.bf16.mxu0 %v2441
    %3037 = vmatpush1.bf16.msra.mxu0 %v2440
    %3038 = vmatprep.subr.bf16.mxu0 %v2460
    %3039 = vmatpush1.bf16.msra.mxu0 %v2459
    %3040 = vmatprep.subr.bf16.mxu0 %v2479
    %3041 = vmatpush1.bf16.msra.mxu0 %v2478
    %3042 = vmatprep.subr.bf16.mxu0 %v2498
    %3043 = vmatpush1.bf16.msra.mxu0 %v2497
    %3044 = vmatprep.subr.bf16.mxu0 %v2517
    %3045 = vmatpush1.bf16.msra.mxu0 %v2516
    %3046 = vmatprep.subr.bf16.mxu0 %v2536
    %3047 = vmatpush1.bf16.msra.mxu0 %v2535
    %3048 = vmatprep.subr.bf16.mxu0 %v2555
    %3049 = vmatpush1.bf16.msra.mxu0 %v2554
    %3050 = vmatprep.subr.bf16.mxu0 %v2574
    %3051 = vmatpush1.bf16.msra.mxu0 %v2573
    %3052 = vmatprep.subr.bf16.mxu0 %v2806
    %3053 = vmatpush1.bf16.msra.mxu0 %v2803
    %3054 = vmatprep.subr.bf16.mxu0 0
    %3055 = vmatpush1.bf16.msra.mxu0 0
    %3056 = vmatprep.subr.bf16.mxu0 0
    %3057 = vmatpush1.bf16.msra.mxu0 0
    %3058 = vmatprep.subr.bf16.mxu0 0
    %3059 = vmatpush1.bf16.msra.mxu0 0
    %3060 = vmatprep.subr.bf16.mxu0 0
    %3061 = vmatpush1.bf16.msra.mxu0 0
    %3062 = vmatprep.subr.bf16.mxu0 0
    %3063 = vmatpush1.bf16.msra.mxu0 0
    %3064 = vmatprep.subr.bf16.mxu0 0
    %3065 = vmatpush1.bf16.msra.mxu0 0
    %3066 = vmatprep.mubr.bf16.mxu0 %v1145
    %3067 = vmatmul.mubr.bf16.gmra.mrb[0].mxu0 %v228
    %v3068 = vpop.f32.mrb[0].mxu0
    %v3069 = vadd.f32 0.0, %v3068
    %v3070 = vpop.f32.mrb[0].mxu0
    %v3071 = vadd.f32 0.0, %v3070
    %v3072 = vpop.f32.mrb[0].mxu0
    %v3073 = vpop.f32.mrb[0].mxu0
    %3074 = vdwg.mxu0
    %3075 = vmatprep.subr.bf16.mxu0 %v2424
    %3076 = vmatpush1.bf16.msra.mxu0 %v2423
    %3077 = vmatprep.subr.bf16.mxu0 %v2443
    %3078 = vmatpush1.bf16.msra.mxu0 %v2442
    %3079 = vmatprep.subr.bf16.mxu0 %v2462
    %3080 = vmatpush1.bf16.msra.mxu0 %v2461
    %3081 = vmatprep.subr.bf16.mxu0 %v2481
    %3082 = vmatpush1.bf16.msra.mxu0 %v2480
    %3083 = vmatprep.subr.bf16.mxu0 %v2500
    %3084 = vmatpush1.bf16.msra.mxu0 %v2499
    %3085 = vmatprep.subr.bf16.mxu0 %v2519
    %3086 = vmatpush1.bf16.msra.mxu0 %v2518
    %3087 = vmatprep.subr.bf16.mxu0 %v2538
    %3088 = vmatpush1.bf16.msra.mxu0 %v2537
    %3089 = vmatprep.subr.bf16.mxu0 %v2557
    %3090 = vmatpush1.bf16.msra.mxu0 %v2556
    %3091 = vmatprep.subr.bf16.mxu0 %v2576
    %3092 = vmatpush1.bf16.msra.mxu0 %v2575
    %3093 = vmatprep.subr.bf16.mxu0 %v2812
    %3094 = vmatpush1.bf16.msra.mxu0 %v2809
    %3095 = vmatprep.subr.bf16.mxu0 0
    %3096 = vmatpush1.bf16.msra.mxu0 0
    %3097 = vmatprep.subr.bf16.mxu0 0
    %3098 = vmatpush1.bf16.msra.mxu0 0
    %3099 = vmatprep.subr.bf16.mxu0 0
    %3100 = vmatpush1.bf16.msra.mxu0 0
    %3101 = vmatprep.subr.bf16.mxu0 0
    %3102 = vmatpush1.bf16.msra.mxu0 0
    %3103 = vmatprep.subr.bf16.mxu0 0
    %3104 = vmatpush1.bf16.msra.mxu0 0
    %3105 = vmatprep.subr.bf16.mxu0 0
    %3106 = vmatpush1.bf16.msra.mxu0 0
    %3107 = vmatprep.mubr.bf16.mxu0 %v1145
    %3108 = vmatmul.mubr.bf16.gmra.mrb[0].mxu0 %v228
    %v3109 = vpop.f32.mrb[0].mxu0
    %v3110 = vadd.f32 0.0, %v3109
    %v3111 = vpop.f32.mrb[0].mxu0
    %v3112 = vadd.f32 0.0, %v3111
    %v3113 = vpop.f32.mrb[0].mxu0
    %v3114 = vpop.f32.mrb[0].mxu0
    %3115 = vdwg.mxu0
    %3116 = vmatprep.subr.bf16.mxu0 %v2426
    %3117 = vmatpush1.bf16.msra.mxu0 %v2425
    %3118 = vmatprep.subr.bf16.mxu0 %v2445
    %3119 = vmatpush1.bf16.msra.mxu0 %v2444
    %3120 = vmatprep.subr.bf16.mxu0 %v2464
    %3121 = vmatpush1.bf16.msra.mxu0 %v2463
    %3122 = vmatprep.subr.bf16.mxu0 %v2483
    %3123 = vmatpush1.bf16.msra.mxu0 %v2482
    %3124 = vmatprep.subr.bf16.mxu0 %v2502
    %3125 = vmatpush1.bf16.msra.mxu0 %v2501
    %3126 = vmatprep.subr.bf16.mxu0 %v2521
    %3127 = vmatpush1.bf16.msra.mxu0 %v2520
    %3128 = vmatprep.subr.bf16.mxu0 %v2540
    %3129 = vmatpush1.bf16.msra.mxu0 %v2539
    %3130 = vmatprep.subr.bf16.mxu0 %v2559
    %3131 = vmatpush1.bf16.msra.mxu0 %v2558
    %3132 = vmatprep.subr.bf16.mxu0 %v2578
    %3133 = vmatpush1.bf16.msra.mxu0 %v2577
    %3134 = vmatprep.subr.bf16.mxu0 %v2818
    %3135 = vmatpush1.bf16.msra.mxu0 %v2815
    %3136 = vmatprep.subr.bf16.mxu0 0
    %3137 = vmatpush1.bf16.msra.mxu0 0
    %3138 = vmatprep.subr.bf16.mxu0 0
    %3139 = vmatpush1.bf16.msra.mxu0 0
    %3140 = vmatprep.subr.bf16.mxu0 0
    %3141 = vmatpush1.bf16.msra.mxu0 0
    %3142 = vmatprep.subr.bf16.mxu0 0
    %3143 = vmatpush1.bf16.msra.mxu0 0
    %3144 = vmatprep.subr.bf16.mxu0 0
    %3145 = vmatpush1.bf16.msra.mxu0 0
    %3146 = vmatprep.subr.bf16.mxu0 0
    %3147 = vmatpush1.bf16.msra.mxu0 0
    %3148 = vmatprep.mubr.bf16.mxu0 %v1145
    %3149 = vmatmul.mubr.bf16.gmra.mrb[0].mxu0 %v228
    %v3150 = vpop.f32.mrb[0].mxu0
    %v3151 = vadd.f32 0.0, %v3150
    %v3152 = vpop.f32.mrb[0].mxu0
    %v3153 = vadd.f32 0.0, %v3152
    %v3154 = vpop.f32.mrb[0].mxu0
    %v3155 = vpop.f32.mrb[0].mxu0
    %3156 = vdwg.mxu0
    %3157 = vmatprep.subr.bf16.mxu0 %v2428
    %3158 = vmatpush1.bf16.msra.mxu0 %v2427
    %3159 = vmatprep.subr.bf16.mxu0 %v2447
    %3160 = vmatpush1.bf16.msra.mxu0 %v2446
    %3161 = vmatprep.subr.bf16.mxu0 %v2466
    %3162 = vmatpush1.bf16.msra.mxu0 %v2465
    %3163 = vmatprep.subr.bf16.mxu0 %v2485
    %3164 = vmatpush1.bf16.msra.mxu0 %v2484
    %3165 = vmatprep.subr.bf16.mxu0 %v2504
    %3166 = vmatpush1.bf16.msra.mxu0 %v2503
    %3167 = vmatprep.subr.bf16.mxu0 %v2523
    %3168 = vmatpush1.bf16.msra.mxu0 %v2522
    %3169 = vmatprep.subr.bf16.mxu0 %v2542
    %3170 = vmatpush1.bf16.msra.mxu0 %v2541
    %3171 = vmatprep.subr.bf16.mxu0 %v2561
    %3172 = vmatpush1.bf16.msra.mxu0 %v2560
    %3173 = vmatprep.subr.bf16.mxu0 %v2580
    %3174 = vmatpush1.bf16.msra.mxu0 %v2579
    %3175 = vmatprep.subr.bf16.mxu0 %v2824
    %3176 = vmatpush1.bf16.msra.mxu0 %v2821
    %3177 = vmatprep.subr.bf16.mxu0 0
    %3178 = vmatpush1.bf16.msra.mxu0 0
    %3179 = vmatprep.subr.bf16.mxu0 0
    %3180 = vmatpush1.bf16.msra.mxu0 0
    %3181 = vmatprep.subr.bf16.mxu0 0
    %3182 = vmatpush1.bf16.msra.mxu0 0
    %3183 = vmatprep.subr.bf16.mxu0 0
    %3184 = vmatpush1.bf16.msra.mxu0 0
    %3185 = vmatprep.subr.bf16.mxu0 0
    %3186 = vmatpush1.bf16.msra.mxu0 0
    %3187 = vmatprep.subr.bf16.mxu0 0
    %3188 = vmatpush1.bf16.msra.mxu0 0
    %3189 = vmatprep.mubr.bf16.mxu0 %v1145
    %3190 = vmatmul.mubr.bf16.gmra.mrb[0].mxu0 %v228
    %v3191 = vpop.f32.mrb[0].mxu0
    %v3192 = vadd.f32 0.0, %v3191
    %v3193 = vpop.f32.mrb[0].mxu0
    %v3194 = vadd.f32 0.0, %v3193
    %v3195 = vpop.f32.mrb[0].mxu0
    %v3196 = vpop.f32.mrb[0].mxu0
    %3197 = vdwg.mxu0
    %3198 = vmatprep.subr.bf16.mxu0 0
    %3199 = vmatpush1.bf16.msra.mxu0 %v2429
    %3200 = vmatprep.subr.bf16.mxu0 0
    %3201 = vmatpush1.bf16.msra.mxu0 %v2448
    %3202 = vmatprep.subr.bf16.mxu0 0
    %3203 = vmatpush1.bf16.msra.mxu0 %v2467
    %3204 = vmatprep.subr.bf16.mxu0 0
    %3205 = vmatpush1.bf16.msra.mxu0 %v2486
    %3206 = vmatprep.subr.bf16.mxu0 0
    %3207 = vmatpush1.bf16.msra.mxu0 %v2505
    %3208 = vmatprep.subr.bf16.mxu0 0
    %3209 = vmatpush1.bf16.msra.mxu0 %v2524
    %3210 = vmatprep.subr.bf16.mxu0 0
    %3211 = vmatpush1.bf16.msra.mxu0 %v2543
    %3212 = vmatprep.subr.bf16.mxu0 0
    %3213 = vmatpush1.bf16.msra.mxu0 %v2562
    %3214 = vmatprep.subr.bf16.mxu0 0
    %3215 = vmatpush1.bf16.msra.mxu0 %v2581
    %3216 = vmatprep.subr.bf16.mxu0 0
    %3217 = vmatpush1.bf16.msra.mxu0 %v2827
    %3218 = vmatprep.subr.bf16.mxu0 0
    %3219 = vmatpush1.bf16.msra.mxu0 0
    %3220 = vmatprep.subr.bf16.mxu0 0
    %3221 = vmatpush1.bf16.msra.mxu0 0
    %3222 = vmatprep.subr.bf16.mxu0 0
    %3223 = vmatpush1.bf16.msra.mxu0 0
    %3224 = vmatprep.subr.bf16.mxu0 0
    %3225 = vmatpush1.bf16.msra.mxu0 0
    %3226 = vmatprep.subr.bf16.mxu0 0
    %3227 = vmatpush1.bf16.msra.mxu0 0
    %3228 = vmatprep.subr.bf16.mxu0 0
    %3229 = vmatpush1.bf16.msra.mxu0 0
    %3230 = vmatprep.mubr.bf16.mxu0 %v1145
    %3231 = vmatmul.mubr.bf16.gmra.mrb[0].mxu0 %v228
    %v3232 = vpop.f32.mrb[0].mxu0
    %v3233 = vadd.f32 0.0, %v3232
    %v3234 = vpop.f32.mrb[0].mxu0
    %v3235 = vpop.f32.mrb[0].mxu0
    %v3236 = vpop.f32.mrb[0].mxu0
    %3237 = vdwg.mxu0
    %v3238 = vld [vmem:[%s2 + $0x4c] sm:$0xf]
    %v3239 = vmul.f32 %v2864, %v3238
    %v3240 = vld [vmem:[%s2 + $0x50] sm:$0xf]
    %v3241 = vmul.f32 %v2866, %v3240
    %v3242 = vadd.f32 %v3239, %v3241
    %v3243 = vld [vmem:[%s2 + $0x54] sm:$0xf]
    %v3244 = vmul.f32 %v2905, %v3243
    %v3245 = vadd.f32 %v3242, %v3244
    %v3246 = vld [vmem:[%s2 + $0x58] sm:$0xf]
    %v3247 = vmul.f32 %v2907, %v3246
    %v3248 = vadd.f32 %v3245, %v3247
    %v3249 = vld [vmem:[%s2 + $0x5c] sm:$0xf]
    %v3250 = vmul.f32 %v2946, %v3249
    %v3251 = vadd.f32 %v3248, %v3250
    %v3252 = vld [vmem:[%s2 + $0x60] sm:$0xf]
    %v3253 = vmul.f32 %v2948, %v3252
    %v3254 = vadd.f32 %v3251, %v3253
    %v3255 = vld [vmem:[%s2 + $0x64] sm:$0xf]
    %v3256 = vmul.f32 %v2987, %v3255
    %v3257 = vadd.f32 %v3254, %v3256
    %v3258 = vld [vmem:[%s2 + $0x68] sm:$0xf]
    %v3259 = vmul.f32 %v2989, %v3258
    %v3260 = vadd.f32 %v3257, %v3259
    %v3261 = vld [vmem:[%s2 + $0x6c] sm:$0xf]
    %v3262 = vmul.f32 %v3028, %v3261
    %v3263 = vadd.f32 %v3260, %v3262
    %v3264 = vld [vmem:[%s2 + $0x70] sm:$0xf]
    %v3265 = vmul.f32 %v3030, %v3264
    %v3266 = vadd.f32 %v3263, %v3265
    %v3267 = vld [vmem:[%s2 + $0x74] sm:$0xf]
    %v3268 = vmul.f32 %v3069, %v3267
    %v3269 = vadd.f32 %v3266, %v3268
    %v3270 = vld [vmem:[%s2 + $0x78] sm:$0xf]
    %v3271 = vmul.f32 %v3071, %v3270
    %v3272 = vadd.f32 %v3269, %v3271
    %v3273 = vld [vmem:[%s2 + $0x7c] sm:$0xf]
    %v3274 = vmul.f32 %v3110, %v3273
    %v3275 = vadd.f32 %v3272, %v3274
    %v3276 = vld [vmem:[%s2 + $0x80] sm:$0xf]
    %v3277 = vmul.f32 %v3112, %v3276
    %v3278 = vadd.f32 %v3275, %v3277
    %v3279 = vld [vmem:[%s2 + $0x84] sm:$0xf]
    %v3280 = vmul.f32 %v3151, %v3279
    %v3281 = vadd.f32 %v3278, %v3280
    %v3282 = vld [vmem:[%s2 + $0x88] sm:$0xf]
    %v3283 = vmul.f32 %v3153, %v3282
    %v3284 = vadd.f32 %v3281, %v3283
    %v3285 = vld [vmem:[%s2 + $0x8c] sm:$0xf]
    %v3286 = vmul.f32 %v3192, %v3285
    %v3287 = vadd.f32 %v3284, %v3286
    %v3288 = vld [vmem:[%s2 + $0x90] sm:$0xf]
    %v3289 = vmul.f32 %v3194, %v3288
    %v3290 = vadd.f32 %v3287, %v3289
    %v3291 = vld [vmem:[%s2 + $0x94] sm:$0xf]
    %v3292 = vmul.f32 %v3233, %v3291
    %v3293 = vadd.f32 %v3290, %v3292
    %v3294 = vld [vmem:[#allocation2 + $0x98] sm:$0xff]
    %v3295 = vld [vmem:[#allocation2 + $0xa0] sm:$0xff]
    %v3296 = vld [vmem:[#allocation2 + $0xa8] sm:$0xff]
    %v3297 = vld [vmem:[#allocation2 + $0xb0] sm:$0xff]
    %v3298 = vld [vmem:[#allocation2 + $0xb8] sm:$0xff]
    %v3299 = vld [vmem:[#allocation2 + $0xc0] sm:$0xff]
    %v3300 = vld [vmem:[#allocation2 + $0xc8] sm:$0xff]
    %v3301 = vld [vmem:[#allocation2 + $0xd0] sm:$0xff]
    %v3302 = vld [vmem:[#allocation2 + $0xd8] sm:$0xff]
    %v3303 = vld [vmem:[#allocation2 + $0xe0] sm:$0xf]
    %v3304 = vld [vmem:[#allocation2 + $0x1c8] sm:$0xff]
    %v3305 = vld [vmem:[#allocation2 + $0x1d0] sm:$0xff]
    %v3306 = vld [vmem:[#allocation2 + $0x1d8] sm:$0xff]
    %v3307 = vld [vmem:[#allocation2 + $0x1e0] sm:$0xff]
    %v3308 = vld [vmem:[#allocation2 + $0x1e8] sm:$0xff]
    %v3309 = vld [vmem:[#allocation2 + $0x1f0] sm:$0xff]
    %v3310 = vld [vmem:[#allocation2 + $0x1f8] sm:$0xff]
    %v3311 = vld [vmem:[#allocation2 + $0x200] sm:$0xff]
    %v3312 = vld [vmem:[#allocation2 + $0x208] sm:$0xff]
    %v3313 = vld [vmem:[#allocation2 + $0x210] sm:$0xf]
    %v3314 = vld [vmem:[#allocation2 + $0x2f8] sm:$0xff]
    %v3315 = vld [vmem:[#allocation2 + $0x300] sm:$0xff]
    %v3316 = vld [vmem:[#allocation2 + $0x308] sm:$0xff]
    %v3317 = vld [vmem:[#allocation2 + $0x310] sm:$0xff]
    %v3318 = vld [vmem:[#allocation2 + $0x318] sm:$0xff]
    %v3319 = vld [vmem:[#allocation2 + $0x320] sm:$0xff]
    %v3320 = vld [vmem:[#allocation2 + $0x328] sm:$0xff]
    %v3321 = vld [vmem:[#allocation2 + $0x330] sm:$0xff]
    %v3322 = vld [vmem:[#allocation2 + $0x338] sm:$0xff]
    %v3323 = vld [vmem:[#allocation2 + $0x340] sm:$0xf]
    %v3324 = vld [vmem:[#allocation2 + $0x428] sm:$0xff]
    %v3325 = vld [vmem:[#allocation2 + $0x430] sm:$0xff]
    %v3326 = vld [vmem:[#allocation2 + $0x438] sm:$0xff]
    %v3327 = vld [vmem:[#allocation2 + $0x440] sm:$0xff]
    %v3328 = vld [vmem:[#allocation2 + $0x448] sm:$0xff]
    %v3329 = vld [vmem:[#allocation2 + $0x450] sm:$0xff]
    %v3330 = vld [vmem:[#allocation2 + $0x458] sm:$0xff]
    %v3331 = vld [vmem:[#allocation2 + $0x460] sm:$0xff]
    %v3332 = vld [vmem:[#allocation2 + $0x468] sm:$0xff]
    %v3333 = vld [vmem:[#allocation2 + $0x470] sm:$0xf]
    %v3334 = vld [vmem:[#allocation2 + $0x558] sm:$0xff]
    %v3335 = vld [vmem:[#allocation2 + $0x560] sm:$0xff]
    %v3336 = vld [vmem:[#allocation2 + $0x568] sm:$0xff]
    %v3337 = vld [vmem:[#allocation2 + $0x570] sm:$0xff]
    %v3338 = vld [vmem:[#allocation2 + $0x578] sm:$0xff]
    %v3339 = vld [vmem:[#allocation2 + $0x580] sm:$0xff]
    %v3340 = vld [vmem:[#allocation2 + $0x588] sm:$0xff]
    %v3341 = vld [vmem:[#allocation2 + $0x590] sm:$0xff]
    %v3342 = vld [vmem:[#allocation2 + $0x598] sm:$0xff]
    %v3343 = vld [vmem:[#allocation2 + $0x5a0] sm:$0xf]
    %v3344 = vld [vmem:[#allocation2 + $0x688] sm:$0xff]
    %v3345 = vld [vmem:[#allocation2 + $0x690] sm:$0xff]
    %v3346 = vld [vmem:[#allocation2 + $0x698] sm:$0xff]
    %v3347 = vld [vmem:[#allocation2 + $0x6a0] sm:$0xff]
    %v3348 = vld [vmem:[#allocation2 + $0x6a8] sm:$0xff]
    %v3349 = vld [vmem:[#allocation2 + $0x6b0] sm:$0xff]
    %v3350 = vld [vmem:[#allocation2 + $0x6b8] sm:$0xff]
    %v3351 = vld [vmem:[#allocation2 + $0x6c0] sm:$0xff]
    %v3352 = vld [vmem:[#allocation2 + $0x6c8] sm:$0xff]
    %v3353 = vld [vmem:[#allocation2 + $0x6d0] sm:$0xf]
    %v3354 = vld [vmem:[#allocation2 + $0x7b8] sm:$0xff]
    %v3355 = vld [vmem:[#allocation2 + $0x7c0] sm:$0xff]
    %v3356 = vld [vmem:[#allocation2 + $0x7c8] sm:$0xff]
    %v3357 = vld [vmem:[#allocation2 + $0x7d0] sm:$0xff]
    %v3358 = vld [vmem:[#allocation2 + $0x7d8] sm:$0xff]
    %v3359 = vld [vmem:[#allocation2 + $0x7e0] sm:$0xff]
    %v3360 = vld [vmem:[#allocation2 + $0x7e8] sm:$0xff]
    %v3361 = vld [vmem:[#allocation2 + $0x7f0] sm:$0xff]
    %v3362 = vld [vmem:[#allocation2 + $0x7f8] sm:$0xff]
    %v3363 = vld [vmem:[#allocation2 + $0x800] sm:$0xf]
    %v3364 = vld [vmem:[#allocation2 + $0x8e8] sm:$0xff]
    %v3365 = vld [vmem:[#allocation2 + $0x8f0] sm:$0xff]
    %v3366 = vld [vmem:[#allocation2 + $0x8f8] sm:$0xff]
    %v3367 = vld [vmem:[#allocation2 + $0x900] sm:$0xff]
    %v3368 = vld [vmem:[#allocation2 + $0x908] sm:$0xff]
    %v3369 = vld [vmem:[#allocation2 + $0x910] sm:$0xff]
    %v3370 = vld [vmem:[#allocation2 + $0x918] sm:$0xff]
    %v3371 = vld [vmem:[#allocation2 + $0x920] sm:$0xff]
    %v3372 = vld [vmem:[#allocation2 + $0x928] sm:$0xff]
    %v3373 = vld [vmem:[#allocation2 + $0x930] sm:$0xf]
    %v3374 = vld [vmem:[#allocation2 + $0xa18] sm:$0xff]
    %v3375 = vld [vmem:[#allocation2 + $0xa20] sm:$0xff]
    %v3376 = vld [vmem:[#allocation2 + $0xa28] sm:$0xff]
    %v3377 = vld [vmem:[#allocation2 + $0xa30] sm:$0xff]
    %v3378 = vld [vmem:[#allocation2 + $0xa38] sm:$0xff]
    %v3379 = vld [vmem:[#allocation2 + $0xa40] sm:$0xff]
    %v3380 = vld [vmem:[#allocation2 + $0xa48] sm:$0xff]
    %v3381 = vld [vmem:[#allocation2 + $0xa50] sm:$0xff]
    %v3382 = vld [vmem:[#allocation2 + $0xa58] sm:$0xff]
    %v3383 = vld [vmem:[#allocation2 + $0xa60] sm:$0xf]
    %v3384 = vld [vmem:[#allocation2 + $0xb48] sm:$0xff]
    %v3385 = vld [vmem:[#allocation2 + $0xb50] sm:$0xff]
    %v3386 = vld [vmem:[#allocation2 + $0xb58] sm:$0xff]
    %v3387 = vld [vmem:[#allocation2 + $0xb60] sm:$0xff]
    %v3388 = vld [vmem:[#allocation2 + $0xb68] sm:$0xff]
    %v3389 = vld [vmem:[#allocation2 + $0xb70] sm:$0xff]
    %v3390 = vld [vmem:[#allocation2 + $0xb78] sm:$0xff]
    %v3391 = vld [vmem:[#allocation2 + $0xb80] sm:$0xff]
    %v3392 = vld [vmem:[#allocation2 + $0xb88] sm:$0xff]
    %v3393 = vld [vmem:[#allocation2 + $0xb90] sm:$0xf]
    %v3394 = vld [vmem:[#allocation2 + $0xc78] sm:$0xff]
    %v3395 = vld [vmem:[#allocation2 + $0xc80] sm:$0xff]
    %v3396 = vld [vmem:[#allocation2 + $0xc88] sm:$0xff]
    %v3397 = vld [vmem:[#allocation2 + $0xc90] sm:$0xff]
    %v3398 = vld [vmem:[#allocation2 + $0xc98] sm:$0xff]
    %v3399 = vld [vmem:[#allocation2 + $0xca0] sm:$0xff]
    %v3400 = vld [vmem:[#allocation2 + $0xca8] sm:$0xff]
    %v3401 = vld [vmem:[#allocation2 + $0xcb0] sm:$0xff]
    %v3402 = vld [vmem:[#allocation2 + $0xcb8] sm:$0xff]
    %v3403 = vld [vmem:[#allocation2 + $0xcc0] sm:$0xf]
    %v3404 = vld [vmem:[#allocation2 + $0xda8] sm:$0xff]
    %v3405 = vld [vmem:[#allocation2 + $0xdb0] sm:$0xff]
    %v3406 = vld [vmem:[#allocation2 + $0xdb8] sm:$0xff]
    %v3407 = vld [vmem:[#allocation2 + $0xdc0] sm:$0xff]
    %v3408 = vld [vmem:[#allocation2 + $0xdc8] sm:$0xff]
    %v3409 = vld [vmem:[#allocation2 + $0xdd0] sm:$0xff]
    %v3410 = vld [vmem:[#allocation2 + $0xdd8] sm:$0xff]
    %v3411 = vld [vmem:[#allocation2 + $0xde0] sm:$0xff]
    %v3412 = vld [vmem:[#allocation2 + $0xde8] sm:$0xff]
    %v3413 = vld [vmem:[#allocation2 + $0xdf0] sm:$0xf]
    %v3414 = vld [vmem:[#allocation2 + $0xed8] sm:$0xff]
    %v3415 = vld [vmem:[#allocation2 + $0xee0] sm:$0xff]
    %v3416 = vld [vmem:[#allocation2 + $0xee8] sm:$0xff]
    %v3417 = vld [vmem:[#allocation2 + $0xef0] sm:$0xff]
    %v3418 = vld [vmem:[#allocation2 + $0xef8] sm:$0xff]
    %v3419 = vld [vmem:[#allocation2 + $0xf00] sm:$0xff]
    %v3420 = vld [vmem:[#allocation2 + $0xf08] sm:$0xff]
    %v3421 = vld [vmem:[#allocation2 + $0xf10] sm:$0xff]
    %v3422 = vld [vmem:[#allocation2 + $0xf18] sm:$0xff]
    %v3423 = vld [vmem:[#allocation2 + $0xf20] sm:$0xf]
    %v3424 = vld [vmem:[#allocation2 + $0x1008] sm:$0xff]
    %v3425 = vld [vmem:[#allocation2 + $0x1010] sm:$0xff]
    %v3426 = vld [vmem:[#allocation2 + $0x1018] sm:$0xff]
    %v3427 = vld [vmem:[#allocation2 + $0x1020] sm:$0xff]
    %v3428 = vld [vmem:[#allocation2 + $0x1028] sm:$0xff]
    %v3429 = vld [vmem:[#allocation2 + $0x1030] sm:$0xff]
    %v3430 = vld [vmem:[#allocation2 + $0x1038] sm:$0xff]
    %v3431 = vld [vmem:[#allocation2 + $0x1040] sm:$0xff]
    %v3432 = vld [vmem:[#allocation2 + $0x1048] sm:$0xff]
    %v3433 = vld [vmem:[#allocation2 + $0x1050] sm:$0xf]
    %v3434 = vld [vmem:[#allocation2 + $0x1138] sm:$0xff]
    %v3435 = vld [vmem:[#allocation2 + $0x1140] sm:$0xff]
    %v3436 = vld [vmem:[#allocation2 + $0x1148] sm:$0xff]
    %v3437 = vld [vmem:[#allocation2 + $0x1150] sm:$0xff]
    %v3438 = vld [vmem:[#allocation2 + $0x1158] sm:$0xff]
    %v3439 = vld [vmem:[#allocation2 + $0x1160] sm:$0xff]
    %v3440 = vld [vmem:[#allocation2 + $0x1168] sm:$0xff]
    %v3441 = vld [vmem:[#allocation2 + $0x1170] sm:$0xff]
    %v3442 = vld [vmem:[#allocation2 + $0x1178] sm:$0xff]
    %v3443 = vld [vmem:[#allocation2 + $0x1180] sm:$0xf]
    %v3444 = vld [vmem:[#allocation2 + $0x1268] sm:$0xff]
    %v3445 = vld [vmem:[#allocation2 + $0x1270] sm:$0xff]
    %v3446 = vld [vmem:[#allocation2 + $0x1278] sm:$0xff]
    %v3447 = vld [vmem:[#allocation2 + $0x1280] sm:$0xff]
    %v3448 = vld [vmem:[#allocation2 + $0x1288] sm:$0xff]
    %v3449 = vld [vmem:[#allocation2 + $0x1290] sm:$0xff]
    %v3450 = vld [vmem:[#allocation2 + $0x1298] sm:$0xff]
    %v3451 = vld [vmem:[#allocation2 + $0x12a0] sm:$0xff]
    %v3452 = vld [vmem:[#allocation2 + $0x12a8] sm:$0xff]
    %v3453 = vld [vmem:[#allocation2 + $0x12b0] sm:$0xf]
    %v3454 = vld [vmem:[#allocation2 + $0x1398] sm:$0xff]
    %v3455 = vld [vmem:[#allocation2 + $0x13a0] sm:$0xff]
    %v3456 = vld [vmem:[#allocation2 + $0x13a8] sm:$0xff]
    %v3457 = vld [vmem:[#allocation2 + $0x13b0] sm:$0xff]
    %v3458 = vld [vmem:[#allocation2 + $0x13b8] sm:$0xff]
    %v3459 = vld [vmem:[#allocation2 + $0x13c0] sm:$0xff]
    %v3460 = vld [vmem:[#allocation2 + $0x13c8] sm:$0xff]
    %v3461 = vld [vmem:[#allocation2 + $0x13d0] sm:$0xff]
    %v3462 = vld [vmem:[#allocation2 + $0x13d8] sm:$0xff]
    %v3463 = vld [vmem:[#allocation2 + $0x13e0] sm:$0xf]
    %v3464 = vld [vmem:[#allocation2 + $0x14c8] sm:$0xff]
    %v3465 = vld [vmem:[#allocation2 + $0x14d0] sm:$0xff]
    %v3466 = vld [vmem:[#allocation2 + $0x14d8] sm:$0xff]
    %v3467 = vld [vmem:[#allocation2 + $0x14e0] sm:$0xff]
    %v3468 = vld [vmem:[#allocation2 + $0x14e8] sm:$0xff]
    %v3469 = vld [vmem:[#allocation2 + $0x14f0] sm:$0xff]
    %v3470 = vld [vmem:[#allocation2 + $0x14f8] sm:$0xff]
    %v3471 = vld [vmem:[#allocation2 + $0x1500] sm:$0xff]
    %v3472 = vld [vmem:[#allocation2 + $0x1508] sm:$0xff]
    %v3473 = vld [vmem:[#allocation2 + $0x1510] sm:$0xf]
    %v3474 = vld [vmem:[#allocation2 + $0x15f8] sm:$0xff]
    %v3475 = vld [vmem:[#allocation2 + $0x1600] sm:$0xff]
    %v3476 = vld [vmem:[#allocation2 + $0x1608] sm:$0xff]
    %v3477 = vld [vmem:[#allocation2 + $0x1610] sm:$0xff]
    %v3478 = vld [vmem:[#allocation2 + $0x1618] sm:$0xff]
    %v3479 = vld [vmem:[#allocation2 + $0x1620] sm:$0xff]
    %v3480 = vld [vmem:[#allocation2 + $0x1628] sm:$0xff]
    %v3481 = vld [vmem:[#allocation2 + $0x1630] sm:$0xff]
    %v3482 = vld [vmem:[#allocation2 + $0x1638] sm:$0xff]
    %v3483 = vld [vmem:[#allocation2 + $0x1640] sm:$0xf]
    %v3674 = vunpack.c.l.b16 %v3294
    %v3675 = vunpack.c.h.b16 %v3294
    %v3676 = vunpack.c.l.b16 %v3295
    %v3677 = vunpack.c.h.b16 %v3295
    %v3678 = vunpack.c.l.b16 %v3296
    %v3679 = vunpack.c.h.b16 %v3296
    %v3680 = vunpack.c.l.b16 %v3297
    %v3681 = vunpack.c.h.b16 %v3297
    %v3682 = vunpack.c.l.b16 %v3298
    %v3683 = vunpack.c.h.b16 %v3298
    %v3684 = vunpack.c.l.b16 %v3299
    %v3685 = vunpack.c.h.b16 %v3299
    %v3686 = vunpack.c.l.b16 %v3300
    %v3687 = vunpack.c.h.b16 %v3300
    %v3688 = vunpack.c.l.b16 %v3301
    %v3689 = vunpack.c.h.b16 %v3301
    %v3690 = vunpack.c.l.b16 %v3302
    %v3691 = vunpack.c.h.b16 %v3302
    %v3692 = vunpack.c.l.b16 %v3303
    %v3693 = vunpack.c.l.b16 %v3304
    %v3694 = vunpack.c.h.b16 %v3304
    %v3695 = vunpack.c.l.b16 %v3305
    %v3696 = vunpack.c.h.b16 %v3305
    %v3697 = vunpack.c.l.b16 %v3306
    %v3698 = vunpack.c.h.b16 %v3306
    %v3699 = vunpack.c.l.b16 %v3307
    %v3700 = vunpack.c.h.b16 %v3307
    %v3701 = vunpack.c.l.b16 %v3308
    %v3702 = vunpack.c.h.b16 %v3308
    %v3703 = vunpack.c.l.b16 %v3309
    %v3704 = vunpack.c.h.b16 %v3309
    %v3705 = vunpack.c.l.b16 %v3310
    %v3706 = vunpack.c.h.b16 %v3310
    %v3707 = vunpack.c.l.b16 %v3311
    %v3708 = vunpack.c.h.b16 %v3311
    %v3709 = vunpack.c.l.b16 %v3312
    %v3710 = vunpack.c.h.b16 %v3312
    %v3711 = vunpack.c.l.b16 %v3313
    %v3712 = vunpack.c.l.b16 %v3314
    %v3713 = vunpack.c.h.b16 %v3314
    %v3714 = vunpack.c.l.b16 %v3315
    %v3715 = vunpack.c.h.b16 %v3315
    %v3716 = vunpack.c.l.b16 %v3316
    %v3717 = vunpack.c.h.b16 %v3316
    %v3718 = vunpack.c.l.b16 %v3317
    %v3719 = vunpack.c.h.b16 %v3317
    %v3720 = vunpack.c.l.b16 %v3318
    %v3721 = vunpack.c.h.b16 %v3318
    %v3722 = vunpack.c.l.b16 %v3319
    %v3723 = vunpack.c.h.b16 %v3319
    %v3724 = vunpack.c.l.b16 %v3320
    %v3725 = vunpack.c.h.b16 %v3320
    %v3726 = vunpack.c.l.b16 %v3321
    %v3727 = vunpack.c.h.b16 %v3321
    %v3728 = vunpack.c.l.b16 %v3322
    %v3729 = vunpack.c.h.b16 %v3322
    %v3730 = vunpack.c.l.b16 %v3323
    %v3731 = vunpack.c.l.b16 %v3324
    %v3732 = vunpack.c.h.b16 %v3324
    %v3733 = vunpack.c.l.b16 %v3325
    %v3734 = vunpack.c.h.b16 %v3325
    %v3735 = vunpack.c.l.b16 %v3326
    %v3736 = vunpack.c.h.b16 %v3326
    %v3737 = vunpack.c.l.b16 %v3327
    %v3738 = vunpack.c.h.b16 %v3327
    %v3739 = vunpack.c.l.b16 %v3328
    %v3740 = vunpack.c.h.b16 %v3328
    %v3741 = vunpack.c.l.b16 %v3329
    %v3742 = vunpack.c.h.b16 %v3329
    %v3743 = vunpack.c.l.b16 %v3330
    %v3744 = vunpack.c.h.b16 %v3330
    %v3745 = vunpack.c.l.b16 %v3331
    %v3746 = vunpack.c.h.b16 %v3331
    %v3747 = vunpack.c.l.b16 %v3332
    %v3748 = vunpack.c.h.b16 %v3332
    %v3749 = vunpack.c.l.b16 %v3333
    %v3750 = vunpack.c.l.b16 %v3334
    %v3751 = vunpack.c.h.b16 %v3334
    %v3752 = vunpack.c.l.b16 %v3335
    %v3753 = vunpack.c.h.b16 %v3335
    %v3754 = vunpack.c.l.b16 %v3336
    %v3755 = vunpack.c.h.b16 %v3336
    %v3756 = vunpack.c.l.b16 %v3337
    %v3757 = vunpack.c.h.b16 %v3337
    %v3758 = vunpack.c.l.b16 %v3338
    %v3759 = vunpack.c.h.b16 %v3338
    %v3760 = vunpack.c.l.b16 %v3339
    %v3761 = vunpack.c.h.b16 %v3339
    %v3762 = vunpack.c.l.b16 %v3340
    %v3763 = vunpack.c.h.b16 %v3340
    %v3764 = vunpack.c.l.b16 %v3341
    %v3765 = vunpack.c.h.b16 %v3341
    %v3766 = vunpack.c.l.b16 %v3342
    %v3767 = vunpack.c.h.b16 %v3342
    %v3768 = vunpack.c.l.b16 %v3343
    %v3769 = vunpack.c.l.b16 %v3344
    %v3770 = vunpack.c.h.b16 %v3344
    %v3771 = vunpack.c.l.b16 %v3345
    %v3772 = vunpack.c.h.b16 %v3345
    %v3773 = vunpack.c.l.b16 %v3346
    %v3774 = vunpack.c.h.b16 %v3346
    %v3775 = vunpack.c.l.b16 %v3347
    %v3776 = vunpack.c.h.b16 %v3347
    %v3777 = vunpack.c.l.b16 %v3348
    %v3778 = vunpack.c.h.b16 %v3348
    %v3779 = vunpack.c.l.b16 %v3349
    %v3780 = vunpack.c.h.b16 %v3349
    %v3781 = vunpack.c.l.b16 %v3350
    %v3782 = vunpack.c.h.b16 %v3350
    %v3783 = vunpack.c.l.b16 %v3351
    %v3784 = vunpack.c.h.b16 %v3351
    %v3785 = vunpack.c.l.b16 %v3352
    %v3786 = vunpack.c.h.b16 %v3352
    %v3787 = vunpack.c.l.b16 %v3353
    %v3788 = vunpack.c.l.b16 %v3354
    %v3789 = vunpack.c.h.b16 %v3354
    %v3790 = vunpack.c.l.b16 %v3355
    %v3791 = vunpack.c.h.b16 %v3355
    %v3792 = vunpack.c.l.b16 %v3356
    %v3793 = vunpack.c.h.b16 %v3356
    %v3794 = vunpack.c.l.b16 %v3357
    %v3795 = vunpack.c.h.b16 %v3357
    %v3796 = vunpack.c.l.b16 %v3358
    %v3797 = vunpack.c.h.b16 %v3358
    %v3798 = vunpack.c.l.b16 %v3359
    %v3799 = vunpack.c.h.b16 %v3359
    %v3800 = vunpack.c.l.b16 %v3360
    %v3801 = vunpack.c.h.b16 %v3360
    %v3802 = vunpack.c.l.b16 %v3361
    %v3803 = vunpack.c.h.b16 %v3361
    %v3804 = vunpack.c.l.b16 %v3362
    %v3805 = vunpack.c.h.b16 %v3362
    %v3806 = vunpack.c.l.b16 %v3363
    %v3807 = vunpack.c.l.b16 %v3364
    %v3808 = vunpack.c.h.b16 %v3364
    %v3809 = vunpack.c.l.b16 %v3365
    %v3810 = vunpack.c.h.b16 %v3365
    %v3811 = vunpack.c.l.b16 %v3366
    %v3812 = vunpack.c.h.b16 %v3366
    %v3813 = vunpack.c.l.b16 %v3367
    %v3814 = vunpack.c.h.b16 %v3367
    %v3815 = vunpack.c.l.b16 %v3368
    %v3816 = vunpack.c.h.b16 %v3368
    %v3817 = vunpack.c.l.b16 %v3369
    %v3818 = vunpack.c.h.b16 %v3369
    %v3819 = vunpack.c.l.b16 %v3370
    %v3820 = vunpack.c.h.b16 %v3370
    %v3821 = vunpack.c.l.b16 %v3371
    %v3822 = vunpack.c.h.b16 %v3371
    %v3823 = vunpack.c.l.b16 %v3372
    %v3824 = vunpack.c.h.b16 %v3372
    %v3825 = vunpack.c.l.b16 %v3373
    %v3826 = vunpack.c.l.b16 %v3374
    %v3827 = vunpack.c.h.b16 %v3374
    %v3828 = vunpack.c.l.b16 %v3375
    %v3829 = vunpack.c.h.b16 %v3375
    %v3830 = vunpack.c.l.b16 %v3376
    %v3831 = vunpack.c.h.b16 %v3376
    %v3832 = vunpack.c.l.b16 %v3377
    %v3833 = vunpack.c.h.b16 %v3377
    %v3834 = vunpack.c.l.b16 %v3378
    %v3835 = vunpack.c.h.b16 %v3378
    %v3836 = vunpack.c.l.b16 %v3379
    %v3837 = vunpack.c.h.b16 %v3379
    %v3838 = vunpack.c.l.b16 %v3380
    %v3839 = vunpack.c.h.b16 %v3380
    %v3840 = vunpack.c.l.b16 %v3381
    %v3841 = vunpack.c.h.b16 %v3381
    %v3842 = vunpack.c.l.b16 %v3382
    %v3843 = vunpack.c.h.b16 %v3382
    %v3844 = vunpack.c.l.b16 %v3383
    %v3845 = vunpack.c.l.b16 %v3384
    %v3846 = vunpack.c.h.b16 %v3384
    %v3847 = vunpack.c.l.b16 %v3385
    %v3848 = vunpack.c.h.b16 %v3385
    %v3849 = vunpack.c.l.b16 %v3386
    %v3850 = vunpack.c.h.b16 %v3386
    %v3851 = vunpack.c.l.b16 %v3387
    %v3852 = vunpack.c.h.b16 %v3387
    %v3853 = vunpack.c.l.b16 %v3388
    %v3854 = vunpack.c.h.b16 %v3388
    %v3855 = vunpack.c.l.b16 %v3389
    %v3856 = vunpack.c.h.b16 %v3389
    %v3857 = vunpack.c.l.b16 %v3390
    %v3858 = vunpack.c.h.b16 %v3390
    %v3859 = vunpack.c.l.b16 %v3391
    %v3860 = vunpack.c.h.b16 %v3391
    %v3861 = vunpack.c.l.b16 %v3392
    %v3862 = vunpack.c.h.b16 %v3392
    %v3863 = vunpack.c.l.b16 %v3393
    %v3864 = vunpack.c.l.b16 %v3394
    %v3865 = vunpack.c.h.b16 %v3394
    %v3866 = vunpack.c.l.b16 %v3395
    %v3867 = vunpack.c.h.b16 %v3395
    %v3868 = vunpack.c.l.b16 %v3396
    %v3869 = vunpack.c.h.b16 %v3396
    %v3870 = vunpack.c.l.b16 %v3397
    %v3871 = vunpack.c.h.b16 %v3397
    %v3872 = vunpack.c.l.b16 %v3398
    %v3873 = vunpack.c.h.b16 %v3398
    %v3874 = vunpack.c.l.b16 %v3399
    %v3875 = vunpack.c.h.b16 %v3399
    %v3876 = vunpack.c.l.b16 %v3400
    %v3877 = vunpack.c.h.b16 %v3400
    %v3878 = vunpack.c.l.b16 %v3401
    %v3879 = vunpack.c.h.b16 %v3401
    %v3880 = vunpack.c.l.b16 %v3402
    %v3881 = vunpack.c.h.b16 %v3402
    %v3882 = vunpack.c.l.b16 %v3403
    %v3883 = vunpack.c.l.b16 %v3404
    %v3884 = vunpack.c.h.b16 %v3404
    %v3885 = vunpack.c.l.b16 %v3405
    %v3886 = vunpack.c.h.b16 %v3405
    %v3887 = vunpack.c.l.b16 %v3406
    %v3888 = vunpack.c.h.b16 %v3406
    %v3889 = vunpack.c.l.b16 %v3407
    %v3890 = vunpack.c.h.b16 %v3407
    %v3891 = vunpack.c.l.b16 %v3408
    %v3892 = vunpack.c.h.b16 %v3408
    %v3893 = vunpack.c.l.b16 %v3409
    %v3894 = vunpack.c.h.b16 %v3409
    %v3895 = vunpack.c.l.b16 %v3410
    %v3896 = vunpack.c.h.b16 %v3410
    %v3897 = vunpack.c.l.b16 %v3411
    %v3898 = vunpack.c.h.b16 %v3411
    %v3899 = vunpack.c.l.b16 %v3412
    %v3900 = vunpack.c.h.b16 %v3412
    %v3901 = vunpack.c.l.b16 %v3413
    %v3902 = vunpack.c.l.b16 %v3414
    %v3903 = vunpack.c.h.b16 %v3414
    %v3904 = vunpack.c.l.b16 %v3415
    %v3905 = vunpack.c.h.b16 %v3415
    %v3906 = vunpack.c.l.b16 %v3416
    %v3907 = vunpack.c.h.b16 %v3416
    %v3908 = vunpack.c.l.b16 %v3417
    %v3909 = vunpack.c.h.b16 %v3417
    %v3910 = vunpack.c.l.b16 %v3418
    %v3911 = vunpack.c.h.b16 %v3418
    %v3912 = vunpack.c.l.b16 %v3419
    %v3913 = vunpack.c.h.b16 %v3419
    %v3914 = vunpack.c.l.b16 %v3420
    %v3915 = vunpack.c.h.b16 %v3420
    %v3916 = vunpack.c.l.b16 %v3421
    %v3917 = vunpack.c.h.b16 %v3421
    %v3918 = vunpack.c.l.b16 %v3422
    %v3919 = vunpack.c.h.b16 %v3422
    %v3920 = vunpack.c.l.b16 %v3423
    %v3921 = vunpack.c.l.b16 %v3424
    %v3922 = vunpack.c.h.b16 %v3424
    %v3923 = vunpack.c.l.b16 %v3425
    %v3924 = vunpack.c.h.b16 %v3425
    %v3925 = vunpack.c.l.b16 %v3426
    %v3926 = vunpack.c.h.b16 %v3426
    %v3927 = vunpack.c.l.b16 %v3427
    %v3928 = vunpack.c.h.b16 %v3427
    %v3929 = vunpack.c.l.b16 %v3428
    %v3930 = vunpack.c.h.b16 %v3428
    %v3931 = vunpack.c.l.b16 %v3429
    %v3932 = vunpack.c.h.b16 %v3429
    %v3933 = vunpack.c.l.b16 %v3430
    %v3934 = vunpack.c.h.b16 %v3430
    %v3935 = vunpack.c.l.b16 %v3431
    %v3936 = vunpack.c.h.b16 %v3431
    %v3937 = vunpack.c.l.b16 %v3432
    %v3938 = vunpack.c.h.b16 %v3432
    %v3939 = vunpack.c.l.b16 %v3433
    %v3940 = vunpack.c.l.b16 %v3434
    %v3941 = vunpack.c.h.b16 %v3434
    %v3942 = vunpack.c.l.b16 %v3435
    %v3943 = vunpack.c.h.b16 %v3435
    %v3944 = vunpack.c.l.b16 %v3436
    %v3945 = vunpack.c.h.b16 %v3436
    %v3946 = vunpack.c.l.b16 %v3437
    %v3947 = vunpack.c.h.b16 %v3437
    %v3948 = vunpack.c.l.b16 %v3438
    %v3949 = vunpack.c.h.b16 %v3438
    %v3950 = vunpack.c.l.b16 %v3439
    %v3951 = vunpack.c.h.b16 %v3439
    %v3952 = vunpack.c.l.b16 %v3440
    %v3953 = vunpack.c.h.b16 %v3440
    %v3954 = vunpack.c.l.b16 %v3441
    %v3955 = vunpack.c.h.b16 %v3441
    %v3956 = vunpack.c.l.b16 %v3442
    %v3957 = vunpack.c.h.b16 %v3442
    %v3958 = vunpack.c.l.b16 %v3443
    %v3959 = vunpack.c.l.b16 %v3444
    %v3960 = vunpack.c.h.b16 %v3444
    %v3961 = vunpack.c.l.b16 %v3445
    %v3962 = vunpack.c.h.b16 %v3445
    %v3963 = vunpack.c.l.b16 %v3446
    %v3964 = vunpack.c.h.b16 %v3446
    %v3965 = vunpack.c.l.b16 %v3447
    %v3966 = vunpack.c.h.b16 %v3447
    %v3967 = vunpack.c.l.b16 %v3448
    %v3968 = vunpack.c.h.b16 %v3448
    %v3969 = vunpack.c.l.b16 %v3449
    %v3970 = vunpack.c.h.b16 %v3449
    %v3971 = vunpack.c.l.b16 %v3450
    %v3972 = vunpack.c.h.b16 %v3450
    %v3973 = vunpack.c.l.b16 %v3451
    %v3974 = vunpack.c.h.b16 %v3451
    %v3975 = vunpack.c.l.b16 %v3452
    %v3976 = vunpack.c.h.b16 %v3452
    %v3977 = vunpack.c.l.b16 %v3453
    %v3978 = vunpack.c.l.b16 %v3454
    %v3979 = vunpack.c.h.b16 %v3454
    %v3980 = vunpack.c.l.b16 %v3455
    %v3981 = vunpack.c.h.b16 %v3455
    %v3982 = vunpack.c.l.b16 %v3456
    %v3983 = vunpack.c.h.b16 %v3456
    %v3984 = vunpack.c.l.b16 %v3457
    %v3985 = vunpack.c.h.b16 %v3457
    %v3986 = vunpack.c.l.b16 %v3458
    %v3987 = vunpack.c.h.b16 %v3458
    %v3988 = vunpack.c.l.b16 %v3459
    %v3989 = vunpack.c.h.b16 %v3459
    %v3990 = vunpack.c.l.b16 %v3460
    %v3991 = vunpack.c.h.b16 %v3460
    %v3992 = vunpack.c.l.b16 %v3461
    %v3993 = vunpack.c.h.b16 %v3461
    %v3994 = vunpack.c.l.b16 %v3462
    %v3995 = vunpack.c.h.b16 %v3462
    %v3996 = vunpack.c.l.b16 %v3463
    %v3997 = vunpack.c.l.b16 %v3464
    %v3998 = vunpack.c.h.b16 %v3464
    %v3999 = vunpack.c.l.b16 %v3465
    %v4000 = vunpack.c.h.b16 %v3465
    %v4001 = vunpack.c.l.b16 %v3466
    %v4002 = vunpack.c.h.b16 %v3466
    %v4003 = vunpack.c.l.b16 %v3467
    %v4004 = vunpack.c.h.b16 %v3467
    %v4005 = vunpack.c.l.b16 %v3468
    %v4006 = vunpack.c.h.b16 %v3468
    %v4007 = vunpack.c.l.b16 %v3469
    %v4008 = vunpack.c.h.b16 %v3469
    %v4009 = vunpack.c.l.b16 %v3470
    %v4010 = vunpack.c.h.b16 %v3470
    %v4011 = vunpack.c.l.b16 %v3471
    %v4012 = vunpack.c.h.b16 %v3471
    %v4013 = vunpack.c.l.b16 %v3472
    %v4014 = vunpack.c.h.b16 %v3472
    %v4015 = vunpack.c.l.b16 %v3473
    %v4016 = vunpack.c.l.b16 %v3474
    %v4017 = vunpack.c.h.b16 %v3474
    %v4018 = vunpack.c.l.b16 %v3475
    %v4019 = vunpack.c.h.b16 %v3475
    %v4020 = vunpack.c.l.b16 %v3476
    %v4021 = vunpack.c.h.b16 %v3476
    %v4022 = vunpack.c.l.b16 %v3477
    %v4023 = vunpack.c.h.b16 %v3477
    %v4024 = vunpack.c.l.b16 %v3478
    %v4025 = vunpack.c.h.b16 %v3478
    %v4026 = vunpack.c.l.b16 %v3479
    %v4027 = vunpack.c.h.b16 %v3479
    %v4028 = vunpack.c.l.b16 %v3480
    %v4029 = vunpack.c.h.b16 %v3480
    %v4030 = vunpack.c.l.b16 %v3481
    %v4031 = vunpack.c.h.b16 %v3481
    %v4032 = vunpack.c.l.b16 %v3482
    %v4033 = vunpack.c.h.b16 %v3482
    %v4034 = vunpack.c.l.b16 %v3483
    %v4035 = vpack.c.b16 %v3693, %v3674
    %v4036 = vpack.c.b16 %v3694, %v3675
    %v4037 = vpack.c.b16 %v3695, %v3676
    %v4038 = vpack.c.b16 %v3696, %v3677
    %v4039 = vpack.c.b16 %v3697, %v3678
    %v4040 = vpack.c.b16 %v3698, %v3679
    %v4041 = vpack.c.b16 %v3699, %v3680
    %v4042 = vpack.c.b16 %v3700, %v3681
    %v4043 = vpack.c.b16 %v3701, %v3682
    %v4044 = vpack.c.b16 %v3702, %v3683
    %v4045 = vpack.c.b16 %v3703, %v3684
    %v4046 = vpack.c.b16 %v3704, %v3685
    %v4047 = vpack.c.b16 %v3705, %v3686
    %v4048 = vpack.c.b16 %v3706, %v3687
    %v4049 = vpack.c.b16 %v3707, %v3688
    %v4050 = vpack.c.b16 %v3708, %v3689
    %v4051 = vpack.c.b16 %v3709, %v3690
    %v4052 = vpack.c.b16 %v3710, %v3691
    %v4053 = vpack.c.b16 %v3711, %v3692
    %v4054 = vpack.c.b16 %v3731, %v3712
    %v4055 = vpack.c.b16 %v3732, %v3713
    %v4056 = vpack.c.b16 %v3733, %v3714
    %v4057 = vpack.c.b16 %v3734, %v3715
    %v4058 = vpack.c.b16 %v3735, %v3716
    %v4059 = vpack.c.b16 %v3736, %v3717
    %v4060 = vpack.c.b16 %v3737, %v3718
    %v4061 = vpack.c.b16 %v3738, %v3719
    %v4062 = vpack.c.b16 %v3739, %v3720
    %v4063 = vpack.c.b16 %v3740, %v3721
    %v4064 = vpack.c.b16 %v3741, %v3722
    %v4065 = vpack.c.b16 %v3742, %v3723
    %v4066 = vpack.c.b16 %v3743, %v3724
    %v4067 = vpack.c.b16 %v3744, %v3725
    %v4068 = vpack.c.b16 %v3745, %v3726
    %v4069 = vpack.c.b16 %v3746, %v3727
    %v4070 = vpack.c.b16 %v3747, %v3728
    %v4071 = vpack.c.b16 %v3748, %v3729
    %v4072 = vpack.c.b16 %v3749, %v3730
    %v4073 = vpack.c.b16 %v3769, %v3750
    %v4074 = vpack.c.b16 %v3770, %v3751
    %v4075 = vpack.c.b16 %v3771, %v3752
    %v4076 = vpack.c.b16 %v3772, %v3753
    %v4077 = vpack.c.b16 %v3773, %v3754
    %v4078 = vpack.c.b16 %v3774, %v3755
    %v4079 = vpack.c.b16 %v3775, %v3756
    %v4080 = vpack.c.b16 %v3776, %v3757
    %v4081 = vpack.c.b16 %v3777, %v3758
    %v4082 = vpack.c.b16 %v3778, %v3759
    %v4083 = vpack.c.b16 %v3779, %v3760
    %v4084 = vpack.c.b16 %v3780, %v3761
    %v4085 = vpack.c.b16 %v3781, %v3762
    %v4086 = vpack.c.b16 %v3782, %v3763
    %v4087 = vpack.c.b16 %v3783, %v3764
    %v4088 = vpack.c.b16 %v3784, %v3765
    %v4089 = vpack.c.b16 %v3785, %v3766
    %v4090 = vpack.c.b16 %v3786, %v3767
    %v4091 = vpack.c.b16 %v3787, %v3768
    %v4092 = vpack.c.b16 %v3807, %v3788
    %v4093 = vpack.c.b16 %v3808, %v3789
    %v4094 = vpack.c.b16 %v3809, %v3790
    %v4095 = vpack.c.b16 %v3810, %v3791
    %v4096 = vpack.c.b16 %v3811, %v3792
    %v4097 = vpack.c.b16 %v3812, %v3793
    %v4098 = vpack.c.b16 %v3813, %v3794
    %v4099 = vpack.c.b16 %v3814, %v3795
    %v4100 = vpack.c.b16 %v3815, %v3796
    %v4101 = vpack.c.b16 %v3816, %v3797
    %v4102 = vpack.c.b16 %v3817, %v3798
    %v4103 = vpack.c.b16 %v3818, %v3799
    %v4104 = vpack.c.b16 %v3819, %v3800
    %v4105 = vpack.c.b16 %v3820, %v3801
    %v4106 = vpack.c.b16 %v3821, %v3802
    %v4107 = vpack.c.b16 %v3822, %v3803
    %v4108 = vpack.c.b16 %v3823, %v3804
    %v4109 = vpack.c.b16 %v3824, %v3805
    %v4110 = vpack.c.b16 %v3825, %v3806
    %v4111 = vpack.c.b16 %v3845, %v3826
    %v4112 = vpack.c.b16 %v3846, %v3827
    %v4113 = vpack.c.b16 %v3847, %v3828
    %v4114 = vpack.c.b16 %v3848, %v3829
    %v4115 = vpack.c.b16 %v3849, %v3830
    %v4116 = vpack.c.b16 %v3850, %v3831
    %v4117 = vpack.c.b16 %v3851, %v3832
    %v4118 = vpack.c.b16 %v3852, %v3833
    %v4119 = vpack.c.b16 %v3853, %v3834
    %v4120 = vpack.c.b16 %v3854, %v3835
    %v4121 = vpack.c.b16 %v3855, %v3836
    %v4122 = vpack.c.b16 %v3856, %v3837
    %v4123 = vpack.c.b16 %v3857, %v3838
    %v4124 = vpack.c.b16 %v3858, %v3839
    %v4125 = vpack.c.b16 %v3859, %v3840
    %v4126 = vpack.c.b16 %v3860, %v3841
    %v4127 = vpack.c.b16 %v3861, %v3842
    %v4128 = vpack.c.b16 %v3862, %v3843
    %v4129 = vpack.c.b16 %v3863, %v3844
    %v4130 = vpack.c.b16 %v3883, %v3864
    %v4131 = vpack.c.b16 %v3884, %v3865
    %v4132 = vpack.c.b16 %v3885, %v3866
    %v4133 = vpack.c.b16 %v3886, %v3867
    %v4134 = vpack.c.b16 %v3887, %v3868
    %v4135 = vpack.c.b16 %v3888, %v3869
    %v4136 = vpack.c.b16 %v3889, %v3870
    %v4137 = vpack.c.b16 %v3890, %v3871
    %v4138 = vpack.c.b16 %v3891, %v3872
    %v4139 = vpack.c.b16 %v3892, %v3873
    %v4140 = vpack.c.b16 %v3893, %v3874
    %v4141 = vpack.c.b16 %v3894, %v3875
    %v4142 = vpack.c.b16 %v3895, %v3876
    %v4143 = vpack.c.b16 %v3896, %v3877
    %v4144 = vpack.c.b16 %v3897, %v3878
    %v4145 = vpack.c.b16 %v3898, %v3879
    %v4146 = vpack.c.b16 %v3899, %v3880
    %v4147 = vpack.c.b16 %v3900, %v3881
    %v4148 = vpack.c.b16 %v3901, %v3882
    %v4149 = vpack.c.b16 %v3921, %v3902
    %v4150 = vpack.c.b16 %v3922, %v3903
    %v4151 = vpack.c.b16 %v3923, %v3904
    %v4152 = vpack.c.b16 %v3924, %v3905
    %v4153 = vpack.c.b16 %v3925, %v3906
    %v4154 = vpack.c.b16 %v3926, %v3907
    %v4155 = vpack.c.b16 %v3927, %v3908
    %v4156 = vpack.c.b16 %v3928, %v3909
    %v4157 = vpack.c.b16 %v3929, %v3910
    %v4158 = vpack.c.b16 %v3930, %v3911
    %v4159 = vpack.c.b16 %v3931, %v3912
    %v4160 = vpack.c.b16 %v3932, %v3913
    %v4161 = vpack.c.b16 %v3933, %v3914
    %v4162 = vpack.c.b16 %v3934, %v3915
    %v4163 = vpack.c.b16 %v3935, %v3916
    %v4164 = vpack.c.b16 %v3936, %v3917
    %v4165 = vpack.c.b16 %v3937, %v3918
    %v4166 = vpack.c.b16 %v3938, %v3919
    %v4167 = vpack.c.b16 %v3939, %v3920
    %v4168 = vpack.c.b16 %v3959, %v3940
    %v4169 = vpack.c.b16 %v3960, %v3941
    %v4170 = vpack.c.b16 %v3961, %v3942
    %v4171 = vpack.c.b16 %v3962, %v3943
    %v4172 = vpack.c.b16 %v3963, %v3944
    %v4173 = vpack.c.b16 %v3964, %v3945
    %v4174 = vpack.c.b16 %v3965, %v3946
    %v4175 = vpack.c.b16 %v3966, %v3947
    %v4176 = vpack.c.b16 %v3967, %v3948
    %v4177 = vpack.c.b16 %v3968, %v3949
    %v4178 = vpack.c.b16 %v3969, %v3950
    %v4179 = vpack.c.b16 %v3970, %v3951
    %v4180 = vpack.c.b16 %v3971, %v3952
    %v4181 = vpack.c.b16 %v3972, %v3953
    %v4182 = vpack.c.b16 %v3973, %v3954
    %v4183 = vpack.c.b16 %v3974, %v3955
    %v4184 = vpack.c.b16 %v3975, %v3956
    %v4185 = vpack.c.b16 %v3976, %v3957
    %v4186 = vpack.c.b16 %v3977, %v3958
    %v4187 = vpack.c.b16 %v3997, %v3978
    %v4188 = vpack.c.b16 %v3998, %v3979
    %v4189 = vpack.c.b16 %v3999, %v3980
    %v4190 = vpack.c.b16 %v4000, %v3981
    %v4191 = vpack.c.b16 %v4001, %v3982
    %v4192 = vpack.c.b16 %v4002, %v3983
    %v4193 = vpack.c.b16 %v4003, %v3984
    %v4194 = vpack.c.b16 %v4004, %v3985
    %v4195 = vpack.c.b16 %v4005, %v3986
    %v4196 = vpack.c.b16 %v4006, %v3987
    %v4197 = vpack.c.b16 %v4007, %v3988
    %v4198 = vpack.c.b16 %v4008, %v3989
    %v4199 = vpack.c.b16 %v4009, %v3990
    %v4200 = vpack.c.b16 %v4010, %v3991
    %v4201 = vpack.c.b16 %v4011, %v3992
    %v4202 = vpack.c.b16 %v4012, %v3993
    %v4203 = vpack.c.b16 %v4013, %v3994
    %v4204 = vpack.c.b16 %v4014, %v3995
    %v4205 = vpack.c.b16 %v4015, %v3996
    %v4206 = vpack.c.b16 %v4016, %v4016
    %v4207 = vpack.c.b16 %v4017, %v4017
    %v4208 = vpack.c.b16 %v4018, %v4018
    %v4209 = vpack.c.b16 %v4019, %v4019
    %v4210 = vpack.c.b16 %v4020, %v4020
    %v4211 = vpack.c.b16 %v4021, %v4021
    %v4212 = vpack.c.b16 %v4022, %v4022
    %v4213 = vpack.c.b16 %v4023, %v4023
    %v4214 = vpack.c.b16 %v4024, %v4024
    %v4215 = vpack.c.b16 %v4025, %v4025
    %v4216 = vpack.c.b16 %v4026, %v4026
    %v4217 = vpack.c.b16 %v4027, %v4027
    %v4218 = vpack.c.b16 %v4028, %v4028
    %v4219 = vpack.c.b16 %v4029, %v4029
    %v4220 = vpack.c.b16 %v4030, %v4030
    %v4221 = vpack.c.b16 %v4031, %v4031
    %v4222 = vpack.c.b16 %v4032, %v4032
    %v4223 = vpack.c.b16 %v4033, %v4033
    %v4224 = vpack.c.b16 %v4034, %v4034
    %v4397 = vsel %vm1147, %v4206, 0
    %v4400 = vsel %vm1147, %v4207, 0
    %v4403 = vsel %vm1147, %v4208, 0
    %v4406 = vsel %vm1147, %v4209, 0
    %v4409 = vsel %vm1147, %v4210, 0
    %v4412 = vsel %vm1147, %v4211, 0
    %v4415 = vsel %vm1147, %v4212, 0
    %v4418 = vsel %vm1147, %v4213, 0
    %v4421 = vsel %vm1147, %v4214, 0
    %v4424 = vsel %vm1147, %v4215, 0
    %v4427 = vsel %vm1147, %v4216, 0
    %v4430 = vsel %vm1147, %v4217, 0
    %v4433 = vsel %vm1147, %v4218, 0
    %v4436 = vsel %vm1147, %v4219, 0
    %v4439 = vsel %vm1147, %v4220, 0
    %v4442 = vsel %vm1147, %v4221, 0
    %v4445 = vsel %vm1147, %v4222, 0
    %v4448 = vsel %vm1147, %v4223, 0
    %v4451 = vsel %vm1147, %v4224, 0
    %4453 = vmatprep.subr.bf16.mxu0 %v4036
    %4454 = vmatpush1.bf16.msra.mxu0 %v4035
    %4455 = vmatprep.subr.bf16.mxu0 %v4055
    %4456 = vmatpush1.bf16.msra.mxu0 %v4054
    %4457 = vmatprep.subr.bf16.mxu0 %v4074
    %4458 = vmatpush1.bf16.msra.mxu0 %v4073
    %4459 = vmatprep.subr.bf16.mxu0 %v4093
    %4460 = vmatpush1.bf16.msra.mxu0 %v4092
    %4461 = vmatprep.subr.bf16.mxu0 %v4112
    %4462 = vmatpush1.bf16.msra.mxu0 %v4111
    %4463 = vmatprep.subr.bf16.mxu0 %v4131
    %4464 = vmatpush1.bf16.msra.mxu0 %v4130
    %4465 = vmatprep.subr.bf16.mxu0 %v4150
    %4466 = vmatpush1.bf16.msra.mxu0 %v4149
    %4467 = vmatprep.subr.bf16.mxu0 %v4169
    %4468 = vmatpush1.bf16.msra.mxu0 %v4168
    %4469 = vmatprep.subr.bf16.mxu0 %v4188
    %4470 = vmatpush1.bf16.msra.mxu0 %v4187
    %4471 = vmatprep.subr.bf16.mxu0 %v4400
    %4472 = vmatpush1.bf16.msra.mxu0 %v4397
    %4473 = vmatprep.subr.bf16.mxu0 0
    %4474 = vmatpush1.bf16.msra.mxu0 0
    %4475 = vmatprep.subr.bf16.mxu0 0
    %4476 = vmatpush1.bf16.msra.mxu0 0
    %4477 = vmatprep.subr.bf16.mxu0 0
    %4478 = vmatpush1.bf16.msra.mxu0 0
    %4479 = vmatprep.subr.bf16.mxu0 0
    %4480 = vmatpush1.bf16.msra.mxu0 0
    %4481 = vmatprep.subr.bf16.mxu0 0
    %4482 = vmatpush1.bf16.msra.mxu0 0
    %4483 = vmatprep.subr.bf16.mxu0 0
    %4484 = vmatpush1.bf16.msra.mxu0 0
    %4485 = vmatprep.mubr.bf16.mxu0 %v1145
    %4486 = vmatmul.mubr.bf16.gmra.mrb[0].mxu0 %v228
    %v4487 = vpop.f32.mrb[0].mxu0
    %v4488 = vadd.f32 0.0, %v4487
    %v4489 = vpop.f32.mrb[0].mxu0
    %v4490 = vadd.f32 0.0, %v4489
    %v4491 = vpop.f32.mrb[0].mxu0
    %v4492 = vpop.f32.mrb[0].mxu0
    %4493 = vdwg.mxu0
    %4494 = vmatprep.subr.bf16.mxu0 %v4038
    %4495 = vmatpush1.bf16.msra.mxu0 %v4037
    %4496 = vmatprep.subr.bf16.mxu0 %v4057
    %4497 = vmatpush1.bf16.msra.mxu0 %v4056
    %4498 = vmatprep.subr.bf16.mxu0 %v4076
    %4499 = vmatpush1.bf16.msra.mxu0 %v4075
    %4500 = vmatprep.subr.bf16.mxu0 %v4095
    %4501 = vmatpush1.bf16.msra.mxu0 %v4094
    %4502 = vmatprep.subr.bf16.mxu0 %v4114
    %4503 = vmatpush1.bf16.msra.mxu0 %v4113
    %4504 = vmatprep.subr.bf16.mxu0 %v4133
    %4505 = vmatpush1.bf16.msra.mxu0 %v4132
    %4506 = vmatprep.subr.bf16.mxu0 %v4152
    %4507 = vmatpush1.bf16.msra.mxu0 %v4151
    %4508 = vmatprep.subr.bf16.mxu0 %v4171
    %4509 = vmatpush1.bf16.msra.mxu0 %v4170
    %4510 = vmatprep.subr.bf16.mxu0 %v4190
    %4511 = vmatpush1.bf16.msra.mxu0 %v4189
    %4512 = vmatprep.subr.bf16.mxu0 %v4406
    %4513 = vmatpush1.bf16.msra.mxu0 %v4403
    %4514 = vmatprep.subr.bf16.mxu0 0
    %4515 = vmatpush1.bf16.msra.mxu0 0
    %4516 = vmatprep.subr.bf16.mxu0 0
    %4517 = vmatpush1.bf16.msra.mxu0 0
    %4518 = vmatprep.subr.bf16.mxu0 0
    %4519 = vmatpush1.bf16.msra.mxu0 0
    %4520 = vmatprep.subr.bf16.mxu0 0
    %4521 = vmatpush1.bf16.msra.mxu0 0
    %4522 = vmatprep.subr.bf16.mxu0 0
    %4523 = vmatpush1.bf16.msra.mxu0 0
    %4524 = vmatprep.subr.bf16.mxu0 0
    %4525 = vmatpush1.bf16.msra.mxu0 0
    %4526 = vmatprep.mubr.bf16.mxu0 %v1145
    %4527 = vmatmul.mubr.bf16.gmra.mrb[0].mxu0 %v228
    %v4528 = vpop.f32.mrb[0].mxu0
    %v4529 = vadd.f32 0.0, %v4528
    %v4530 = vpop.f32.mrb[0].mxu0
    %v4531 = vadd.f32 0.0, %v4530
    %v4532 = vpop.f32.mrb[0].mxu0
    %v4533 = vpop.f32.mrb[0].mxu0
    %4534 = vdwg.mxu0
    %4535 = vmatprep.subr.bf16.mxu0 %v4040
    %4536 = vmatpush1.bf16.msra.mxu0 %v4039
    %4537 = vmatprep.subr.bf16.mxu0 %v4059
    %4538 = vmatpush1.bf16.msra.mxu0 %v4058
    %4539 = vmatprep.subr.bf16.mxu0 %v4078
    %4540 = vmatpush1.bf16.msra.mxu0 %v4077
    %4541 = vmatprep.subr.bf16.mxu0 %v4097
    %4542 = vmatpush1.bf16.msra.mxu0 %v4096
    %4543 = vmatprep.subr.bf16.mxu0 %v4116
    %4544 = vmatpush1.bf16.msra.mxu0 %v4115
    %4545 = vmatprep.subr.bf16.mxu0 %v4135
    %4546 = vmatpush1.bf16.msra.mxu0 %v4134
    %4547 = vmatprep.subr.bf16.mxu0 %v4154
    %4548 = vmatpush1.bf16.msra.mxu0 %v4153
    %4549 = vmatprep.subr.bf16.mxu0 %v4173
    %4550 = vmatpush1.bf16.msra.mxu0 %v4172
    %4551 = vmatprep.subr.bf16.mxu0 %v4192
    %4552 = vmatpush1.bf16.msra.mxu0 %v4191
    %4553 = vmatprep.subr.bf16.mxu0 %v4412
    %4554 = vmatpush1.bf16.msra.mxu0 %v4409
    %4555 = vmatprep.subr.bf16.mxu0 0
    %4556 = vmatpush1.bf16.msra.mxu0 0
    %4557 = vmatprep.subr.bf16.mxu0 0
    %4558 = vmatpush1.bf16.msra.mxu0 0
    %4559 = vmatprep.subr.bf16.mxu0 0
    %4560 = vmatpush1.bf16.msra.mxu0 0
    %4561 = vmatprep.subr.bf16.mxu0 0
    %4562 = vmatpush1.bf16.msra.mxu0 0
    %4563 = vmatprep.subr.bf16.mxu0 0
    %4564 = vmatpush1.bf16.msra.mxu0 0
    %4565 = vmatprep.subr.bf16.mxu0 0
    %4566 = vmatpush1.bf16.msra.mxu0 0
    %4567 = vmatprep.mubr.bf16.mxu0 %v1145
    %4568 = vmatmul.mubr.bf16.gmra.mrb[0].mxu0 %v228
    %v4569 = vpop.f32.mrb[0].mxu0
    %v4570 = vadd.f32 0.0, %v4569
    %v4571 = vpop.f32.mrb[0].mxu0
    %v4572 = vadd.f32 0.0, %v4571
    %v4573 = vpop.f32.mrb[0].mxu0
    %v4574 = vpop.f32.mrb[0].mxu0
    %4575 = vdwg.mxu0
    %4576 = vmatprep.subr.bf16.mxu0 %v4042
    %4577 = vmatpush1.bf16.msra.mxu0 %v4041
    %4578 = vmatprep.subr.bf16.mxu0 %v4061
    %4579 = vmatpush1.bf16.msra.mxu0 %v4060
    %4580 = vmatprep.subr.bf16.mxu0 %v4080
    %4581 = vmatpush1.bf16.msra.mxu0 %v4079
    %4582 = vmatprep.subr.bf16.mxu0 %v4099
    %4583 = vmatpush1.bf16.msra.mxu0 %v4098
    %4584 = vmatprep.subr.bf16.mxu0 %v4118
    %4585 = vmatpush1.bf16.msra.mxu0 %v4117
    %4586 = vmatprep.subr.bf16.mxu0 %v4137
    %4587 = vmatpush1.bf16.msra.mxu0 %v4136
    %4588 = vmatprep.subr.bf16.mxu0 %v4156
    %4589 = vmatpush1.bf16.msra.mxu0 %v4155
    %4590 = vmatprep.subr.bf16.mxu0 %v4175
    %4591 = vmatpush1.bf16.msra.mxu0 %v4174
    %4592 = vmatprep.subr.bf16.mxu0 %v4194
    %4593 = vmatpush1.bf16.msra.mxu0 %v4193
    %4594 = vmatprep.subr.bf16.mxu0 %v4418
    %4595 = vmatpush1.bf16.msra.mxu0 %v4415
    %4596 = vmatprep.subr.bf16.mxu0 0
    %4597 = vmatpush1.bf16.msra.mxu0 0
    %4598 = vmatprep.subr.bf16.mxu0 0
    %4599 = vmatpush1.bf16.msra.mxu0 0
    %4600 = vmatprep.subr.bf16.mxu0 0
    %4601 = vmatpush1.bf16.msra.mxu0 0
    %4602 = vmatprep.subr.bf16.mxu0 0
    %4603 = vmatpush1.bf16.msra.mxu0 0
    %4604 = vmatprep.subr.bf16.mxu0 0
    %4605 = vmatpush1.bf16.msra.mxu0 0
    %4606 = vmatprep.subr.bf16.mxu0 0
    %4607 = vmatpush1.bf16.msra.mxu0 0
    %4608 = vmatprep.mubr.bf16.mxu0 %v1145
    %4609 = vmatmul.mubr.bf16.gmra.mrb[0].mxu0 %v228
    %v4610 = vpop.f32.mrb[0].mxu0
    %v4611 = vadd.f32 0.0, %v4610
    %v4612 = vpop.f32.mrb[0].mxu0
    %v4613 = vadd.f32 0.0, %v4612
    %v4614 = vpop.f32.mrb[0].mxu0
    %v4615 = vpop.f32.mrb[0].mxu0
    %4616 = vdwg.mxu0
    %4617 = vmatprep.subr.bf16.mxu0 %v4044
    %4618 = vmatpush1.bf16.msra.mxu0 %v4043
    %4619 = vmatprep.subr.bf16.mxu0 %v4063
    %4620 = vmatpush1.bf16.msra.mxu0 %v4062
    %4621 = vmatprep.subr.bf16.mxu0 %v4082
    %4622 = vmatpush1.bf16.msra.mxu0 %v4081
    %4623 = vmatprep.subr.bf16.mxu0 %v4101
    %4624 = vmatpush1.bf16.msra.mxu0 %v4100
    %4625 = vmatprep.subr.bf16.mxu0 %v4120
    %4626 = vmatpush1.bf16.msra.mxu0 %v4119
    %4627 = vmatprep.subr.bf16.mxu0 %v4139
    %4628 = vmatpush1.bf16.msra.mxu0 %v4138
    %4629 = vmatprep.subr.bf16.mxu0 %v4158
    %4630 = vmatpush1.bf16.msra.mxu0 %v4157
    %4631 = vmatprep.subr.bf16.mxu0 %v4177
    %4632 = vmatpush1.bf16.msra.mxu0 %v4176
    %4633 = vmatprep.subr.bf16.mxu0 %v4196
    %4634 = vmatpush1.bf16.msra.mxu0 %v4195
    %4635 = vmatprep.subr.bf16.mxu0 %v4424
    %4636 = vmatpush1.bf16.msra.mxu0 %v4421
    %4637 = vmatprep.subr.bf16.mxu0 0
    %4638 = vmatpush1.bf16.msra.mxu0 0
    %4639 = vmatprep.subr.bf16.mxu0 0
    %4640 = vmatpush1.bf16.msra.mxu0 0
    %4641 = vmatprep.subr.bf16.mxu0 0
    %4642 = vmatpush1.bf16.msra.mxu0 0
    %4643 = vmatprep.subr.bf16.mxu0 0
    %4644 = vmatpush1.bf16.msra.mxu0 0
    %4645 = vmatprep.subr.bf16.mxu0 0
    %4646 = vmatpush1.bf16.msra.mxu0 0
    %4647 = vmatprep.subr.bf16.mxu0 0
    %4648 = vmatpush1.bf16.msra.mxu0 0
    %4649 = vmatprep.mubr.bf16.mxu0 %v1145
    %4650 = vmatmul.mubr.bf16.gmra.mrb[0].mxu0 %v228
    %v4651 = vpop.f32.mrb[0].mxu0
    %v4652 = vadd.f32 0.0, %v4651
    %v4653 = vpop.f32.mrb[0].mxu0
    %v4654 = vadd.f32 0.0, %v4653
    %v4655 = vpop.f32.mrb[0].mxu0
    %v4656 = vpop.f32.mrb[0].mxu0
    %4657 = vdwg.mxu0
    %4658 = vmatprep.subr.bf16.mxu0 %v4046
    %4659 = vmatpush1.bf16.msra.mxu0 %v4045
    %4660 = vmatprep.subr.bf16.mxu0 %v4065
    %4661 = vmatpush1.bf16.msra.mxu0 %v4064
    %4662 = vmatprep.subr.bf16.mxu0 %v4084
    %4663 = vmatpush1.bf16.msra.mxu0 %v4083
    %4664 = vmatprep.subr.bf16.mxu0 %v4103
    %4665 = vmatpush1.bf16.msra.mxu0 %v4102
    %4666 = vmatprep.subr.bf16.mxu0 %v4122
    %4667 = vmatpush1.bf16.msra.mxu0 %v4121
    %4668 = vmatprep.subr.bf16.mxu0 %v4141
    %4669 = vmatpush1.bf16.msra.mxu0 %v4140
    %4670 = vmatprep.subr.bf16.mxu0 %v4160
    %4671 = vmatpush1.bf16.msra.mxu0 %v4159
    %4672 = vmatprep.subr.bf16.mxu0 %v4179
    %4673 = vmatpush1.bf16.msra.mxu0 %v4178
    %4674 = vmatprep.subr.bf16.mxu0 %v4198
    %4675 = vmatpush1.bf16.msra.mxu0 %v4197
    %4676 = vmatprep.subr.bf16.mxu0 %v4430
    %4677 = vmatpush1.bf16.msra.mxu0 %v4427
    %4678 = vmatprep.subr.bf16.mxu0 0
    %4679 = vmatpush1.bf16.msra.mxu0 0
    %4680 = vmatprep.subr.bf16.mxu0 0
    %4681 = vmatpush1.bf16.msra.mxu0 0
    %4682 = vmatprep.subr.bf16.mxu0 0
    %4683 = vmatpush1.bf16.msra.mxu0 0
    %4684 = vmatprep.subr.bf16.mxu0 0
    %4685 = vmatpush1.bf16.msra.mxu0 0
    %4686 = vmatprep.subr.bf16.mxu0 0
    %4687 = vmatpush1.bf16.msra.mxu0 0
    %4688 = vmatprep.subr.bf16.mxu0 0
    %4689 = vmatpush1.bf16.msra.mxu0 0
    %4690 = vmatprep.mubr.bf16.mxu0 %v1145
    %4691 = vmatmul.mubr.bf16.gmra.mrb[0].mxu0 %v228
    %v4692 = vpop.f32.mrb[0].mxu0
    %v4693 = vadd.f32 0.0, %v4692
    %v4694 = vpop.f32.mrb[0].mxu0
    %v4695 = vadd.f32 0.0, %v4694
    %v4696 = vpop.f32.mrb[0].mxu0
    %v4697 = vpop.f32.mrb[0].mxu0
    %4698 = vdwg.mxu0
    %4699 = vmatprep.subr.bf16.mxu0 %v4048
    %4700 = vmatpush1.bf16.msra.mxu0 %v4047
    %4701 = vmatprep.subr.bf16.mxu0 %v4067
    %4702 = vmatpush1.bf16.msra.mxu0 %v4066
    %4703 = vmatprep.subr.bf16.mxu0 %v4086
    %4704 = vmatpush1.bf16.msra.mxu0 %v4085
    %4705 = vmatprep.subr.bf16.mxu0 %v4105
    %4706 = vmatpush1.bf16.msra.mxu0 %v4104
    %4707 = vmatprep.subr.bf16.mxu0 %v4124
    %4708 = vmatpush1.bf16.msra.mxu0 %v4123
    %4709 = vmatprep.subr.bf16.mxu0 %v4143
    %4710 = vmatpush1.bf16.msra.mxu0 %v4142
    %4711 = vmatprep.subr.bf16.mxu0 %v4162
    %4712 = vmatpush1.bf16.msra.mxu0 %v4161
    %4713 = vmatprep.subr.bf16.mxu0 %v4181
    %4714 = vmatpush1.bf16.msra.mxu0 %v4180
    %4715 = vmatprep.subr.bf16.mxu0 %v4200
    %4716 = vmatpush1.bf16.msra.mxu0 %v4199
    %4717 = vmatprep.subr.bf16.mxu0 %v4436
    %4718 = vmatpush1.bf16.msra.mxu0 %v4433
    %4719 = vmatprep.subr.bf16.mxu0 0
    %4720 = vmatpush1.bf16.msra.mxu0 0
    %4721 = vmatprep.subr.bf16.mxu0 0
    %4722 = vmatpush1.bf16.msra.mxu0 0
    %4723 = vmatprep.subr.bf16.mxu0 0
    %4724 = vmatpush1.bf16.msra.mxu0 0
    %4725 = vmatprep.subr.bf16.mxu0 0
    %4726 = vmatpush1.bf16.msra.mxu0 0
    %4727 = vmatprep.subr.bf16.mxu0 0
    %4728 = vmatpush1.bf16.msra.mxu0 0
    %4729 = vmatprep.subr.bf16.mxu0 0
    %4730 = vmatpush1.bf16.msra.mxu0 0
    %4731 = vmatprep.mubr.bf16.mxu0 %v1145
    %4732 = vmatmul.mubr.bf16.gmra.mrb[0].mxu0 %v228
    %v4733 = vpop.f32.mrb[0].mxu0
    %v4734 = vadd.f32 0.0, %v4733
    %v4735 = vpop.f32.mrb[0].mxu0
    %v4736 = vadd.f32 0.0, %v4735
    %v4737 = vpop.f32.mrb[0].mxu0
    %v4738 = vpop.f32.mrb[0].mxu0
    %4739 = vdwg.mxu0
    %4740 = vmatprep.subr.bf16.mxu0 %v4050
    %4741 = vmatpush1.bf16.msra.mxu0 %v4049
    %4742 = vmatprep.subr.bf16.mxu0 %v4069
    %4743 = vmatpush1.bf16.msra.mxu0 %v4068
    %4744 = vmatprep.subr.bf16.mxu0 %v4088
    %4745 = vmatpush1.bf16.msra.mxu0 %v4087
    %4746 = vmatprep.subr.bf16.mxu0 %v4107
    %4747 = vmatpush1.bf16.msra.mxu0 %v4106
    %4748 = vmatprep.subr.bf16.mxu0 %v4126
    %4749 = vmatpush1.bf16.msra.mxu0 %v4125
    %4750 = vmatprep.subr.bf16.mxu0 %v4145
    %4751 = vmatpush1.bf16.msra.mxu0 %v4144
    %4752 = vmatprep.subr.bf16.mxu0 %v4164
    %4753 = vmatpush1.bf16.msra.mxu0 %v4163
    %4754 = vmatprep.subr.bf16.mxu0 %v4183
    %4755 = vmatpush1.bf16.msra.mxu0 %v4182
    %4756 = vmatprep.subr.bf16.mxu0 %v4202
    %4757 = vmatpush1.bf16.msra.mxu0 %v4201
    %4758 = vmatprep.subr.bf16.mxu0 %v4442
    %4759 = vmatpush1.bf16.msra.mxu0 %v4439
    %4760 = vmatprep.subr.bf16.mxu0 0
    %4761 = vmatpush1.bf16.msra.mxu0 0
    %4762 = vmatprep.subr.bf16.mxu0 0
    %4763 = vmatpush1.bf16.msra.mxu0 0
    %4764 = vmatprep.subr.bf16.mxu0 0
    %4765 = vmatpush1.bf16.msra.mxu0 0
    %4766 = vmatprep.subr.bf16.mxu0 0
    %4767 = vmatpush1.bf16.msra.mxu0 0
    %4768 = vmatprep.subr.bf16.mxu0 0
    %4769 = vmatpush1.bf16.msra.mxu0 0
    %4770 = vmatprep.subr.bf16.mxu0 0
    %4771 = vmatpush1.bf16.msra.mxu0 0
    %4772 = vmatprep.mubr.bf16.mxu0 %v1145
    %4773 = vmatmul.mubr.bf16.gmra.mrb[0].mxu0 %v228
    %v4774 = vpop.f32.mrb[0].mxu0
    %v4775 = vadd.f32 0.0, %v4774
    %v4776 = vpop.f32.mrb[0].mxu0
    %v4777 = vadd.f32 0.0, %v4776
    %v4778 = vpop.f32.mrb[0].mxu0
    %v4779 = vpop.f32.mrb[0].mxu0
    %4780 = vdwg.mxu0
    %4781 = vmatprep.subr.bf16.mxu0 %v4052
    %4782 = vmatpush1.bf16.msra.mxu0 %v4051
    %4783 = vmatprep.subr.bf16.mxu0 %v4071
    %4784 = vmatpush1.bf16.msra.mxu0 %v4070
    %4785 = vmatprep.subr.bf16.mxu0 %v4090
    %4786 = vmatpush1.bf16.msra.mxu0 %v4089
    %4787 = vmatprep.subr.bf16.mxu0 %v4109
    %4788 = vmatpush1.bf16.msra.mxu0 %v4108
    %4789 = vmatprep.subr.bf16.mxu0 %v4128
    %4790 = vmatpush1.bf16.msra.mxu0 %v4127
    %4791 = vmatprep.subr.bf16.mxu0 %v4147
    %4792 = vmatpush1.bf16.msra.mxu0 %v4146
    %4793 = vmatprep.subr.bf16.mxu0 %v4166
    %4794 = vmatpush1.bf16.msra.mxu0 %v4165
    %4795 = vmatprep.subr.bf16.mxu0 %v4185
    %4796 = vmatpush1.bf16.msra.mxu0 %v4184
    %4797 = vmatprep.subr.bf16.mxu0 %v4204
    %4798 = vmatpush1.bf16.msra.mxu0 %v4203
    %4799 = vmatprep.subr.bf16.mxu0 %v4448
    %4800 = vmatpush1.bf16.msra.mxu0 %v4445
    %4801 = vmatprep.subr.bf16.mxu0 0
    %4802 = vmatpush1.bf16.msra.mxu0 0
    %4803 = vmatprep.subr.bf16.mxu0 0
    %4804 = vmatpush1.bf16.msra.mxu0 0
    %4805 = vmatprep.subr.bf16.mxu0 0
    %4806 = vmatpush1.bf16.msra.mxu0 0
    %4807 = vmatprep.subr.bf16.mxu0 0
    %4808 = vmatpush1.bf16.msra.mxu0 0
    %4809 = vmatprep.subr.bf16.mxu0 0
    %4810 = vmatpush1.bf16.msra.mxu0 0
    %4811 = vmatprep.subr.bf16.mxu0 0
    %4812 = vmatpush1.bf16.msra.mxu0 0
    %4813 = vmatprep.mubr.bf16.mxu0 %v1145
    %4814 = vmatmul.mubr.bf16.gmra.mrb[0].mxu0 %v228
    %v4815 = vpop.f32.mrb[0].mxu0
    %v4816 = vadd.f32 0.0, %v4815
    %v4817 = vpop.f32.mrb[0].mxu0
    %v4818 = vadd.f32 0.0, %v4817
    %v4819 = vpop.f32.mrb[0].mxu0
    %v4820 = vpop.f32.mrb[0].mxu0
    %4821 = vdwg.mxu0
    %4822 = vmatprep.subr.bf16.mxu0 0
    %4823 = vmatpush1.bf16.msra.mxu0 %v4053
    %4824 = vmatprep.subr.bf16.mxu0 0
    %4825 = vmatpush1.bf16.msra.mxu0 %v4072
    %4826 = vmatprep.subr.bf16.mxu0 0
    %4827 = vmatpush1.bf16.msra.mxu0 %v4091
    %4828 = vmatprep.subr.bf16.mxu0 0
    %4829 = vmatpush1.bf16.msra.mxu0 %v4110
    %4830 = vmatprep.subr.bf16.mxu0 0
    %4831 = vmatpush1.bf16.msra.mxu0 %v4129
    %4832 = vmatprep.subr.bf16.mxu0 0
    %4833 = vmatpush1.bf16.msra.mxu0 %v4148
    %4834 = vmatprep.subr.bf16.mxu0 0
    %4835 = vmatpush1.bf16.msra.mxu0 %v4167
    %4836 = vmatprep.subr.bf16.mxu0 0
    %4837 = vmatpush1.bf16.msra.mxu0 %v4186
    %4838 = vmatprep.subr.bf16.mxu0 0
    %4839 = vmatpush1.bf16.msra.mxu0 %v4205
    %4840 = vmatprep.subr.bf16.mxu0 0
    %4841 = vmatpush1.bf16.msra.mxu0 %v4451
    %4842 = vmatprep.subr.bf16.mxu0 0
    %4843 = vmatpush1.bf16.msra.mxu0 0
    %4844 = vmatprep.subr.bf16.mxu0 0
    %4845 = vmatpush1.bf16.msra.mxu0 0
    %4846 = vmatprep.subr.bf16.mxu0 0
    %4847 = vmatpush1.bf16.msra.mxu0 0
    %4848 = vmatprep.subr.bf16.mxu0 0
    %4849 = vmatpush1.bf16.msra.mxu0 0
    %4850 = vmatprep.subr.bf16.mxu0 0
    %4851 = vmatpush1.bf16.msra.mxu0 0
    %4852 = vmatprep.subr.bf16.mxu0 0
    %4853 = vmatpush1.bf16.msra.mxu0 0
    %4854 = vmatprep.mubr.bf16.mxu0 %v1145
    %4855 = vmatmul.mubr.bf16.gmra.mrb[0].mxu0 %v228
    %v4856 = vpop.f32.mrb[0].mxu0
    %v4857 = vadd.f32 0.0, %v4856
    %v4858 = vpop.f32.mrb[0].mxu0
    %v4859 = vpop.f32.mrb[0].mxu0
    %v4860 = vpop.f32.mrb[0].mxu0
    %4861 = vdwg.mxu0
    %v4862 = vld [vmem:[%s2 + $0x98] sm:$0xf]
    %v4863 = vmul.f32 %v4488, %v4862
    %v4864 = vld [vmem:[%s2 + $0x9c] sm:$0xf]
    %v4865 = vmul.f32 %v4490, %v4864
    %v4866 = vadd.f32 %v4863, %v4865
    %v4867 = vld [vmem:[%s2 + $0xa0] sm:$0xf]
    %v4868 = vmul.f32 %v4529, %v4867
    %v4869 = vadd.f32 %v4866, %v4868
    %v4870 = vld [vmem:[%s2 + $0xa4] sm:$0xf]
    %v4871 = vmul.f32 %v4531, %v4870
    %v4872 = vadd.f32 %v4869, %v4871
    %v4873 = vld [vmem:[%s2 + $0xa8] sm:$0xf]
    %v4874 = vmul.f32 %v4570, %v4873
    %v4875 = vadd.f32 %v4872, %v4874
    %v4876 = vld [vmem:[%s2 + $0xac] sm:$0xf]
    %v4877 = vmul.f32 %v4572, %v4876
    %v4878 = vadd.f32 %v4875, %v4877
    %v4879 = vld [vmem:[%s2 + $0xb0] sm:$0xf]
    %v4880 = vmul.f32 %v4611, %v4879
    %v4881 = vadd.f32 %v4878, %v4880
    %v4882 = vld [vmem:[%s2 + $0xb4] sm:$0xf]
    %v4883 = vmul.f32 %v4613, %v4882
    %v4884 = vadd.f32 %v4881, %v4883
    %v4885 = vld [vmem:[%s2 + $0xb8] sm:$0xf]
    %v4886 = vmul.f32 %v4652, %v4885
    %v4887 = vadd.f32 %v4884, %v4886
    %v4888 = vld [vmem:[%s2 + $0xbc] sm:$0xf]
    %v4889 = vmul.f32 %v4654, %v4888
    %v4890 = vadd.f32 %v4887, %v4889
    %v4891 = vld [vmem:[%s2 + $0xc0] sm:$0xf]
    %v4892 = vmul.f32 %v4693, %v4891
    %v4893 = vadd.f32 %v4890, %v4892
    %v4894 = vld [vmem:[%s2 + $0xc4] sm:$0xf]
    %v4895 = vmul.f32 %v4695, %v4894
    %v4896 = vadd.f32 %v4893, %v4895
    %v4897 = vld [vmem:[%s2 + $0xc8] sm:$0xf]
    %v4898 = vmul.f32 %v4734, %v4897
    %v4899 = vadd.f32 %v4896, %v4898
    %v4900 = vld [vmem:[%s2 + $0xcc] sm:$0xf]
    %v4901 = vmul.f32 %v4736, %v4900
    %v4902 = vadd.f32 %v4899, %v4901
    %v4903 = vld [vmem:[%s2 + $0xd0] sm:$0xf]
    %v4904 = vmul.f32 %v4775, %v4903
    %v4905 = vadd.f32 %v4902, %v4904
    %v4906 = vld [vmem:[%s2 + $0xd4] sm:$0xf]
    %v4907 = vmul.f32 %v4777, %v4906
    %v4908 = vadd.f32 %v4905, %v4907
    %v4909 = vld [vmem:[%s2 + $0xd8] sm:$0xf]
    %v4910 = vmul.f32 %v4816, %v4909
    %v4911 = vadd.f32 %v4908, %v4910
    %v4912 = vld [vmem:[%s2 + $0xdc] sm:$0xf]
    %v4913 = vmul.f32 %v4818, %v4912
    %v4914 = vadd.f32 %v4911, %v4913
    %v4915 = vld [vmem:[%s2 + $0xe0] sm:$0xf]
    %v4916 = vmul.f32 %v4857, %v4915
    %v4917 = vadd.f32 %v4914, %v4916
    %v4918 = vld [vmem:[#allocation2 + $0xe4] sm:$0xff]
    %v4919 = vld [vmem:[#allocation2 + $0xec] sm:$0xff]
    %v4920 = vld [vmem:[#allocation2 + $0xf4] sm:$0xff]
    %v4921 = vld [vmem:[#allocation2 + $0xfc] sm:$0xff]
    %v4922 = vld [vmem:[#allocation2 + $0x104] sm:$0xff]
    %v4923 = vld [vmem:[#allocation2 + $0x10c] sm:$0xff]
    %v4924 = vld [vmem:[#allocation2 + $0x114] sm:$0xff]
    %v4925 = vld [vmem:[#allocation2 + $0x11c] sm:$0xff]
    %v4926 = vld [vmem:[#allocation2 + $0x124] sm:$0xff]
    %v4927 = vld [vmem:[#allocation2 + $0x12c] sm:$0xf]
    %v4928 = vld [vmem:[#allocation2 + $0x214] sm:$0xff]
    %v4929 = vld [vmem:[#allocation2 + $0x21c] sm:$0xff]
    %v4930 = vld [vmem:[#allocation2 + $0x224] sm:$0xff]
    %v4931 = vld [vmem:[#allocation2 + $0x22c] sm:$0xff]
    %v4932 = vld [vmem:[#allocation2 + $0x234] sm:$0xff]
    %v4933 = vld [vmem:[#allocation2 + $0x23c] sm:$0xff]
    %v4934 = vld [vmem:[#allocation2 + $0x244] sm:$0xff]
    %v4935 = vld [vmem:[#allocation2 + $0x24c] sm:$0xff]
    %v4936 = vld [vmem:[#allocation2 + $0x254] sm:$0xff]
    %v4937 = vld [vmem:[#allocation2 + $0x25c] sm:$0xf]
    %v4938 = vld [vmem:[#allocation2 + $0x344] sm:$0xff]
    %v4939 = vld [vmem:[#allocation2 + $0x34c] sm:$0xff]
    %v4940 = vld [vmem:[#allocation2 + $0x354] sm:$0xff]
    %v4941 = vld [vmem:[#allocation2 + $0x35c] sm:$0xff]
    %v4942 = vld [vmem:[#allocation2 + $0x364] sm:$0xff]
    %v4943 = vld [vmem:[#allocation2 + $0x36c] sm:$0xff]
    %v4944 = vld [vmem:[#allocation2 + $0x374] sm:$0xff]
    %v4945 = vld [vmem:[#allocation2 + $0x37c] sm:$0xff]
    %v4946 = vld [vmem:[#allocation2 + $0x384] sm:$0xff]
    %v4947 = vld [vmem:[#allocation2 + $0x38c] sm:$0xf]
    %v4948 = vld [vmem:[#allocation2 + $0x474] sm:$0xff]
    %v4949 = vld [vmem:[#allocation2 + $0x47c] sm:$0xff]
    %v4950 = vld [vmem:[#allocation2 + $0x484] sm:$0xff]
    %v4951 = vld [vmem:[#allocation2 + $0x48c] sm:$0xff]
    %v4952 = vld [vmem:[#allocation2 + $0x494] sm:$0xff]
    %v4953 = vld [vmem:[#allocation2 + $0x49c] sm:$0xff]
    %v4954 = vld [vmem:[#allocation2 + $0x4a4] sm:$0xff]
    %v4955 = vld [vmem:[#allocation2 + $0x4ac] sm:$0xff]
    %v4956 = vld [vmem:[#allocation2 + $0x4b4] sm:$0xff]
    %v4957 = vld [vmem:[#allocation2 + $0x4bc] sm:$0xf]
    %v4958 = vld [vmem:[#allocation2 + $0x5a4] sm:$0xff]
    %v4959 = vld [vmem:[#allocation2 + $0x5ac] sm:$0xff]
    %v4960 = vld [vmem:[#allocation2 + $0x5b4] sm:$0xff]
    %v4961 = vld [vmem:[#allocation2 + $0x5bc] sm:$0xff]
    %v4962 = vld [vmem:[#allocation2 + $0x5c4] sm:$0xff]
    %v4963 = vld [vmem:[#allocation2 + $0x5cc] sm:$0xff]
    %v4964 = vld [vmem:[#allocation2 + $0x5d4] sm:$0xff]
    %v4965 = vld [vmem:[#allocation2 + $0x5dc] sm:$0xff]
    %v4966 = vld [vmem:[#allocation2 + $0x5e4] sm:$0xff]
    %v4967 = vld [vmem:[#allocation2 + $0x5ec] sm:$0xf]
    %v4968 = vld [vmem:[#allocation2 + $0x6d4] sm:$0xff]
    %v4969 = vld [vmem:[#allocation2 + $0x6dc] sm:$0xff]
    %v4970 = vld [vmem:[#allocation2 + $0x6e4] sm:$0xff]
    %v4971 = vld [vmem:[#allocation2 + $0x6ec] sm:$0xff]
    %v4972 = vld [vmem:[#allocation2 + $0x6f4] sm:$0xff]
    %v4973 = vld [vmem:[#allocation2 + $0x6fc] sm:$0xff]
    %v4974 = vld [vmem:[#allocation2 + $0x704] sm:$0xff]
    %v4975 = vld [vmem:[#allocation2 + $0x70c] sm:$0xff]
    %v4976 = vld [vmem:[#allocation2 + $0x714] sm:$0xff]
    %v4977 = vld [vmem:[#allocation2 + $0x71c] sm:$0xf]
    %v4978 = vld [vmem:[#allocation2 + $0x804] sm:$0xff]
    %v4979 = vld [vmem:[#allocation2 + $0x80c] sm:$0xff]
    %v4980 = vld [vmem:[#allocation2 + $0x814] sm:$0xff]
    %v4981 = vld [vmem:[#allocation2 + $0x81c] sm:$0xff]
    %v4982 = vld [vmem:[#allocation2 + $0x824] sm:$0xff]
    %v4983 = vld [vmem:[#allocation2 + $0x82c] sm:$0xff]
    %v4984 = vld [vmem:[#allocation2 + $0x834] sm:$0xff]
    %v4985 = vld [vmem:[#allocation2 + $0x83c] sm:$0xff]
    %v4986 = vld [vmem:[#allocation2 + $0x844] sm:$0xff]
    %v4987 = vld [vmem:[#allocation2 + $0x84c] sm:$0xf]
    %v4988 = vld [vmem:[#allocation2 + $0x934] sm:$0xff]
    %v4989 = vld [vmem:[#allocation2 + $0x93c] sm:$0xff]
    %v4990 = vld [vmem:[#allocation2 + $0x944] sm:$0xff]
    %v4991 = vld [vmem:[#allocation2 + $0x94c] sm:$0xff]
    %v4992 = vld [vmem:[#allocation2 + $0x954] sm:$0xff]
    %v4993 = vld [vmem:[#allocation2 + $0x95c] sm:$0xff]
    %v4994 = vld [vmem:[#allocation2 + $0x964] sm:$0xff]
    %v4995 = vld [vmem:[#allocation2 + $0x96c] sm:$0xff]
    %v4996 = vld [vmem:[#allocation2 + $0x974] sm:$0xff]
    %v4997 = vld [vmem:[#allocation2 + $0x97c] sm:$0xf]
    %v4998 = vld [vmem:[#allocation2 + $0xa64] sm:$0xff]
    %v4999 = vld [vmem:[#allocation2 + $0xa6c] sm:$0xff]
    %v5000 = vld [vmem:[#allocation2 + $0xa74] sm:$0xff]
    %v5001 = vld [vmem:[#allocation2 + $0xa7c] sm:$0xff]
    %v5002 = vld [vmem:[#allocation2 + $0xa84] sm:$0xff]
    %v5003 = vld [vmem:[#allocation2 + $0xa8c] sm:$0xff]
    %v5004 = vld [vmem:[#allocation2 + $0xa94] sm:$0xff]
    %v5005 = vld [vmem:[#allocation2 + $0xa9c] sm:$0xff]
    %v5006 = vld [vmem:[#allocation2 + $0xaa4] sm:$0xff]
    %v5007 = vld [vmem:[#allocation2 + $0xaac] sm:$0xf]
    %v5008 = vld [vmem:[#allocation2 + $0xb94] sm:$0xff]
    %v5009 = vld [vmem:[#allocation2 + $0xb9c] sm:$0xff]
    %v5010 = vld [vmem:[#allocation2 + $0xba4] sm:$0xff]
    %v5011 = vld [vmem:[#allocation2 + $0xbac] sm:$0xff]
    %v5012 = vld [vmem:[#allocation2 + $0xbb4] sm:$0xff]
    %v5013 = vld [vmem:[#allocation2 + $0xbbc] sm:$0xff]
    %v5014 = vld [vmem:[#allocation2 + $0xbc4] sm:$0xff]
    %v5015 = vld [vmem:[#allocation2 + $0xbcc] sm:$0xff]
    %v5016 = vld [vmem:[#allocation2 + $0xbd4] sm:$0xff]
    %v5017 = vld [vmem:[#allocation2 + $0xbdc] sm:$0xf]
    %v5018 = vld [vmem:[#allocation2 + $0xcc4] sm:$0xff]
    %v5019 = vld [vmem:[#allocation2 + $0xccc] sm:$0xff]
    %v5020 = vld [vmem:[#allocation2 + $0xcd4] sm:$0xff]
    %v5021 = vld [vmem:[#allocation2 + $0xcdc] sm:$0xff]
    %v5022 = vld [vmem:[#allocation2 + $0xce4] sm:$0xff]
    %v5023 = vld [vmem:[#allocation2 + $0xcec] sm:$0xff]
    %v5024 = vld [vmem:[#allocation2 + $0xcf4] sm:$0xff]
    %v5025 = vld [vmem:[#allocation2 + $0xcfc] sm:$0xff]
    %v5026 = vld [vmem:[#allocation2 + $0xd04] sm:$0xff]
    %v5027 = vld [vmem:[#allocation2 + $0xd0c] sm:$0xf]
    %v5028 = vld [vmem:[#allocation2 + $0xdf4] sm:$0xff]
    %v5029 = vld [vmem:[#allocation2 + $0xdfc] sm:$0xff]
    %v5030 = vld [vmem:[#allocation2 + $0xe04] sm:$0xff]
    %v5031 = vld [vmem:[#allocation2 + $0xe0c] sm:$0xff]
    %v5032 = vld [vmem:[#allocation2 + $0xe14] sm:$0xff]
    %v5033 = vld [vmem:[#allocation2 + $0xe1c] sm:$0xff]
    %v5034 = vld [vmem:[#allocation2 + $0xe24] sm:$0xff]
    %v5035 = vld [vmem:[#allocation2 + $0xe2c] sm:$0xff]
    %v5036 = vld [vmem:[#allocation2 + $0xe34] sm:$0xff]
    %v5037 = vld [vmem:[#allocation2 + $0xe3c] sm:$0xf]
    %v5038 = vld [vmem:[#allocation2 + $0xf24] sm:$0xff]
    %v5039 = vld [vmem:[#allocation2 + $0xf2c] sm:$0xff]
    %v5040 = vld [vmem:[#allocation2 + $0xf34] sm:$0xff]
    %v5041 = vld [vmem:[#allocation2 + $0xf3c] sm:$0xff]
    %v5042 = vld [vmem:[#allocation2 + $0xf44] sm:$0xff]
    %v5043 = vld [vmem:[#allocation2 + $0xf4c] sm:$0xff]
    %v5044 = vld [vmem:[#allocation2 + $0xf54] sm:$0xff]
    %v5045 = vld [vmem:[#allocation2 + $0xf5c] sm:$0xff]
    %v5046 = vld [vmem:[#allocation2 + $0xf64] sm:$0xff]
    %v5047 = vld [vmem:[#allocation2 + $0xf6c] sm:$0xf]
    %v5048 = vld [vmem:[#allocation2 + $0x1054] sm:$0xff]
    %v5049 = vld [vmem:[#allocation2 + $0x105c] sm:$0xff]
    %v5050 = vld [vmem:[#allocation2 + $0x1064] sm:$0xff]
    %v5051 = vld [vmem:[#allocation2 + $0x106c] sm:$0xff]
    %v5052 = vld [vmem:[#allocation2 + $0x1074] sm:$0xff]
    %v5053 = vld [vmem:[#allocation2 + $0x107c] sm:$0xff]
    %v5054 = vld [vmem:[#allocation2 + $0x1084] sm:$0xff]
    %v5055 = vld [vmem:[#allocation2 + $0x108c] sm:$0xff]
    %v5056 = vld [vmem:[#allocation2 + $0x1094] sm:$0xff]
    %v5057 = vld [vmem:[#allocation2 + $0x109c] sm:$0xf]
    %v5058 = vld [vmem:[#allocation2 + $0x1184] sm:$0xff]
    %v5059 = vld [vmem:[#allocation2 + $0x118c] sm:$0xff]
    %v5060 = vld [vmem:[#allocation2 + $0x1194] sm:$0xff]
    %v5061 = vld [vmem:[#allocation2 + $0x119c] sm:$0xff]
    %v5062 = vld [vmem:[#allocation2 + $0x11a4] sm:$0xff]
    %v5063 = vld [vmem:[#allocation2 + $0x11ac] sm:$0xff]
    %v5064 = vld [vmem:[#allocation2 + $0x11b4] sm:$0xff]
    %v5065 = vld [vmem:[#allocation2 + $0x11bc] sm:$0xff]
    %v5066 = vld [vmem:[#allocation2 + $0x11c4] sm:$0xff]
    %v5067 = vld [vmem:[#allocation2 + $0x11cc] sm:$0xf]
    %v5068 = vld [vmem:[#allocation2 + $0x12b4] sm:$0xff]
    %v5069 = vld [vmem:[#allocation2 + $0x12bc] sm:$0xff]
    %v5070 = vld [vmem:[#allocation2 + $0x12c4] sm:$0xff]
    %v5071 = vld [vmem:[#allocation2 + $0x12cc] sm:$0xff]
    %v5072 = vld [vmem:[#allocation2 + $0x12d4] sm:$0xff]
    %v5073 = vld [vmem:[#allocation2 + $0x12dc] sm:$0xff]
    %v5074 = vld [vmem:[#allocation2 + $0x12e4] sm:$0xff]
    %v5075 = vld [vmem:[#allocation2 + $0x12ec] sm:$0xff]
    %v5076 = vld [vmem:[#allocation2 + $0x12f4] sm:$0xff]
    %v5077 = vld [vmem:[#allocation2 + $0x12fc] sm:$0xf]
    %v5078 = vld [vmem:[#allocation2 + $0x13e4] sm:$0xff]
    %v5079 = vld [vmem:[#allocation2 + $0x13ec] sm:$0xff]
    %v5080 = vld [vmem:[#allocation2 + $0x13f4] sm:$0xff]
    %v5081 = vld [vmem:[#allocation2 + $0x13fc] sm:$0xff]
    %v5082 = vld [vmem:[#allocation2 + $0x1404] sm:$0xff]
    %v5083 = vld [vmem:[#allocation2 + $0x140c] sm:$0xff]
    %v5084 = vld [vmem:[#allocation2 + $0x1414] sm:$0xff]
    %v5085 = vld [vmem:[#allocation2 + $0x141c] sm:$0xff]
    %v5086 = vld [vmem:[#allocation2 + $0x1424] sm:$0xff]
    %v5087 = vld [vmem:[#allocation2 + $0x142c] sm:$0xf]
    %v5088 = vld [vmem:[#allocation2 + $0x1514] sm:$0xff]
    %v5089 = vld [vmem:[#allocation2 + $0x151c] sm:$0xff]
    %v5090 = vld [vmem:[#allocation2 + $0x1524] sm:$0xff]
    %v5091 = vld [vmem:[#allocation2 + $0x152c] sm:$0xff]
    %v5092 = vld [vmem:[#allocation2 + $0x1534] sm:$0xff]
    %v5093 = vld [vmem:[#allocation2 + $0x153c] sm:$0xff]
    %v5094 = vld [vmem:[#allocation2 + $0x1544] sm:$0xff]
    %v5095 = vld [vmem:[#allocation2 + $0x154c] sm:$0xff]
    %v5096 = vld [vmem:[#allocation2 + $0x1554] sm:$0xff]
    %v5097 = vld [vmem:[#allocation2 + $0x155c] sm:$0xf]
    %v5098 = vld [vmem:[#allocation2 + $0x1644] sm:$0xff]
    %v5099 = vld [vmem:[#allocation2 + $0x164c] sm:$0xff]
    %v5100 = vld [vmem:[#allocation2 + $0x1654] sm:$0xff]
    %v5101 = vld [vmem:[#allocation2 + $0x165c] sm:$0xff]
    %v5102 = vld [vmem:[#allocation2 + $0x1664] sm:$0xff]
    %v5103 = vld [vmem:[#allocation2 + $0x166c] sm:$0xff]
    %v5104 = vld [vmem:[#allocation2 + $0x1674] sm:$0xff]
    %v5105 = vld [vmem:[#allocation2 + $0x167c] sm:$0xff]
    %v5106 = vld [vmem:[#allocation2 + $0x1684] sm:$0xff]
    %v5107 = vld [vmem:[#allocation2 + $0x168c] sm:$0xf]
    %v5298 = vunpack.c.l.b16 %v4918
    %v5299 = vunpack.c.h.b16 %v4918
    %v5300 = vunpack.c.l.b16 %v4919
    %v5301 = vunpack.c.h.b16 %v4919
    %v5302 = vunpack.c.l.b16 %v4920
    %v5303 = vunpack.c.h.b16 %v4920
    %v5304 = vunpack.c.l.b16 %v4921
    %v5305 = vunpack.c.h.b16 %v4921
    %v5306 = vunpack.c.l.b16 %v4922
    %v5307 = vunpack.c.h.b16 %v4922
    %v5308 = vunpack.c.l.b16 %v4923
    %v5309 = vunpack.c.h.b16 %v4923
    %v5310 = vunpack.c.l.b16 %v4924
    %v5311 = vunpack.c.h.b16 %v4924
    %v5312 = vunpack.c.l.b16 %v4925
    %v5313 = vunpack.c.h.b16 %v4925
    %v5314 = vunpack.c.l.b16 %v4926
    %v5315 = vunpack.c.h.b16 %v4926
    %v5316 = vunpack.c.l.b16 %v4927
    %v5317 = vunpack.c.l.b16 %v4928
    %v5318 = vunpack.c.h.b16 %v4928
    %v5319 = vunpack.c.l.b16 %v4929
    %v5320 = vunpack.c.h.b16 %v4929
    %v5321 = vunpack.c.l.b16 %v4930
    %v5322 = vunpack.c.h.b16 %v4930
    %v5323 = vunpack.c.l.b16 %v4931
    %v5324 = vunpack.c.h.b16 %v4931
    %v5325 = vunpack.c.l.b16 %v4932
    %v5326 = vunpack.c.h.b16 %v4932
    %v5327 = vunpack.c.l.b16 %v4933
    %v5328 = vunpack.c.h.b16 %v4933
    %v5329 = vunpack.c.l.b16 %v4934
    %v5330 = vunpack.c.h.b16 %v4934
    %v5331 = vunpack.c.l.b16 %v4935
    %v5332 = vunpack.c.h.b16 %v4935
    %v5333 = vunpack.c.l.b16 %v4936
    %v5334 = vunpack.c.h.b16 %v4936
    %v5335 = vunpack.c.l.b16 %v4937
    %v5336 = vunpack.c.l.b16 %v4938
    %v5337 = vunpack.c.h.b16 %v4938
    %v5338 = vunpack.c.l.b16 %v4939
    %v5339 = vunpack.c.h.b16 %v4939
    %v5340 = vunpack.c.l.b16 %v4940
    %v5341 = vunpack.c.h.b16 %v4940
    %v5342 = vunpack.c.l.b16 %v4941
    %v5343 = vunpack.c.h.b16 %v4941
    %v5344 = vunpack.c.l.b16 %v4942
    %v5345 = vunpack.c.h.b16 %v4942
    %v5346 = vunpack.c.l.b16 %v4943
    %v5347 = vunpack.c.h.b16 %v4943
    %v5348 = vunpack.c.l.b16 %v4944
    %v5349 = vunpack.c.h.b16 %v4944
    %v5350 = vunpack.c.l.b16 %v4945
    %v5351 = vunpack.c.h.b16 %v4945
    %v5352 = vunpack.c.l.b16 %v4946
    %v5353 = vunpack.c.h.b16 %v4946
    %v5354 = vunpack.c.l.b16 %v4947
    %v5355 = vunpack.c.l.b16 %v4948
    %v5356 = vunpack.c.h.b16 %v4948
    %v5357 = vunpack.c.l.b16 %v4949
    %v5358 = vunpack.c.h.b16 %v4949
    %v5359 = vunpack.c.l.b16 %v4950
    %v5360 = vunpack.c.h.b16 %v4950
    %v5361 = vunpack.c.l.b16 %v4951
    %v5362 = vunpack.c.h.b16 %v4951
    %v5363 = vunpack.c.l.b16 %v4952
    %v5364 = vunpack.c.h.b16 %v4952
    %v5365 = vunpack.c.l.b16 %v4953
    %v5366 = vunpack.c.h.b16 %v4953
    %v5367 = vunpack.c.l.b16 %v4954
    %v5368 = vunpack.c.h.b16 %v4954
    %v5369 = vunpack.c.l.b16 %v4955
    %v5370 = vunpack.c.h.b16 %v4955
    %v5371 = vunpack.c.l.b16 %v4956
    %v5372 = vunpack.c.h.b16 %v4956
    %v5373 = vunpack.c.l.b16 %v4957
    %v5374 = vunpack.c.l.b16 %v4958
    %v5375 = vunpack.c.h.b16 %v4958
    %v5376 = vunpack.c.l.b16 %v4959
    %v5377 = vunpack.c.h.b16 %v4959
    %v5378 = vunpack.c.l.b16 %v4960
    %v5379 = vunpack.c.h.b16 %v4960
    %v5380 = vunpack.c.l.b16 %v4961
    %v5381 = vunpack.c.h.b16 %v4961
    %v5382 = vunpack.c.l.b16 %v4962
    %v5383 = vunpack.c.h.b16 %v4962
    %v5384 = vunpack.c.l.b16 %v4963
    %v5385 = vunpack.c.h.b16 %v4963
    %v5386 = vunpack.c.l.b16 %v4964
    %v5387 = vunpack.c.h.b16 %v4964
    %v5388 = vunpack.c.l.b16 %v4965
    %v5389 = vunpack.c.h.b16 %v4965
    %v5390 = vunpack.c.l.b16 %v4966
    %v5391 = vunpack.c.h.b16 %v4966
    %v5392 = vunpack.c.l.b16 %v4967
    %v5393 = vunpack.c.l.b16 %v4968
    %v5394 = vunpack.c.h.b16 %v4968
    %v5395 = vunpack.c.l.b16 %v4969
    %v5396 = vunpack.c.h.b16 %v4969
    %v5397 = vunpack.c.l.b16 %v4970
    %v5398 = vunpack.c.h.b16 %v4970
    %v5399 = vunpack.c.l.b16 %v4971
    %v5400 = vunpack.c.h.b16 %v4971
    %v5401 = vunpack.c.l.b16 %v4972
    %v5402 = vunpack.c.h.b16 %v4972
    %v5403 = vunpack.c.l.b16 %v4973
    %v5404 = vunpack.c.h.b16 %v4973
    %v5405 = vunpack.c.l.b16 %v4974
    %v5406 = vunpack.c.h.b16 %v4974
    %v5407 = vunpack.c.l.b16 %v4975
    %v5408 = vunpack.c.h.b16 %v4975
    %v5409 = vunpack.c.l.b16 %v4976
    %v5410 = vunpack.c.h.b16 %v4976
    %v5411 = vunpack.c.l.b16 %v4977
    %v5412 = vunpack.c.l.b16 %v4978
    %v5413 = vunpack.c.h.b16 %v4978
    %v5414 = vunpack.c.l.b16 %v4979
    %v5415 = vunpack.c.h.b16 %v4979
    %v5416 = vunpack.c.l.b16 %v4980
    %v5417 = vunpack.c.h.b16 %v4980
    %v5418 = vunpack.c.l.b16 %v4981
    %v5419 = vunpack.c.h.b16 %v4981
    %v5420 = vunpack.c.l.b16 %v4982
    %v5421 = vunpack.c.h.b16 %v4982
    %v5422 = vunpack.c.l.b16 %v4983
    %v5423 = vunpack.c.h.b16 %v4983
    %v5424 = vunpack.c.l.b16 %v4984
    %v5425 = vunpack.c.h.b16 %v4984
    %v5426 = vunpack.c.l.b16 %v4985
    %v5427 = vunpack.c.h.b16 %v4985
    %v5428 = vunpack.c.l.b16 %v4986
    %v5429 = vunpack.c.h.b16 %v4986
    %v5430 = vunpack.c.l.b16 %v4987
    %v5431 = vunpack.c.l.b16 %v4988
    %v5432 = vunpack.c.h.b16 %v4988
    %v5433 = vunpack.c.l.b16 %v4989
    %v5434 = vunpack.c.h.b16 %v4989
    %v5435 = vunpack.c.l.b16 %v4990
    %v5436 = vunpack.c.h.b16 %v4990
    %v5437 = vunpack.c.l.b16 %v4991
    %v5438 = vunpack.c.h.b16 %v4991
    %v5439 = vunpack.c.l.b16 %v4992
    %v5440 = vunpack.c.h.b16 %v4992
    %v5441 = vunpack.c.l.b16 %v4993
    %v5442 = vunpack.c.h.b16 %v4993
    %v5443 = vunpack.c.l.b16 %v4994
    %v5444 = vunpack.c.h.b16 %v4994
    %v5445 = vunpack.c.l.b16 %v4995
    %v5446 = vunpack.c.h.b16 %v4995
    %v5447 = vunpack.c.l.b16 %v4996
    %v5448 = vunpack.c.h.b16 %v4996
    %v5449 = vunpack.c.l.b16 %v4997
    %v5450 = vunpack.c.l.b16 %v4998
    %v5451 = vunpack.c.h.b16 %v4998
    %v5452 = vunpack.c.l.b16 %v4999
    %v5453 = vunpack.c.h.b16 %v4999
    %v5454 = vunpack.c.l.b16 %v5000
    %v5455 = vunpack.c.h.b16 %v5000
    %v5456 = vunpack.c.l.b16 %v5001
    %v5457 = vunpack.c.h.b16 %v5001
    %v5458 = vunpack.c.l.b16 %v5002
    %v5459 = vunpack.c.h.b16 %v5002
    %v5460 = vunpack.c.l.b16 %v5003
    %v5461 = vunpack.c.h.b16 %v5003
    %v5462 = vunpack.c.l.b16 %v5004
    %v5463 = vunpack.c.h.b16 %v5004
    %v5464 = vunpack.c.l.b16 %v5005
    %v5465 = vunpack.c.h.b16 %v5005
    %v5466 = vunpack.c.l.b16 %v5006
    %v5467 = vunpack.c.h.b16 %v5006
    %v5468 = vunpack.c.l.b16 %v5007
    %v5469 = vunpack.c.l.b16 %v5008
    %v5470 = vunpack.c.h.b16 %v5008
    %v5471 = vunpack.c.l.b16 %v5009
    %v5472 = vunpack.c.h.b16 %v5009
    %v5473 = vunpack.c.l.b16 %v5010
    %v5474 = vunpack.c.h.b16 %v5010
    %v5475 = vunpack.c.l.b16 %v5011
    %v5476 = vunpack.c.h.b16 %v5011
    %v5477 = vunpack.c.l.b16 %v5012
    %v5478 = vunpack.c.h.b16 %v5012
    %v5479 = vunpack.c.l.b16 %v5013
    %v5480 = vunpack.c.h.b16 %v5013
    %v5481 = vunpack.c.l.b16 %v5014
    %v5482 = vunpack.c.h.b16 %v5014
    %v5483 = vunpack.c.l.b16 %v5015
    %v5484 = vunpack.c.h.b16 %v5015
    %v5485 = vunpack.c.l.b16 %v5016
    %v5486 = vunpack.c.h.b16 %v5016
    %v5487 = vunpack.c.l.b16 %v5017
    %v5488 = vunpack.c.l.b16 %v5018
    %v5489 = vunpack.c.h.b16 %v5018
    %v5490 = vunpack.c.l.b16 %v5019
    %v5491 = vunpack.c.h.b16 %v5019
    %v5492 = vunpack.c.l.b16 %v5020
    %v5493 = vunpack.c.h.b16 %v5020
    %v5494 = vunpack.c.l.b16 %v5021
    %v5495 = vunpack.c.h.b16 %v5021
    %v5496 = vunpack.c.l.b16 %v5022
    %v5497 = vunpack.c.h.b16 %v5022
    %v5498 = vunpack.c.l.b16 %v5023
    %v5499 = vunpack.c.h.b16 %v5023
    %v5500 = vunpack.c.l.b16 %v5024
    %v5501 = vunpack.c.h.b16 %v5024
    %v5502 = vunpack.c.l.b16 %v5025
    %v5503 = vunpack.c.h.b16 %v5025
    %v5504 = vunpack.c.l.b16 %v5026
    %v5505 = vunpack.c.h.b16 %v5026
    %v5506 = vunpack.c.l.b16 %v5027
    %v5507 = vunpack.c.l.b16 %v5028
    %v5508 = vunpack.c.h.b16 %v5028
    %v5509 = vunpack.c.l.b16 %v5029
    %v5510 = vunpack.c.h.b16 %v5029
    %v5511 = vunpack.c.l.b16 %v5030
    %v5512 = vunpack.c.h.b16 %v5030
    %v5513 = vunpack.c.l.b16 %v5031
    %v5514 = vunpack.c.h.b16 %v5031
    %v5515 = vunpack.c.l.b16 %v5032
    %v5516 = vunpack.c.h.b16 %v5032
    %v5517 = vunpack.c.l.b16 %v5033
    %v5518 = vunpack.c.h.b16 %v5033
    %v5519 = vunpack.c.l.b16 %v5034
    %v5520 = vunpack.c.h.b16 %v5034
    %v5521 = vunpack.c.l.b16 %v5035
    %v5522 = vunpack.c.h.b16 %v5035
    %v5523 = vunpack.c.l.b16 %v5036
    %v5524 = vunpack.c.h.b16 %v5036
    %v5525 = vunpack.c.l.b16 %v5037
    %v5526 = vunpack.c.l.b16 %v5038
    %v5527 = vunpack.c.h.b16 %v5038
    %v5528 = vunpack.c.l.b16 %v5039
    %v5529 = vunpack.c.h.b16 %v5039
    %v5530 = vunpack.c.l.b16 %v5040
    %v5531 = vunpack.c.h.b16 %v5040
    %v5532 = vunpack.c.l.b16 %v5041
    %v5533 = vunpack.c.h.b16 %v5041
    %v5534 = vunpack.c.l.b16 %v5042
    %v5535 = vunpack.c.h.b16 %v5042
    %v5536 = vunpack.c.l.b16 %v5043
    %v5537 = vunpack.c.h.b16 %v5043
    %v5538 = vunpack.c.l.b16 %v5044
    %v5539 = vunpack.c.h.b16 %v5044
    %v5540 = vunpack.c.l.b16 %v5045
    %v5541 = vunpack.c.h.b16 %v5045
    %v5542 = vunpack.c.l.b16 %v5046
    %v5543 = vunpack.c.h.b16 %v5046
    %v5544 = vunpack.c.l.b16 %v5047
    %v5545 = vunpack.c.l.b16 %v5048
    %v5546 = vunpack.c.h.b16 %v5048
    %v5547 = vunpack.c.l.b16 %v5049
    %v5548 = vunpack.c.h.b16 %v5049
    %v5549 = vunpack.c.l.b16 %v5050
    %v5550 = vunpack.c.h.b16 %v5050
    %v5551 = vunpack.c.l.b16 %v5051
    %v5552 = vunpack.c.h.b16 %v5051
    %v5553 = vunpack.c.l.b16 %v5052
    %v5554 = vunpack.c.h.b16 %v5052
    %v5555 = vunpack.c.l.b16 %v5053
    %v5556 = vunpack.c.h.b16 %v5053
    %v5557 = vunpack.c.l.b16 %v5054
    %v5558 = vunpack.c.h.b16 %v5054
    %v5559 = vunpack.c.l.b16 %v5055
    %v5560 = vunpack.c.h.b16 %v5055
    %v5561 = vunpack.c.l.b16 %v5056
    %v5562 = vunpack.c.h.b16 %v5056
    %v5563 = vunpack.c.l.b16 %v5057
    %v5564 = vunpack.c.l.b16 %v5058
    %v5565 = vunpack.c.h.b16 %v5058
    %v5566 = vunpack.c.l.b16 %v5059
    %v5567 = vunpack.c.h.b16 %v5059
    %v5568 = vunpack.c.l.b16 %v5060
    %v5569 = vunpack.c.h.b16 %v5060
    %v5570 = vunpack.c.l.b16 %v5061
    %v5571 = vunpack.c.h.b16 %v5061
    %v5572 = vunpack.c.l.b16 %v5062
    %v5573 = vunpack.c.h.b16 %v5062
    %v5574 = vunpack.c.l.b16 %v5063
    %v5575 = vunpack.c.h.b16 %v5063
    %v5576 = vunpack.c.l.b16 %v5064
    %v5577 = vunpack.c.h.b16 %v5064
    %v5578 = vunpack.c.l.b16 %v5065
    %v5579 = vunpack.c.h.b16 %v5065
    %v5580 = vunpack.c.l.b16 %v5066
    %v5581 = vunpack.c.h.b16 %v5066
    %v5582 = vunpack.c.l.b16 %v5067
    %v5583 = vunpack.c.l.b16 %v5068
    %v5584 = vunpack.c.h.b16 %v5068
    %v5585 = vunpack.c.l.b16 %v5069
    %v5586 = vunpack.c.h.b16 %v5069
    %v5587 = vunpack.c.l.b16 %v5070
    %v5588 = vunpack.c.h.b16 %v5070
    %v5589 = vunpack.c.l.b16 %v5071
    %v5590 = vunpack.c.h.b16 %v5071
    %v5591 = vunpack.c.l.b16 %v5072
    %v5592 = vunpack.c.h.b16 %v5072
    %v5593 = vunpack.c.l.b16 %v5073
    %v5594 = vunpack.c.h.b16 %v5073
    %v5595 = vunpack.c.l.b16 %v5074
    %v5596 = vunpack.c.h.b16 %v5074
    %v5597 = vunpack.c.l.b16 %v5075
    %v5598 = vunpack.c.h.b16 %v5075
    %v5599 = vunpack.c.l.b16 %v5076
    %v5600 = vunpack.c.h.b16 %v5076
    %v5601 = vunpack.c.l.b16 %v5077
    %v5602 = vunpack.c.l.b16 %v5078
    %v5603 = vunpack.c.h.b16 %v5078
    %v5604 = vunpack.c.l.b16 %v5079
    %v5605 = vunpack.c.h.b16 %v5079
    %v5606 = vunpack.c.l.b16 %v5080
    %v5607 = vunpack.c.h.b16 %v5080
    %v5608 = vunpack.c.l.b16 %v5081
    %v5609 = vunpack.c.h.b16 %v5081
    %v5610 = vunpack.c.l.b16 %v5082
    %v5611 = vunpack.c.h.b16 %v5082
    %v5612 = vunpack.c.l.b16 %v5083
    %v5613 = vunpack.c.h.b16 %v5083
    %v5614 = vunpack.c.l.b16 %v5084
    %v5615 = vunpack.c.h.b16 %v5084
    %v5616 = vunpack.c.l.b16 %v5085
    %v5617 = vunpack.c.h.b16 %v5085
    %v5618 = vunpack.c.l.b16 %v5086
    %v5619 = vunpack.c.h.b16 %v5086
    %v5620 = vunpack.c.l.b16 %v5087
    %v5621 = vunpack.c.l.b16 %v5088
    %v5622 = vunpack.c.h.b16 %v5088
    %v5623 = vunpack.c.l.b16 %v5089
    %v5624 = vunpack.c.h.b16 %v5089
    %v5625 = vunpack.c.l.b16 %v5090
    %v5626 = vunpack.c.h.b16 %v5090
    %v5627 = vunpack.c.l.b16 %v5091
    %v5628 = vunpack.c.h.b16 %v5091
    %v5629 = vunpack.c.l.b16 %v5092
    %v5630 = vunpack.c.h.b16 %v5092
    %v5631 = vunpack.c.l.b16 %v5093
    %v5632 = vunpack.c.h.b16 %v5093
    %v5633 = vunpack.c.l.b16 %v5094
    %v5634 = vunpack.c.h.b16 %v5094
    %v5635 = vunpack.c.l.b16 %v5095
    %v5636 = vunpack.c.h.b16 %v5095
    %v5637 = vunpack.c.l.b16 %v5096
    %v5638 = vunpack.c.h.b16 %v5096
    %v5639 = vunpack.c.l.b16 %v5097
    %v5640 = vunpack.c.l.b16 %v5098
    %v5641 = vunpack.c.h.b16 %v5098
    %v5642 = vunpack.c.l.b16 %v5099
    %v5643 = vunpack.c.h.b16 %v5099
    %v5644 = vunpack.c.l.b16 %v5100
    %v5645 = vunpack.c.h.b16 %v5100
    %v5646 = vunpack.c.l.b16 %v5101
    %v5647 = vunpack.c.h.b16 %v5101
    %v5648 = vunpack.c.l.b16 %v5102
    %v5649 = vunpack.c.h.b16 %v5102
    %v5650 = vunpack.c.l.b16 %v5103
    %v5651 = vunpack.c.h.b16 %v5103
    %v5652 = vunpack.c.l.b16 %v5104
    %v5653 = vunpack.c.h.b16 %v5104
    %v5654 = vunpack.c.l.b16 %v5105
    %v5655 = vunpack.c.h.b16 %v5105
    %v5656 = vunpack.c.l.b16 %v5106
    %v5657 = vunpack.c.h.b16 %v5106
    %v5658 = vunpack.c.l.b16 %v5107
    %v5659 = vpack.c.b16 %v5317, %v5298
    %v5660 = vpack.c.b16 %v5318, %v5299
    %v5661 = vpack.c.b16 %v5319, %v5300
    %v5662 = vpack.c.b16 %v5320, %v5301
    %v5663 = vpack.c.b16 %v5321, %v5302
    %v5664 = vpack.c.b16 %v5322, %v5303
    %v5665 = vpack.c.b16 %v5323, %v5304
    %v5666 = vpack.c.b16 %v5324, %v5305
    %v5667 = vpack.c.b16 %v5325, %v5306
    %v5668 = vpack.c.b16 %v5326, %v5307
    %v5669 = vpack.c.b16 %v5327, %v5308
    %v5670 = vpack.c.b16 %v5328, %v5309
    %v5671 = vpack.c.b16 %v5329, %v5310
    %v5672 = vpack.c.b16 %v5330, %v5311
    %v5673 = vpack.c.b16 %v5331, %v5312
    %v5674 = vpack.c.b16 %v5332, %v5313
    %v5675 = vpack.c.b16 %v5333, %v5314
    %v5676 = vpack.c.b16 %v5334, %v5315
    %v5677 = vpack.c.b16 %v5335, %v5316
    %v5678 = vpack.c.b16 %v5355, %v5336
    %v5679 = vpack.c.b16 %v5356, %v5337
    %v5680 = vpack.c.b16 %v5357, %v5338
    %v5681 = vpack.c.b16 %v5358, %v5339
    %v5682 = vpack.c.b16 %v5359, %v5340
    %v5683 = vpack.c.b16 %v5360, %v5341
    %v5684 = vpack.c.b16 %v5361, %v5342
    %v5685 = vpack.c.b16 %v5362, %v5343
    %v5686 = vpack.c.b16 %v5363, %v5344
    %v5687 = vpack.c.b16 %v5364, %v5345
    %v5688 = vpack.c.b16 %v5365, %v5346
    %v5689 = vpack.c.b16 %v5366, %v5347
    %v5690 = vpack.c.b16 %v5367, %v5348
    %v5691 = vpack.c.b16 %v5368, %v5349
    %v5692 = vpack.c.b16 %v5369, %v5350
    %v5693 = vpack.c.b16 %v5370, %v5351
    %v5694 = vpack.c.b16 %v5371, %v5352
    %v5695 = vpack.c.b16 %v5372, %v5353
    %v5696 = vpack.c.b16 %v5373, %v5354
    %v5697 = vpack.c.b16 %v5393, %v5374
    %v5698 = vpack.c.b16 %v5394, %v5375
    %v5699 = vpack.c.b16 %v5395, %v5376
    %v5700 = vpack.c.b16 %v5396, %v5377
    %v5701 = vpack.c.b16 %v5397, %v5378
    %v5702 = vpack.c.b16 %v5398, %v5379
    %v5703 = vpack.c.b16 %v5399, %v5380
    %v5704 = vpack.c.b16 %v5400, %v5381
    %v5705 = vpack.c.b16 %v5401, %v5382
    %v5706 = vpack.c.b16 %v5402, %v5383
    %v5707 = vpack.c.b16 %v5403, %v5384
    %v5708 = vpack.c.b16 %v5404, %v5385
    %v5709 = vpack.c.b16 %v5405, %v5386
    %v5710 = vpack.c.b16 %v5406, %v5387
    %v5711 = vpack.c.b16 %v5407, %v5388
    %v5712 = vpack.c.b16 %v5408, %v5389
    %v5713 = vpack.c.b16 %v5409, %v5390
    %v5714 = vpack.c.b16 %v5410, %v5391
    %v5715 = vpack.c.b16 %v5411, %v5392
    %v5716 = vpack.c.b16 %v5431, %v5412
    %v5717 = vpack.c.b16 %v5432, %v5413
    %v5718 = vpack.c.b16 %v5433, %v5414
    %v5719 = vpack.c.b16 %v5434, %v5415
    %v5720 = vpack.c.b16 %v5435, %v5416
    %v5721 = vpack.c.b16 %v5436, %v5417
    %v5722 = vpack.c.b16 %v5437, %v5418
    %v5723 = vpack.c.b16 %v5438, %v5419
    %v5724 = vpack.c.b16 %v5439, %v5420
    %v5725 = vpack.c.b16 %v5440, %v5421
    %v5726 = vpack.c.b16 %v5441, %v5422
    %v5727 = vpack.c.b16 %v5442, %v5423
    %v5728 = vpack.c.b16 %v5443, %v5424
    %v5729 = vpack.c.b16 %v5444, %v5425
    %v5730 = vpack.c.b16 %v5445, %v5426
    %v5731 = vpack.c.b16 %v5446, %v5427
    %v5732 = vpack.c.b16 %v5447, %v5428
    %v5733 = vpack.c.b16 %v5448, %v5429
    %v5734 = vpack.c.b16 %v5449, %v5430
    %v5735 = vpack.c.b16 %v5469, %v5450
    %v5736 = vpack.c.b16 %v5470, %v5451
    %v5737 = vpack.c.b16 %v5471, %v5452
    %v5738 = vpack.c.b16 %v5472, %v5453
    %v5739 = vpack.c.b16 %v5473, %v5454
    %v5740 = vpack.c.b16 %v5474, %v5455
    %v5741 = vpack.c.b16 %v5475, %v5456
    %v5742 = vpack.c.b16 %v5476, %v5457
    %v5743 = vpack.c.b16 %v5477, %v5458
    %v5744 = vpack.c.b16 %v5478, %v5459
    %v5745 = vpack.c.b16 %v5479, %v5460
    %v5746 = vpack.c.b16 %v5480, %v5461
    %v5747 = vpack.c.b16 %v5481, %v5462
    %v5748 = vpack.c.b16 %v5482, %v5463
    %v5749 = vpack.c.b16 %v5483, %v5464
    %v5750 = vpack.c.b16 %v5484, %v5465
    %v5751 = vpack.c.b16 %v5485, %v5466
    %v5752 = vpack.c.b16 %v5486, %v5467
    %v5753 = vpack.c.b16 %v5487, %v5468
    %v5754 = vpack.c.b16 %v5507, %v5488
    %v5755 = vpack.c.b16 %v5508, %v5489
    %v5756 = vpack.c.b16 %v5509, %v5490
    %v5757 = vpack.c.b16 %v5510, %v5491
    %v5758 = vpack.c.b16 %v5511, %v5492
    %v5759 = vpack.c.b16 %v5512, %v5493
    %v5760 = vpack.c.b16 %v5513, %v5494
    %v5761 = vpack.c.b16 %v5514, %v5495
    %v5762 = vpack.c.b16 %v5515, %v5496
    %v5763 = vpack.c.b16 %v5516, %v5497
    %v5764 = vpack.c.b16 %v5517, %v5498
    %v5765 = vpack.c.b16 %v5518, %v5499
    %v5766 = vpack.c.b16 %v5519, %v5500
    %v5767 = vpack.c.b16 %v5520, %v5501
    %v5768 = vpack.c.b16 %v5521, %v5502
    %v5769 = vpack.c.b16 %v5522, %v5503
    %v5770 = vpack.c.b16 %v5523, %v5504
    %v5771 = vpack.c.b16 %v5524, %v5505
    %v5772 = vpack.c.b16 %v5525, %v5506
    %v5773 = vpack.c.b16 %v5545, %v5526
    %v5774 = vpack.c.b16 %v5546, %v5527
    %v5775 = vpack.c.b16 %v5547, %v5528
    %v5776 = vpack.c.b16 %v5548, %v5529
    %v5777 = vpack.c.b16 %v5549, %v5530
    %v5778 = vpack.c.b16 %v5550, %v5531
    %v5779 = vpack.c.b16 %v5551, %v5532
    %v5780 = vpack.c.b16 %v5552, %v5533
    %v5781 = vpack.c.b16 %v5553, %v5534
    %v5782 = vpack.c.b16 %v5554, %v5535
    %v5783 = vpack.c.b16 %v5555, %v5536
    %v5784 = vpack.c.b16 %v5556, %v5537
    %v5785 = vpack.c.b16 %v5557, %v5538
    %v5786 = vpack.c.b16 %v5558, %v5539
    %v5787 = vpack.c.b16 %v5559, %v5540
    %v5788 = vpack.c.b16 %v5560, %v5541
    %v5789 = vpack.c.b16 %v5561, %v5542
    %v5790 = vpack.c.b16 %v5562, %v5543
    %v5791 = vpack.c.b16 %v5563, %v5544
    %v5792 = vpack.c.b16 %v5583, %v5564
    %v5793 = vpack.c.b16 %v5584, %v5565
    %v5794 = vpack.c.b16 %v5585, %v5566
    %v5795 = vpack.c.b16 %v5586, %v5567
    %v5796 = vpack.c.b16 %v5587, %v5568
    %v5797 = vpack.c.b16 %v5588, %v5569
    %v5798 = vpack.c.b16 %v5589, %v5570
    %v5799 = vpack.c.b16 %v5590, %v5571
    %v5800 = vpack.c.b16 %v5591, %v5572
    %v5801 = vpack.c.b16 %v5592, %v5573
    %v5802 = vpack.c.b16 %v5593, %v5574
    %v5803 = vpack.c.b16 %v5594, %v5575
    %v5804 = vpack.c.b16 %v5595, %v5576
    %v5805 = vpack.c.b16 %v5596, %v5577
    %v5806 = vpack.c.b16 %v5597, %v5578
    %v5807 = vpack.c.b16 %v5598, %v5579
    %v5808 = vpack.c.b16 %v5599, %v5580
    %v5809 = vpack.c.b16 %v5600, %v5581
    %v5810 = vpack.c.b16 %v5601, %v5582
    %v5811 = vpack.c.b16 %v5621, %v5602
    %v5812 = vpack.c.b16 %v5622, %v5603
    %v5813 = vpack.c.b16 %v5623, %v5604
    %v5814 = vpack.c.b16 %v5624, %v5605
    %v5815 = vpack.c.b16 %v5625, %v5606
    %v5816 = vpack.c.b16 %v5626, %v5607
    %v5817 = vpack.c.b16 %v5627, %v5608
    %v5818 = vpack.c.b16 %v5628, %v5609
    %v5819 = vpack.c.b16 %v5629, %v5610
    %v5820 = vpack.c.b16 %v5630, %v5611
    %v5821 = vpack.c.b16 %v5631, %v5612
    %v5822 = vpack.c.b16 %v5632, %v5613
    %v5823 = vpack.c.b16 %v5633, %v5614
    %v5824 = vpack.c.b16 %v5634, %v5615
    %v5825 = vpack.c.b16 %v5635, %v5616
    %v5826 = vpack.c.b16 %v5636, %v5617
    %v5827 = vpack.c.b16 %v5637, %v5618
    %v5828 = vpack.c.b16 %v5638, %v5619
    %v5829 = vpack.c.b16 %v5639, %v5620
    %v5830 = vpack.c.b16 %v5640, %v5640
    %v5831 = vpack.c.b16 %v5641, %v5641
    %v5832 = vpack.c.b16 %v5642, %v5642
    %v5833 = vpack.c.b16 %v5643, %v5643
    %v5834 = vpack.c.b16 %v5644, %v5644
    %v5835 = vpack.c.b16 %v5645, %v5645
    %v5836 = vpack.c.b16 %v5646, %v5646
    %v5837 = vpack.c.b16 %v5647, %v5647
    %v5838 = vpack.c.b16 %v5648, %v5648
    %v5839 = vpack.c.b16 %v5649, %v5649
    %v5840 = vpack.c.b16 %v5650, %v5650
    %v5841 = vpack.c.b16 %v5651, %v5651
    %v5842 = vpack.c.b16 %v5652, %v5652
    %v5843 = vpack.c.b16 %v5653, %v5653
    %v5844 = vpack.c.b16 %v5654, %v5654
    %v5845 = vpack.c.b16 %v5655, %v5655
    %v5846 = vpack.c.b16 %v5656, %v5656
    %v5847 = vpack.c.b16 %v5657, %v5657
    %v5848 = vpack.c.b16 %v5658, %v5658
    %v6021 = vsel %vm1147, %v5830, 0
    %v6024 = vsel %vm1147, %v5831, 0
    %v6027 = vsel %vm1147, %v5832, 0
    %v6030 = vsel %vm1147, %v5833, 0
    %v6033 = vsel %vm1147, %v5834, 0
    %v6036 = vsel %vm1147, %v5835, 0
    %v6039 = vsel %vm1147, %v5836, 0
    %v6042 = vsel %vm1147, %v5837, 0
    %v6045 = vsel %vm1147, %v5838, 0
    %v6048 = vsel %vm1147, %v5839, 0
    %v6051 = vsel %vm1147, %v5840, 0
    %v6054 = vsel %vm1147, %v5841, 0
    %v6057 = vsel %vm1147, %v5842, 0
    %v6060 = vsel %vm1147, %v5843, 0
    %v6063 = vsel %vm1147, %v5844, 0
    %v6066 = vsel %vm1147, %v5845, 0
    %v6069 = vsel %vm1147, %v5846, 0
    %v6072 = vsel %vm1147, %v5847, 0
    %v6075 = vsel %vm1147, %v5848, 0
    %6077 = vmatprep.subr.bf16.mxu0 %v5660
    %6078 = vmatpush1.bf16.msra.mxu0 %v5659
    %6079 = vmatprep.subr.bf16.mxu0 %v5679
    %6080 = vmatpush1.bf16.msra.mxu0 %v5678
    %6081 = vmatprep.subr.bf16.mxu0 %v5698
    %6082 = vmatpush1.bf16.msra.mxu0 %v5697
    %6083 = vmatprep.subr.bf16.mxu0 %v5717
    %6084 = vmatpush1.bf16.msra.mxu0 %v5716
    %6085 = vmatprep.subr.bf16.mxu0 %v5736
    %6086 = vmatpush1.bf16.msra.mxu0 %v5735
    %6087 = vmatprep.subr.bf16.mxu0 %v5755
    %6088 = vmatpush1.bf16.msra.mxu0 %v5754
    %6089 = vmatprep.subr.bf16.mxu0 %v5774
    %6090 = vmatpush1.bf16.msra.mxu0 %v5773
    %6091 = vmatprep.subr.bf16.mxu0 %v5793
    %6092 = vmatpush1.bf16.msra.mxu0 %v5792
    %6093 = vmatprep.subr.bf16.mxu0 %v5812
    %6094 = vmatpush1.bf16.msra.mxu0 %v5811
    %6095 = vmatprep.subr.bf16.mxu0 %v6024
    %6096 = vmatpush1.bf16.msra.mxu0 %v6021
    %6097 = vmatprep.subr.bf16.mxu0 0
    %6098 = vmatpush1.bf16.msra.mxu0 0
    %6099 = vmatprep.subr.bf16.mxu0 0
    %6100 = vmatpush1.bf16.msra.mxu0 0
    %6101 = vmatprep.subr.bf16.mxu0 0
    %6102 = vmatpush1.bf16.msra.mxu0 0
    %6103 = vmatprep.subr.bf16.mxu0 0
    %6104 = vmatpush1.bf16.msra.mxu0 0
    %6105 = vmatprep.subr.bf16.mxu0 0
    %6106 = vmatpush1.bf16.msra.mxu0 0
    %6107 = vmatprep.subr.bf16.mxu0 0
    %6108 = vmatpush1.bf16.msra.mxu0 0
    %6109 = vmatprep.mubr.bf16.mxu0 %v1145
    %6110 = vmatmul.mubr.bf16.gmra.mrb[0].mxu0 %v228
    %v6111 = vpop.f32.mrb[0].mxu0
    %v6112 = vadd.f32 0.0, %v6111
    %v6113 = vpop.f32.mrb[0].mxu0
    %v6114 = vadd.f32 0.0, %v6113
    %v6115 = vpop.f32.mrb[0].mxu0
    %v6116 = vpop.f32.mrb[0].mxu0
    %6117 = vdwg.mxu0
    %6118 = vmatprep.subr.bf16.mxu0 %v5662
    %6119 = vmatpush1.bf16.msra.mxu0 %v5661
    %6120 = vmatprep.subr.bf16.mxu0 %v5681
    %6121 = vmatpush1.bf16.msra.mxu0 %v5680
    %6122 = vmatprep.subr.bf16.mxu0 %v5700
    %6123 = vmatpush1.bf16.msra.mxu0 %v5699
    %6124 = vmatprep.subr.bf16.mxu0 %v5719
    %6125 = vmatpush1.bf16.msra.mxu0 %v5718
    %6126 = vmatprep.subr.bf16.mxu0 %v5738
    %6127 = vmatpush1.bf16.msra.mxu0 %v5737
    %6128 = vmatprep.subr.bf16.mxu0 %v5757
    %6129 = vmatpush1.bf16.msra.mxu0 %v5756
    %6130 = vmatprep.subr.bf16.mxu0 %v5776
    %6131 = vmatpush1.bf16.msra.mxu0 %v5775
    %6132 = vmatprep.subr.bf16.mxu0 %v5795
    %6133 = vmatpush1.bf16.msra.mxu0 %v5794
    %6134 = vmatprep.subr.bf16.mxu0 %v5814
    %6135 = vmatpush1.bf16.msra.mxu0 %v5813
    %6136 = vmatprep.subr.bf16.mxu0 %v6030
    %6137 = vmatpush1.bf16.msra.mxu0 %v6027
    %6138 = vmatprep.subr.bf16.mxu0 0
    %6139 = vmatpush1.bf16.msra.mxu0 0
    %6140 = vmatprep.subr.bf16.mxu0 0
    %6141 = vmatpush1.bf16.msra.mxu0 0
    %6142 = vmatprep.subr.bf16.mxu0 0
    %6143 = vmatpush1.bf16.msra.mxu0 0
    %6144 = vmatprep.subr.bf16.mxu0 0
    %6145 = vmatpush1.bf16.msra.mxu0 0
    %6146 = vmatprep.subr.bf16.mxu0 0
    %6147 = vmatpush1.bf16.msra.mxu0 0
    %6148 = vmatprep.subr.bf16.mxu0 0
    %6149 = vmatpush1.bf16.msra.mxu0 0
    %6150 = vmatprep.mubr.bf16.mxu0 %v1145
    %6151 = vmatmul.mubr.bf16.gmra.mrb[0].mxu0 %v228
    %v6152 = vpop.f32.mrb[0].mxu0
    %v6153 = vadd.f32 0.0, %v6152
    %v6154 = vpop.f32.mrb[0].mxu0
    %v6155 = vadd.f32 0.0, %v6154
    %v6156 = vpop.f32.mrb[0].mxu0
    %v6157 = vpop.f32.mrb[0].mxu0
    %6158 = vdwg.mxu0
    %6159 = vmatprep.subr.bf16.mxu0 %v5664
    %6160 = vmatpush1.bf16.msra.mxu0 %v5663
    %6161 = vmatprep.subr.bf16.mxu0 %v5683
    %6162 = vmatpush1.bf16.msra.mxu0 %v5682
    %6163 = vmatprep.subr.bf16.mxu0 %v5702
    %6164 = vmatpush1.bf16.msra.mxu0 %v5701
    %6165 = vmatprep.subr.bf16.mxu0 %v5721
    %6166 = vmatpush1.bf16.msra.mxu0 %v5720
    %6167 = vmatprep.subr.bf16.mxu0 %v5740
    %6168 = vmatpush1.bf16.msra.mxu0 %v5739
    %6169 = vmatprep.subr.bf16.mxu0 %v5759
    %6170 = vmatpush1.bf16.msra.mxu0 %v5758
    %6171 = vmatprep.subr.bf16.mxu0 %v5778
    %6172 = vmatpush1.bf16.msra.mxu0 %v5777
    %6173 = vmatprep.subr.bf16.mxu0 %v5797
    %6174 = vmatpush1.bf16.msra.mxu0 %v5796
    %6175 = vmatprep.subr.bf16.mxu0 %v5816
    %6176 = vmatpush1.bf16.msra.mxu0 %v5815
    %6177 = vmatprep.subr.bf16.mxu0 %v6036
    %6178 = vmatpush1.bf16.msra.mxu0 %v6033
    %6179 = vmatprep.subr.bf16.mxu0 0
    %6180 = vmatpush1.bf16.msra.mxu0 0
    %6181 = vmatprep.subr.bf16.mxu0 0
    %6182 = vmatpush1.bf16.msra.mxu0 0
    %6183 = vmatprep.subr.bf16.mxu0 0
    %6184 = vmatpush1.bf16.msra.mxu0 0
    %6185 = vmatprep.subr.bf16.mxu0 0
    %6186 = vmatpush1.bf16.msra.mxu0 0
    %6187 = vmatprep.subr.bf16.mxu0 0
    %6188 = vmatpush1.bf16.msra.mxu0 0
    %6189 = vmatprep.subr.bf16.mxu0 0
    %6190 = vmatpush1.bf16.msra.mxu0 0
    %6191 = vmatprep.mubr.bf16.mxu0 %v1145
    %6192 = vmatmul.mubr.bf16.gmra.mrb[0].mxu0 %v228
    %v6193 = vpop.f32.mrb[0].mxu0
    %v6194 = vadd.f32 0.0, %v6193
    %v6195 = vpop.f32.mrb[0].mxu0
    %v6196 = vadd.f32 0.0, %v6195
    %v6197 = vpop.f32.mrb[0].mxu0
    %v6198 = vpop.f32.mrb[0].mxu0
    %6199 = vdwg.mxu0
    %6200 = vmatprep.subr.bf16.mxu0 %v5666
    %6201 = vmatpush1.bf16.msra.mxu0 %v5665
    %6202 = vmatprep.subr.bf16.mxu0 %v5685
    %6203 = vmatpush1.bf16.msra.mxu0 %v5684
    %6204 = vmatprep.subr.bf16.mxu0 %v5704
    %6205 = vmatpush1.bf16.msra.mxu0 %v5703
    %6206 = vmatprep.subr.bf16.mxu0 %v5723
    %6207 = vmatpush1.bf16.msra.mxu0 %v5722
    %6208 = vmatprep.subr.bf16.mxu0 %v5742
    %6209 = vmatpush1.bf16.msra.mxu0 %v5741
    %6210 = vmatprep.subr.bf16.mxu0 %v5761
    %6211 = vmatpush1.bf16.msra.mxu0 %v5760
    %6212 = vmatprep.subr.bf16.mxu0 %v5780
    %6213 = vmatpush1.bf16.msra.mxu0 %v5779
    %6214 = vmatprep.subr.bf16.mxu0 %v5799
    %6215 = vmatpush1.bf16.msra.mxu0 %v5798
    %6216 = vmatprep.subr.bf16.mxu0 %v5818
    %6217 = vmatpush1.bf16.msra.mxu0 %v5817
    %6218 = vmatprep.subr.bf16.mxu0 %v6042
    %6219 = vmatpush1.bf16.msra.mxu0 %v6039
    %6220 = vmatprep.subr.bf16.mxu0 0
    %6221 = vmatpush1.bf16.msra.mxu0 0
    %6222 = vmatprep.subr.bf16.mxu0 0
    %6223 = vmatpush1.bf16.msra.mxu0 0
    %6224 = vmatprep.subr.bf16.mxu0 0
    %6225 = vmatpush1.bf16.msra.mxu0 0
    %6226 = vmatprep.subr.bf16.mxu0 0
    %6227 = vmatpush1.bf16.msra.mxu0 0
    %6228 = vmatprep.subr.bf16.mxu0 0
    %6229 = vmatpush1.bf16.msra.mxu0 0
    %6230 = vmatprep.subr.bf16.mxu0 0
    %6231 = vmatpush1.bf16.msra.mxu0 0
    %6232 = vmatprep.mubr.bf16.mxu0 %v1145
    %6233 = vmatmul.mubr.bf16.gmra.mrb[0].mxu0 %v228
    %v6234 = vpop.f32.mrb[0].mxu0
    %v6235 = vadd.f32 0.0, %v6234
    %v6236 = vpop.f32.mrb[0].mxu0
    %v6237 = vadd.f32 0.0, %v6236
    %v6238 = vpop.f32.mrb[0].mxu0
    %v6239 = vpop.f32.mrb[0].mxu0
    %6240 = vdwg.mxu0
    %6241 = vmatprep.subr.bf16.mxu0 %v5668
    %6242 = vmatpush1.bf16.msra.mxu0 %v5667
    %6243 = vmatprep.subr.bf16.mxu0 %v5687
    %6244 = vmatpush1.bf16.msra.mxu0 %v5686
    %6245 = vmatprep.subr.bf16.mxu0 %v5706
    %6246 = vmatpush1.bf16.msra.mxu0 %v5705
    %6247 = vmatprep.subr.bf16.mxu0 %v5725
    %6248 = vmatpush1.bf16.msra.mxu0 %v5724
    %6249 = vmatprep.subr.bf16.mxu0 %v5744
    %6250 = vmatpush1.bf16.msra.mxu0 %v5743
    %6251 = vmatprep.subr.bf16.mxu0 %v5763
    %6252 = vmatpush1.bf16.msra.mxu0 %v5762
    %6253 = vmatprep.subr.bf16.mxu0 %v5782
    %6254 = vmatpush1.bf16.msra.mxu0 %v5781
    %6255 = vmatprep.subr.bf16.mxu0 %v5801
    %6256 = vmatpush1.bf16.msra.mxu0 %v5800
    %6257 = vmatprep.subr.bf16.mxu0 %v5820
    %6258 = vmatpush1.bf16.msra.mxu0 %v5819
    %6259 = vmatprep.subr.bf16.mxu0 %v6048
    %6260 = vmatpush1.bf16.msra.mxu0 %v6045
    %6261 = vmatprep.subr.bf16.mxu0 0
    %6262 = vmatpush1.bf16.msra.mxu0 0
    %6263 = vmatprep.subr.bf16.mxu0 0
    %6264 = vmatpush1.bf16.msra.mxu0 0
    %6265 = vmatprep.subr.bf16.mxu0 0
    %6266 = vmatpush1.bf16.msra.mxu0 0
    %6267 = vmatprep.subr.bf16.mxu0 0
    %6268 = vmatpush1.bf16.msra.mxu0 0
    %6269 = vmatprep.subr.bf16.mxu0 0
    %6270 = vmatpush1.bf16.msra.mxu0 0
    %6271 = vmatprep.subr.bf16.mxu0 0
    %6272 = vmatpush1.bf16.msra.mxu0 0
    %6273 = vmatprep.mubr.bf16.mxu0 %v1145
    %6274 = vmatmul.mubr.bf16.gmra.mrb[0].mxu0 %v228
    %v6275 = vpop.f32.mrb[0].mxu0
    %v6276 = vadd.f32 0.0, %v6275
    %v6277 = vpop.f32.mrb[0].mxu0
    %v6278 = vadd.f32 0.0, %v6277
    %v6279 = vpop.f32.mrb[0].mxu0
    %v6280 = vpop.f32.mrb[0].mxu0
    %6281 = vdwg.mxu0
    %6282 = vmatprep.subr.bf16.mxu0 %v5670
    %6283 = vmatpush1.bf16.msra.mxu0 %v5669
    %6284 = vmatprep.subr.bf16.mxu0 %v5689
    %6285 = vmatpush1.bf16.msra.mxu0 %v5688
    %6286 = vmatprep.subr.bf16.mxu0 %v5708
    %6287 = vmatpush1.bf16.msra.mxu0 %v5707
    %6288 = vmatprep.subr.bf16.mxu0 %v5727
    %6289 = vmatpush1.bf16.msra.mxu0 %v5726
    %6290 = vmatprep.subr.bf16.mxu0 %v5746
    %6291 = vmatpush1.bf16.msra.mxu0 %v5745
    %6292 = vmatprep.subr.bf16.mxu0 %v5765
    %6293 = vmatpush1.bf16.msra.mxu0 %v5764
    %6294 = vmatprep.subr.bf16.mxu0 %v5784
    %6295 = vmatpush1.bf16.msra.mxu0 %v5783
    %6296 = vmatprep.subr.bf16.mxu0 %v5803
    %6297 = vmatpush1.bf16.msra.mxu0 %v5802
    %6298 = vmatprep.subr.bf16.mxu0 %v5822
    %6299 = vmatpush1.bf16.msra.mxu0 %v5821
    %6300 = vmatprep.subr.bf16.mxu0 %v6054
    %6301 = vmatpush1.bf16.msra.mxu0 %v6051
    %6302 = vmatprep.subr.bf16.mxu0 0
    %6303 = vmatpush1.bf16.msra.mxu0 0
    %6304 = vmatprep.subr.bf16.mxu0 0
    %6305 = vmatpush1.bf16.msra.mxu0 0
    %6306 = vmatprep.subr.bf16.mxu0 0
    %6307 = vmatpush1.bf16.msra.mxu0 0
    %6308 = vmatprep.subr.bf16.mxu0 0
    %6309 = vmatpush1.bf16.msra.mxu0 0
    %6310 = vmatprep.subr.bf16.mxu0 0
    %6311 = vmatpush1.bf16.msra.mxu0 0
    %6312 = vmatprep.subr.bf16.mxu0 0
    %6313 = vmatpush1.bf16.msra.mxu0 0
    %6314 = vmatprep.mubr.bf16.mxu0 %v1145
    %6315 = vmatmul.mubr.bf16.gmra.mrb[0].mxu0 %v228
    %v6316 = vpop.f32.mrb[0].mxu0
    %v6317 = vadd.f32 0.0, %v6316
    %v6318 = vpop.f32.mrb[0].mxu0
    %v6319 = vadd.f32 0.0, %v6318
    %v6320 = vpop.f32.mrb[0].mxu0
    %v6321 = vpop.f32.mrb[0].mxu0
    %6322 = vdwg.mxu0
    %6323 = vmatprep.subr.bf16.mxu0 %v5672
    %6324 = vmatpush1.bf16.msra.mxu0 %v5671
    %6325 = vmatprep.subr.bf16.mxu0 %v5691
    %6326 = vmatpush1.bf16.msra.mxu0 %v5690
    %6327 = vmatprep.subr.bf16.mxu0 %v5710
    %6328 = vmatpush1.bf16.msra.mxu0 %v5709
    %6329 = vmatprep.subr.bf16.mxu0 %v5729
    %6330 = vmatpush1.bf16.msra.mxu0 %v5728
    %6331 = vmatprep.subr.bf16.mxu0 %v5748
    %6332 = vmatpush1.bf16.msra.mxu0 %v5747
    %6333 = vmatprep.subr.bf16.mxu0 %v5767
    %6334 = vmatpush1.bf16.msra.mxu0 %v5766
    %6335 = vmatprep.subr.bf16.mxu0 %v5786
    %6336 = vmatpush1.bf16.msra.mxu0 %v5785
    %6337 = vmatprep.subr.bf16.mxu0 %v5805
    %6338 = vmatpush1.bf16.msra.mxu0 %v5804
    %6339 = vmatprep.subr.bf16.mxu0 %v5824
    %6340 = vmatpush1.bf16.msra.mxu0 %v5823
    %6341 = vmatprep.subr.bf16.mxu0 %v6060
    %6342 = vmatpush1.bf16.msra.mxu0 %v6057
    %6343 = vmatprep.subr.bf16.mxu0 0
    %6344 = vmatpush1.bf16.msra.mxu0 0
    %6345 = vmatprep.subr.bf16.mxu0 0
    %6346 = vmatpush1.bf16.msra.mxu0 0
    %6347 = vmatprep.subr.bf16.mxu0 0
    %6348 = vmatpush1.bf16.msra.mxu0 0
    %6349 = vmatprep.subr.bf16.mxu0 0
    %6350 = vmatpush1.bf16.msra.mxu0 0
    %6351 = vmatprep.subr.bf16.mxu0 0
    %6352 = vmatpush1.bf16.msra.mxu0 0
    %6353 = vmatprep.subr.bf16.mxu0 0
    %6354 = vmatpush1.bf16.msra.mxu0 0
    %6355 = vmatprep.mubr.bf16.mxu0 %v1145
    %6356 = vmatmul.mubr.bf16.gmra.mrb[0].mxu0 %v228
    %v6357 = vpop.f32.mrb[0].mxu0
    %v6358 = vadd.f32 0.0, %v6357
    %v6359 = vpop.f32.mrb[0].mxu0
    %v6360 = vadd.f32 0.0, %v6359
    %v6361 = vpop.f32.mrb[0].mxu0
    %v6362 = vpop.f32.mrb[0].mxu0
    %6363 = vdwg.mxu0
    %6364 = vmatprep.subr.bf16.mxu0 %v5674
    %6365 = vmatpush1.bf16.msra.mxu0 %v5673
    %6366 = vmatprep.subr.bf16.mxu0 %v5693
    %6367 = vmatpush1.bf16.msra.mxu0 %v5692
    %6368 = vmatprep.subr.bf16.mxu0 %v5712
    %6369 = vmatpush1.bf16.msra.mxu0 %v5711
    %6370 = vmatprep.subr.bf16.mxu0 %v5731
    %6371 = vmatpush1.bf16.msra.mxu0 %v5730
    %6372 = vmatprep.subr.bf16.mxu0 %v5750
    %6373 = vmatpush1.bf16.msra.mxu0 %v5749
    %6374 = vmatprep.subr.bf16.mxu0 %v5769
    %6375 = vmatpush1.bf16.msra.mxu0 %v5768
    %6376 = vmatprep.subr.bf16.mxu0 %v5788
    %6377 = vmatpush1.bf16.msra.mxu0 %v5787
    %6378 = vmatprep.subr.bf16.mxu0 %v5807
    %6379 = vmatpush1.bf16.msra.mxu0 %v5806
    %6380 = vmatprep.subr.bf16.mxu0 %v5826
    %6381 = vmatpush1.bf16.msra.mxu0 %v5825
    %6382 = vmatprep.subr.bf16.mxu0 %v6066
    %6383 = vmatpush1.bf16.msra.mxu0 %v6063
    %6384 = vmatprep.subr.bf16.mxu0 0
    %6385 = vmatpush1.bf16.msra.mxu0 0
    %6386 = vmatprep.subr.bf16.mxu0 0
    %6387 = vmatpush1.bf16.msra.mxu0 0
    %6388 = vmatprep.subr.bf16.mxu0 0
    %6389 = vmatpush1.bf16.msra.mxu0 0
    %6390 = vmatprep.subr.bf16.mxu0 0
    %6391 = vmatpush1.bf16.msra.mxu0 0
    %6392 = vmatprep.subr.bf16.mxu0 0
    %6393 = vmatpush1.bf16.msra.mxu0 0
    %6394 = vmatprep.subr.bf16.mxu0 0
    %6395 = vmatpush1.bf16.msra.mxu0 0
    %6396 = vmatprep.mubr.bf16.mxu0 %v1145
    %6397 = vmatmul.mubr.bf16.gmra.mrb[0].mxu0 %v228
    %v6398 = vpop.f32.mrb[0].mxu0
    %v6399 = vadd.f32 0.0, %v6398
    %v6400 = vpop.f32.mrb[0].mxu0
    %v6401 = vadd.f32 0.0, %v6400
    %v6402 = vpop.f32.mrb[0].mxu0
    %v6403 = vpop.f32.mrb[0].mxu0
    %6404 = vdwg.mxu0
    %6405 = vmatprep.subr.bf16.mxu0 %v5676
    %6406 = vmatpush1.bf16.msra.mxu0 %v5675
    %6407 = vmatprep.subr.bf16.mxu0 %v5695
    %6408 = vmatpush1.bf16.msra.mxu0 %v5694
    %6409 = vmatprep.subr.bf16.mxu0 %v5714
    %6410 = vmatpush1.bf16.msra.mxu0 %v5713
    %6411 = vmatprep.subr.bf16.mxu0 %v5733
    %6412 = vmatpush1.bf16.msra.mxu0 %v5732
    %6413 = vmatprep.subr.bf16.mxu0 %v5752
    %6414 = vmatpush1.bf16.msra.mxu0 %v5751
    %6415 = vmatprep.subr.bf16.mxu0 %v5771
    %6416 = vmatpush1.bf16.msra.mxu0 %v5770
    %6417 = vmatprep.subr.bf16.mxu0 %v5790
    %6418 = vmatpush1.bf16.msra.mxu0 %v5789
    %6419 = vmatprep.subr.bf16.mxu0 %v5809
    %6420 = vmatpush1.bf16.msra.mxu0 %v5808
    %6421 = vmatprep.subr.bf16.mxu0 %v5828
    %6422 = vmatpush1.bf16.msra.mxu0 %v5827
    %6423 = vmatprep.subr.bf16.mxu0 %v6072
    %6424 = vmatpush1.bf16.msra.mxu0 %v6069
    %6425 = vmatprep.subr.bf16.mxu0 0
    %6426 = vmatpush1.bf16.msra.mxu0 0
    %6427 = vmatprep.subr.bf16.mxu0 0
    %6428 = vmatpush1.bf16.msra.mxu0 0
    %6429 = vmatprep.subr.bf16.mxu0 0
    %6430 = vmatpush1.bf16.msra.mxu0 0
    %6431 = vmatprep.subr.bf16.mxu0 0
    %6432 = vmatpush1.bf16.msra.mxu0 0
    %6433 = vmatprep.subr.bf16.mxu0 0
    %6434 = vmatpush1.bf16.msra.mxu0 0
    %6435 = vmatprep.subr.bf16.mxu0 0
    %6436 = vmatpush1.bf16.msra.mxu0 0
    %6437 = vmatprep.mubr.bf16.mxu0 %v1145
    %6438 = vmatmul.mubr.bf16.gmra.mrb[0].mxu0 %v228
    %v6439 = vpop.f32.mrb[0].mxu0
    %v6440 = vadd.f32 0.0, %v6439
    %v6441 = vpop.f32.mrb[0].mxu0
    %v6442 = vadd.f32 0.0, %v6441
    %v6443 = vpop.f32.mrb[0].mxu0
    %v6444 = vpop.f32.mrb[0].mxu0
    %6445 = vdwg.mxu0
    %6446 = vmatprep.subr.bf16.mxu0 0
    %6447 = vmatpush1.bf16.msra.mxu0 %v5677
    %6448 = vmatprep.subr.bf16.mxu0 0
    %6449 = vmatpush1.bf16.msra.mxu0 %v5696
    %6450 = vmatprep.subr.bf16.mxu0 0
    %6451 = vmatpush1.bf16.msra.mxu0 %v5715
    %6452 = vmatprep.subr.bf16.mxu0 0
    %6453 = vmatpush1.bf16.msra.mxu0 %v5734
    %6454 = vmatprep.subr.bf16.mxu0 0
    %6455 = vmatpush1.bf16.msra.mxu0 %v5753
    %6456 = vmatprep.subr.bf16.mxu0 0
    %6457 = vmatpush1.bf16.msra.mxu0 %v5772
    %6458 = vmatprep.subr.bf16.mxu0 0
    %6459 = vmatpush1.bf16.msra.mxu0 %v5791
    %6460 = vmatprep.subr.bf16.mxu0 0
    %6461 = vmatpush1.bf16.msra.mxu0 %v5810
    %6462 = vmatprep.subr.bf16.mxu0 0
    %6463 = vmatpush1.bf16.msra.mxu0 %v5829
    %6464 = vmatprep.subr.bf16.mxu0 0
    %6465 = vmatpush1.bf16.msra.mxu0 %v6075
    %6466 = vmatprep.subr.bf16.mxu0 0
    %6467 = vmatpush1.bf16.msra.mxu0 0
    %6468 = vmatprep.subr.bf16.mxu0 0
    %6469 = vmatpush1.bf16.msra.mxu0 0
    %6470 = vmatprep.subr.bf16.mxu0 0
    %6471 = vmatpush1.bf16.msra.mxu0 0
    %6472 = vmatprep.subr.bf16.mxu0 0
    %6473 = vmatpush1.bf16.msra.mxu0 0
    %6474 = vmatprep.subr.bf16.mxu0 0
    %6475 = vmatpush1.bf16.msra.mxu0 0
    %6476 = vmatprep.subr.bf16.mxu0 0
    %6477 = vmatpush1.bf16.msra.mxu0 0
    %6478 = vmatprep.mubr.bf16.mxu0 %v1145
    %6479 = vmatmul.mubr.bf16.gmra.mrb[0].mxu0 %v228
    %v6480 = vpop.f32.mrb[0].mxu0
    %v6481 = vadd.f32 0.0, %v6480
    %v6482 = vpop.f32.mrb[0].mxu0
    %v6483 = vpop.f32.mrb[0].mxu0
    %v6484 = vpop.f32.mrb[0].mxu0
    %6485 = vdwg.mxu0
    %v6486 = vld [vmem:[%s2 + $0xe4] sm:$0xf]
    %v6487 = vmul.f32 %v6112, %v6486
    %v6488 = vld [vmem:[%s2 + $0xe8] sm:$0xf]
    %v6489 = vmul.f32 %v6114, %v6488
    %v6490 = vadd.f32 %v6487, %v6489
    %v6491 = vld [vmem:[%s2 + $0xec] sm:$0xf]
    %v6492 = vmul.f32 %v6153, %v6491
    %v6493 = vadd.f32 %v6490, %v6492
    %v6494 = vld [vmem:[%s2 + $0xf0] sm:$0xf]
    %v6495 = vmul.f32 %v6155, %v6494
    %v6496 = vadd.f32 %v6493, %v6495
    %v6497 = vld [vmem:[%s2 + $0xf4] sm:$0xf]
    %v6498 = vmul.f32 %v6194, %v6497
    %v6499 = vadd.f32 %v6496, %v6498
    %v6500 = vld [vmem:[%s2 + $0xf8] sm:$0xf]
    %v6501 = vmul.f32 %v6196, %v6500
    %v6502 = vadd.f32 %v6499, %v6501
    %v6503 = vld [vmem:[%s2 + $0xfc] sm:$0xf]
    %v6504 = vmul.f32 %v6235, %v6503
    %v6505 = vadd.f32 %v6502, %v6504
    %v6506 = vld [vmem:[%s2 + $0x100] sm:$0xf]
    %v6507 = vmul.f32 %v6237, %v6506
    %v6508 = vadd.f32 %v6505, %v6507
    %v6509 = vld [vmem:[%s2 + $0x104] sm:$0xf]
    %v6510 = vmul.f32 %v6276, %v6509
    %v6511 = vadd.f32 %v6508, %v6510
    %v6512 = vld [vmem:[%s2 + $0x108] sm:$0xf]
    %v6513 = vmul.f32 %v6278, %v6512
    %v6514 = vadd.f32 %v6511, %v6513
    %v6515 = vld [vmem:[%s2 + $0x10c] sm:$0xf]
    %v6516 = vmul.f32 %v6317, %v6515
    %v6517 = vadd.f32 %v6514, %v6516
    %v6518 = vld [vmem:[%s2 + $0x110] sm:$0xf]
    %v6519 = vmul.f32 %v6319, %v6518
    %v6520 = vadd.f32 %v6517, %v6519
    %v6521 = vld [vmem:[%s2 + $0x114] sm:$0xf]
    %v6522 = vmul.f32 %v6358, %v6521
    %v6523 = vadd.f32 %v6520, %v6522
    %v6524 = vld [vmem:[%s2 + $0x118] sm:$0xf]
    %v6525 = vmul.f32 %v6360, %v6524
    %v6526 = vadd.f32 %v6523, %v6525
    %v6527 = vld [vmem:[%s2 + $0x11c] sm:$0xf]
    %v6528 = vmul.f32 %v6399, %v6527
    %v6529 = vadd.f32 %v6526, %v6528
    %v6530 = vld [vmem:[%s2 + $0x120] sm:$0xf]
    %v6531 = vmul.f32 %v6401, %v6530
    %v6532 = vadd.f32 %v6529, %v6531
    %v6533 = vld [vmem:[%s2 + $0x124] sm:$0xf]
    %v6534 = vmul.f32 %v6440, %v6533
    %v6535 = vadd.f32 %v6532, %v6534
    %v6536 = vld [vmem:[%s2 + $0x128] sm:$0xf]
    %v6537 = vmul.f32 %v6442, %v6536
    %v6538 = vadd.f32 %v6535, %v6537
    %v6539 = vld [vmem:[%s2 + $0x12c] sm:$0xf]
    %v6540 = vmul.f32 %v6481, %v6539
    %v6541 = vadd.f32 %v6538, %v6540
    %v6542 = vadd.f32 %v1669, %v3293
    %v6543 = vadd.f32 %v6542, %v4917
    %v6544 = vadd.f32 %v6543, %v6541
    %6546 = vrot.lane.b32.xlu0 %v6544, 64
    %v6547 = vpop.permute.xlu0 %6546
    %v6549 = vadd.f32 %v6544, %v6547
    %vm6550 = vcmask 412672
    %6551 = vst.msk [vmem:[#allocation5] sm:$0xf] %vm6550, %v6549
    // Predicated region
    $region18: #{frequency_bias_forward.1} parent=1 // pred_check
      _
    $region19: #{frequency_bias_forward.1} parent=1 // pred_check_branch
      %6553 = sbr.rel (0) target = $region21
    $region20: #{frequency_bias_forward.1} parent=1 // pred_region
      %s6555 = ssub.s32 64, 64
      %6556 = vsyncadd [#allocation4], %s6555
      %s6558 = sshll.u32 [#allocation5], 4
      %s6559 = int_to_ptr.vmem [resolvable:$true] %s6558
      %6561 = dma.vmem_to_hbm [thread:$0]  %s6559, 64, %s3, [#allocation4]
    $region21: #{frequency_bias_forward.1} parent=1 // pred_fallthru
      _
    // Predicated region
    $region22: #{frequency_bias_forward.1} parent=1 // pred_check
      _
    $region23: #{frequency_bias_forward.1} parent=1 // pred_check_branch
      %6563 = sbr.rel (0) target = $region25
    $region24: #{frequency_bias_forward.1} parent=1 // pred_region
      %6564 = dma.done [#allocation4], 64
    $region25: #{frequency_bias_forward.1} parent=1 // pred_fallthru
      _
    %6565 = vsyncpa [#allocation3], 1
    %6566 = vsyncpa [#allocation4], 1

</llo_original>
